<compile_context>
chip_gen: v6e
topology: v6e:2x2x1
jax: 0.10.0
libtpu: 0.0.40
codegen_flags: <defaults>
</compile_context>

<pallas_src>
import jax
import jax.numpy as jnp
import numpy as np
from jax import lax
from jax.experimental import pallas as pl
from jax.experimental.pallas import tpu as pltpu

# Model constants: Conv2d(3, 6, 7) on 28x28, MaxPool2d(3), Linear(294, 512), Linear(512, 10)
C_IN, C_OUT, KH, KW = 3, 6, 7, 7
H_IN = W_IN = 28
POOL = 3
P_SP = 7                        # pooled spatial extent (7x7)
CONV_ROWS = POOL * P_SP         # 21 conv rows/cols actually consumed by the pool
KROW = C_IN * W_IN              # 84  = one full input row (all channels) = per-kh matmul K
NCOL = CONV_ROWS * C_OUT        # 126 = conv output columns per row, order (wj, pw, oc)
NPOOL = P_SP * C_OUT            # 42  = pooled columns per pooled row, order (pw, oc)
HID = 512
NCLS = 10
NFLAT = C_OUT * P_SP * P_SP     # 294

_BATCH_TILE = 64                # max images per grid step (multiple of 16)


# ---------------------------------------------------------------------------
# Fused kernel: conv (7 shift-matmuls) + 3x3/3 max-pool + bias + ReLU + composed linear+fc
# ---------------------------------------------------------------------------
def fused_mnist_kernel(x_ref, wd_ref, bc_ref, wc_ref, b2_ref, out_ref):
    # x_ref  : (1, 28*bt, 84) bf16  rows (h, image-in-tile), cols (c, w)
    # wd_ref : (7, 84, 126)   bf16  per-kh banded conv weight, cols (wj, pw, oc)
    # bc_ref : (1, 42)        f32   conv bias tiled over pw, order (pw, oc)
    # wc_ref : (7, 42, 10)    bf16  composed (fc @ linear) weight, split per pooled row ph
    # b2_ref : (1, 10)        f32   composed bias (fc_w @ lin_b + fc_b)
    # out_ref: (bt, 10)       f32
    bt = out_ref.shape[0]
    m = CONV_ROWS * bt

    # Conv as 7 shift-and-matmul terms.  The LHS of term kh is a sublane-aligned window
    # of the (h, b)-major input slab -> no im2col materialization at all.
    conv = jnp.dot(x_ref[0, 0:m, :], wd_ref[0], preferred_element_type=jnp.float32)
    for kh in range(1, KH):
        conv += jnp.dot(x_ref[0, kh * bt:kh * bt + m, :], wd_ref[kh],
                        preferred_element_type=jnp.float32)
    # conv: (21*bt, 126) f32, row = oh*bt + b_local, col = wj*42 + pw*6 + oc

    # Max-pool over the 3 in-window columns wj (three 42-lane groups).
    cmax = jnp.maximum(jnp.maximum(conv[:, 0:NPOOL], conv[:, NPOOL:2 * NPOOL]),
                       conv[:, 2 * NPOOL:3 * NPOOL])            # (21*bt, 42)

    # Max-pool over the 3 in-window rows wi (three bt-row blocks per pooled row),
    # then bias + ReLU (pool-first is exact: bias constant per window, ReLU monotone),
    # then accumulate the composed linear+fc contribution of that pooled row.  Keeping
    # the (ph, b) row blocks separate avoids any (bt, 294) re-fold in the kernel.
    acc = jnp.zeros((bt, NCLS), jnp.float32)
    for ph in range(P_SP):
        r0 = 3 * ph * bt
        blk = jnp.maximum(jnp.maximum(cmax[r0:r0 + bt], cmax[r0 + bt:r0 + 2 * bt]),
                          cmax[r0 + 2 * bt:r0 + 3 * bt])        # (bt, 42)
        act = jnp.maximum(blk + bc_ref[...], 0.0).astype(jnp.bfloat16)
        acc += jnp.dot(act, wc_ref[ph], preferred_element_type=jnp.float32)
    out_ref[...] = acc + b2_ref[...]


# ---------------------------------------------------------------------------
# One-time weight preparation (host side, hoisted out of the per-step forward)
# ---------------------------------------------------------------------------
def prepare_params(conv_w, conv_b, lin_w, lin_b, fc_w, fc_b):
    conv_w = np.asarray(conv_w, np.float32)
    conv_b = np.asarray(conv_b, np.float32)
    lin_w = np.asarray(lin_w, np.float32)
    lin_b = np.asarray(lin_b, np.float32)
    fc_w = np.asarray(fc_w, np.float32)
    fc_b = np.asarray(fc_b, np.float32)

    # Banded per-kh conv matrix:
    #   wd[kh, c*28 + w_in, wj*42 + pw*6 + oc] = conv_w[oc, c, kh, w_in - (3*pw + wj)]
    wd = np.zeros((KH, KROW, NCOL), np.float32)
    for kh in range(KH):
        for pw in range(P_SP):
            for wj in range(POOL):
                ow = POOL * pw + wj
                col = wj * NPOOL + pw * C_OUT
                for kw in range(KW):
                    for c in range(C_IN):
                        wd[kh, c * W_IN + ow + kw, col:col + C_OUT] = conv_w[:, c, kh, kw]

    bias_pool = np.tile(conv_b, P_SP).reshape(1, NPOOL)          # (1, 42), order (pw, oc)

    # Compose linear(294->512) and fc(512->10) -- the model has NO activation between them.
    w_comp = fc_w @ lin_w                                        # (10, 294), torch order (oc, ph, pw)
    b_comp = fc_w @ lin_b + fc_b                                 # (10,)
    wc = w_comp.reshape(NCLS, C_OUT, P_SP, P_SP).transpose(2, 3, 1, 0)  # (ph, pw, oc, cls)
    wc = np.ascontiguousarray(wc).reshape(P_SP, NPOOL, NCLS)            # (7, 42, 10)

    return (jnp.asarray(wd, dtype=jnp.bfloat16),
            jnp.asarray(bias_pool, dtype=jnp.float32),
            jnp.asarray(wc, dtype=jnp.bfloat16),
            jnp.asarray(b_comp.reshape(1, NCLS), dtype=jnp.float32))


# ---------------------------------------------------------------------------
# Glue: tiny (h, image)-major transpose of the raw images, grouped by batch tile
# ---------------------------------------------------------------------------
def _round_up(n, m):
    return (n + m - 1) // m * m


def _prep_input(x, bt, ntiles):
    # (B, 3, 28, 28) f32 -> (ntiles, 28*bt, 84) bf16, rows (h, image-in-tile), cols (c, w).
    # ~0.3 MB/tile written by XLA vs the old 8.4 MB im2col gather.
    B = x.shape[0]
    bpad = ntiles * bt
    x = x.astype(jnp.bfloat16)
    if bpad != B:
        x = jnp.pad(x, ((0, bpad - B), (0, 0), (0, 0), (0, 0)))
    xt = jnp.transpose(x, (2, 0, 1, 3))                 # (28, Bpad, 3, 28)
    xt = xt.reshape(H_IN, ntiles, bt, KROW)             # (28, nt, bt, 84)
    xt = jnp.transpose(xt, (1, 0, 2, 3))                # (nt, 28, bt, 84)
    return xt.reshape(ntiles, H_IN * bt, KROW)


@jax.jit
def mnist_forward(x, prepared):
    wd, bias_pool, wc, b_comp = prepared
    B = x.shape[0]
    assert x.shape[1:] == (C_IN, H_IN, W_IN), x.shape
    # Batch tile: multiple of 16 (bf16 sublane packing); for batches >= ~32 this yields
    # >= 2 grid steps so the "parallel" axis feeds both v7x TensorCores.
    bt = min(_BATCH_TILE, _round_up(pl.cdiv(B, 2), 16))
    ntiles = pl.cdiv(B, bt)
    xt = _prep_input(x, bt, ntiles)                     # (ntiles, 28*bt, 84) bf16

    out_pad = pl.pallas_call(
        fused_mnist_kernel,
        out_shape=jax.ShapeDtypeStruct((ntiles * bt, NCLS), jnp.float32),
        grid=(ntiles,),
        in_specs=[
            pl.BlockSpec((1, H_IN * bt, KROW), lambda i: (i, 0, 0)),   # image slab: batch-tiled
            pl.BlockSpec((KH, KROW, NCOL), lambda i: (0, 0, 0)),       # weights: constant index
            pl.BlockSpec((1, NPOOL), lambda i: (0, 0)),                # maps -> VMEM-resident
            pl.BlockSpec((P_SP, NPOOL, NCLS), lambda i: (0, 0, 0)),    # across grid steps
            pl.BlockSpec((1, NCLS), lambda i: (0, 0)),
        ],
        out_specs=pl.BlockSpec((bt, NCLS), lambda i: (i, 0)),
        compiler_params=pltpu.CompilerParams(
            dimension_semantics=("parallel",),          # shard batch tiles over TCs (v7x)
            vmem_limit_bytes=32 * 1024 * 1024,          # working set is only a few MiB
        ),
    )(xt, wd, bias_pool, wc, b_comp)
    return out_pad[:B]


# ---------------------------------------------------------------------------
# Pure-JAX reference (mirrors the PyTorch forward exactly, f32)
# ---------------------------------------------------------------------------
def reference_forward(x, params):
    conv_w, conv_b, lin_w, lin_b, fc_w, fc_b = params
    y = lax.conv_general_dilated(x, conv_w, (1, 1), "VALID",
                                 dimension_numbers=("NCHW", "OIHW", "NCHW"))
    y = jnp.maximum(y + conv_b.reshape(1, C_OUT, 1, 1), 0.0)
    y = lax.reduce_window(y, -jnp.inf, lax.max, (1, 1, POOL, POOL), (1, 1, POOL, POOL), "VALID")
    y = y.reshape(x.shape[0], -1)                       # (B, 294) channel-major flatten
    y = y @ lin_w.T + lin_b
    y = y @ fc_w.T + fc_b
    return y


if __name__ == "__main__":
    key = jax.random.PRNGKey(0)
    ks = jax.random.split(key, 7)

    def uinit(k, shape, fan_in):
        b = 1.0 / jnp.sqrt(jnp.float32(fan_in))
        return jax.random.uniform(k, shape, jnp.float32, -b, b)

    # Shapes match nn.Conv2d(3, 6, 7), nn.Linear(294, 512), nn.Linear(512, 10)
    conv_w = uinit(ks[0], (C_OUT, C_IN, KH, KW), C_IN * KH * KW)
    conv_b = uinit(ks[1], (C_OUT,), C_IN * KH * KW)
    lin_w = uinit(ks[2], (HID, NFLAT), NFLAT)
    lin_b = uinit(ks[3], (HID,), NFLAT)
    fc_w = uinit(ks[4], (NCLS, HID), HID)
    fc_b = uinit(ks[5], (NCLS,), HID)
    params = (conv_w, conv_b, lin_w, lin_b, fc_w, fc_b)

    prepared = prepare_params(*params)                  # one-time weight prep (host side)

    # Input must be 28x28 so that 6 * ((28-7+1)//3)^2 = 294 matches Linear(294, 512).
    x = jax.random.normal(ks[6], (2, C_IN, H_IN, W_IN), jnp.float32)

    out = jax.block_until_ready(mnist_forward(x, prepared))
    ref = reference_forward(x, params)

    assert out.shape == (2, NCLS), out.shape
    assert jnp.allclose(out, ref, atol=2e-2, rtol=2e-2), (out, ref)
    print("KERNEL_OK")
</pallas_src>

<mosaic_0001>
module attributes {stable_mosaic.version = 11 : i64} {
  func.func @fused_mnist_kernel(%arg0: i32, %arg1: memref<1x448x84xbf16, #tpu.memory_space<vmem>>, %arg2: memref<7x84x126xbf16, #tpu.memory_space<vmem>>, %arg3: memref<1x42xf32, #tpu.memory_space<vmem>>, %arg4: memref<7x42x10xbf16, #tpu.memory_space<vmem>>, %arg5: memref<1x10xf32, #tpu.memory_space<vmem>>, %arg6: memref<16x10xf32, #tpu.memory_space<vmem>>) attributes {dimension_semantics = [#tpu.dimension_semantics<parallel>], iteration_bounds = array<i64: 1>, scalar_prefetch = 0 : i64, scratch_operands = 0 : i64, tpu.core_type = #tpu.core_type<tc>, window_params = [{transform_indices = @transform_0, window_bounds = array<i64: 1, 448, 84>}, {pipeline_mode = #tpu.pipeline_mode<synchronous>, transform_indices = @transform_1, window_bounds = array<i64: 7, 84, 126>}, {pipeline_mode = #tpu.pipeline_mode<synchronous>, transform_indices = @transform_2, window_bounds = array<i64: 1, 42>}, {pipeline_mode = #tpu.pipeline_mode<synchronous>, transform_indices = @transform_3, window_bounds = array<i64: 7, 42, 10>}, {pipeline_mode = #tpu.pipeline_mode<synchronous>, transform_indices = @transform_4, window_bounds = array<i64: 1, 10>}, {transform_indices = @transform_5, window_bounds = array<i64: 16, 10>}]} {
    %c0 = arith.constant 0 : index
    %c0_0 = arith.constant 0 : index
    %c0_1 = arith.constant 0 : index
    %0 = vector.load %arg1[%c0, %c0_0, %c0_1] : memref<1x448x84xbf16, #tpu.memory_space<vmem>>, vector<1x336x84xbf16>
    %1 = vector.shape_cast %0 : vector<1x336x84xbf16> to vector<336x84xbf16>
    %c0_2 = arith.constant 0 : index
    %c0_3 = arith.constant 0 : index
    %c0_4 = arith.constant 0 : index
    %2 = vector.load %arg2[%c0_2, %c0_3, %c0_4] : memref<7x84x126xbf16, #tpu.memory_space<vmem>>, vector<1x84x126xbf16>
    %3 = vector.shape_cast %2 : vector<1x84x126xbf16> to vector<84x126xbf16>
    %cst = arith.constant dense<0.000000e+00> : vector<336x126xf32>
    %4 = tpu.matmul %1, %3, %cst {dimension_numbers = #tpu.dot_dimension_numbers<[1], [0], [0], [1], [0, 0, 1, 1], [], []>} : vector<336x84xbf16>, vector<84x126xbf16>, vector<336x126xf32> -> vector<336x126xf32>
    %c0_5 = arith.constant 0 : index
    %c16 = arith.constant 16 : index
    %c0_6 = arith.constant 0 : index
    %5 = vector.load %arg1[%c0_5, %c16, %c0_6] : memref<1x448x84xbf16, #tpu.memory_space<vmem>>, vector<1x336x84xbf16>
    %6 = vector.shape_cast %5 : vector<1x336x84xbf16> to vector<336x84xbf16>
    %c1 = arith.constant 1 : index
    %c0_7 = arith.constant 0 : index
    %c0_8 = arith.constant 0 : index
    %7 = vector.load %arg2[%c1, %c0_7, %c0_8] : memref<7x84x126xbf16, #tpu.memory_space<vmem>>, vector<1x84x126xbf16>
    %8 = vector.shape_cast %7 : vector<1x84x126xbf16> to vector<84x126xbf16>
    %cst_9 = arith.constant dense<0.000000e+00> : vector<336x126xf32>
    %9 = tpu.matmul %6, %8, %cst_9 {dimension_numbers = #tpu.dot_dimension_numbers<[1], [0], [0], [1], [0, 0, 1, 1], [], []>} : vector<336x84xbf16>, vector<84x126xbf16>, vector<336x126xf32> -> vector<336x126xf32>
    %10 = arith.addf %4, %9 : vector<336x126xf32>
    %c0_10 = arith.constant 0 : index
    %c32 = arith.constant 32 : index
    %c0_11 = arith.constant 0 : index
    %11 = vector.load %arg1[%c0_10, %c32, %c0_11] : memref<1x448x84xbf16, #tpu.memory_space<vmem>>, vector<1x336x84xbf16>
    %12 = vector.shape_cast %11 : vector<1x336x84xbf16> to vector<336x84xbf16>
    %c2 = arith.constant 2 : index
    %c0_12 = arith.constant 0 : index
    %c0_13 = arith.constant 0 : index
    %13 = vector.load %arg2[%c2, %c0_12, %c0_13] : memref<7x84x126xbf16, #tpu.memory_space<vmem>>, vector<1x84x126xbf16>
    %14 = vector.shape_cast %13 : vector<1x84x126xbf16> to vector<84x126xbf16>
    %cst_14 = arith.constant dense<0.000000e+00> : vector<336x126xf32>
    %15 = tpu.matmul %12, %14, %cst_14 {dimension_numbers = #tpu.dot_dimension_numbers<[1], [0], [0], [1], [0, 0, 1, 1], [], []>} : vector<336x84xbf16>, vector<84x126xbf16>, vector<336x126xf32> -> vector<336x126xf32>
    %16 = arith.addf %10, %15 : vector<336x126xf32>
    %c0_15 = arith.constant 0 : index
    %c48 = arith.constant 48 : index
    %c0_16 = arith.constant 0 : index
    %17 = vector.load %arg1[%c0_15, %c48, %c0_16] : memref<1x448x84xbf16, #tpu.memory_space<vmem>>, vector<1x336x84xbf16>
    %18 = vector.shape_cast %17 : vector<1x336x84xbf16> to vector<336x84xbf16>
    %c3 = arith.constant 3 : index
    %c0_17 = arith.constant 0 : index
    %c0_18 = arith.constant 0 : index
    %19 = vector.load %arg2[%c3, %c0_17, %c0_18] : memref<7x84x126xbf16, #tpu.memory_space<vmem>>, vector<1x84x126xbf16>
    %20 = vector.shape_cast %19 : vector<1x84x126xbf16> to vector<84x126xbf16>
    %cst_19 = arith.constant dense<0.000000e+00> : vector<336x126xf32>
    %21 = tpu.matmul %18, %20, %cst_19 {dimension_numbers = #tpu.dot_dimension_numbers<[1], [0], [0], [1], [0, 0, 1, 1], [], []>} : vector<336x84xbf16>, vector<84x126xbf16>, vector<336x126xf32> -> vector<336x126xf32>
    %22 = arith.addf %16, %21 : vector<336x126xf32>
    %c0_20 = arith.constant 0 : index
    %c64 = arith.constant 64 : index
    %c0_21 = arith.constant 0 : index
    %23 = vector.load %arg1[%c0_20, %c64, %c0_21] : memref<1x448x84xbf16, #tpu.memory_space<vmem>>, vector<1x336x84xbf16>
    %24 = vector.shape_cast %23 : vector<1x336x84xbf16> to vector<336x84xbf16>
    %c4 = arith.constant 4 : index
    %c0_22 = arith.constant 0 : index
    %c0_23 = arith.constant 0 : index
    %25 = vector.load %arg2[%c4, %c0_22, %c0_23] : memref<7x84x126xbf16, #tpu.memory_space<vmem>>, vector<1x84x126xbf16>
    %26 = vector.shape_cast %25 : vector<1x84x126xbf16> to vector<84x126xbf16>
    %cst_24 = arith.constant dense<0.000000e+00> : vector<336x126xf32>
    %27 = tpu.matmul %24, %26, %cst_24 {dimension_numbers = #tpu.dot_dimension_numbers<[1], [0], [0], [1], [0, 0, 1, 1], [], []>} : vector<336x84xbf16>, vector<84x126xbf16>, vector<336x126xf32> -> vector<336x126xf32>
    %28 = arith.addf %22, %27 : vector<336x126xf32>
    %c0_25 = arith.constant 0 : index
    %c80 = arith.constant 80 : index
    %c0_26 = arith.constant 0 : index
    %29 = vector.load %arg1[%c0_25, %c80, %c0_26] : memref<1x448x84xbf16, #tpu.memory_space<vmem>>, vector<1x336x84xbf16>
    %30 = vector.shape_cast %29 : vector<1x336x84xbf16> to vector<336x84xbf16>
    %c5 = arith.constant 5 : index
    %c0_27 = arith.constant 0 : index
    %c0_28 = arith.constant 0 : index
    %31 = vector.load %arg2[%c5, %c0_27, %c0_28] : memref<7x84x126xbf16, #tpu.memory_space<vmem>>, vector<1x84x126xbf16>
    %32 = vector.shape_cast %31 : vector<1x84x126xbf16> to vector<84x126xbf16>
    %cst_29 = arith.constant dense<0.000000e+00> : vector<336x126xf32>
    %33 = tpu.matmul %30, %32, %cst_29 {dimension_numbers = #tpu.dot_dimension_numbers<[1], [0], [0], [1], [0, 0, 1, 1], [], []>} : vector<336x84xbf16>, vector<84x126xbf16>, vector<336x126xf32> -> vector<336x126xf32>
    %34 = arith.addf %28, %33 : vector<336x126xf32>
    %c0_30 = arith.constant 0 : index
    %c96 = arith.constant 96 : index
    %c0_31 = arith.constant 0 : index
    %35 = vector.load %arg1[%c0_30, %c96, %c0_31] : memref<1x448x84xbf16, #tpu.memory_space<vmem>>, vector<1x336x84xbf16>
    %36 = vector.shape_cast %35 : vector<1x336x84xbf16> to vector<336x84xbf16>
    %c6 = arith.constant 6 : index
    %c0_32 = arith.constant 0 : index
    %c0_33 = arith.constant 0 : index
    %37 = vector.load %arg2[%c6, %c0_32, %c0_33] : memref<7x84x126xbf16, #tpu.memory_space<vmem>>, vector<1x84x126xbf16>
    %38 = vector.shape_cast %37 : vector<1x84x126xbf16> to vector<84x126xbf16>
    %cst_34 = arith.constant dense<0.000000e+00> : vector<336x126xf32>
    %39 = tpu.matmul %36, %38, %cst_34 {dimension_numbers = #tpu.dot_dimension_numbers<[1], [0], [0], [1], [0, 0, 1, 1], [], []>} : vector<336x84xbf16>, vector<84x126xbf16>, vector<336x126xf32> -> vector<336x126xf32>
    %40 = arith.addf %34, %39 : vector<336x126xf32>
    %41 = vector.extract_strided_slice %40 {offsets = [0, 0], sizes = [336, 42], strides = [1, 1]} : vector<336x126xf32> to vector<336x42xf32>
    %42 = vector.extract_strided_slice %40 {offsets = [0, 42], sizes = [336, 42], strides = [1, 1]} : vector<336x126xf32> to vector<336x42xf32>
    %43 = arith.maximumf %41, %42 : vector<336x42xf32>
    %44 = vector.extract_strided_slice %40 {offsets = [0, 84], sizes = [336, 42], strides = [1, 1]} : vector<336x126xf32> to vector<336x42xf32>
    %45 = arith.maximumf %43, %44 : vector<336x42xf32>
    %cst_35 = arith.constant 0.000000e+00 : f32
    %46 = vector.broadcast %cst_35 : f32 to vector<16x10xf32>
    %47 = vector.extract_strided_slice %45 {offsets = [0, 0], sizes = [16, 42], strides = [1, 1]} : vector<336x42xf32> to vector<16x42xf32>
    %48 = vector.extract_strided_slice %45 {offsets = [16, 0], sizes = [16, 42], strides = [1, 1]} : vector<336x42xf32> to vector<16x42xf32>
    %49 = arith.maximumf %47, %48 : vector<16x42xf32>
    %50 = vector.extract_strided_slice %45 {offsets = [32, 0], sizes = [16, 42], strides = [1, 1]} : vector<336x42xf32> to vector<16x42xf32>
    %51 = arith.maximumf %49, %50 : vector<16x42xf32>
    %c0_36 = arith.constant 0 : index
    %c0_37 = arith.constant 0 : index
    %52 = vector.load %arg3[%c0_36, %c0_37] : memref<1x42xf32, #tpu.memory_space<vmem>>, vector<1x42xf32>
    %53 = vector.broadcast %52 : vector<1x42xf32> to vector<16x42xf32>
    %54 = arith.addf %51, %53 : vector<16x42xf32>
    %cst_38 = arith.constant 0.000000e+00 : f32
    %55 = vector.broadcast %cst_38 : f32 to vector<16x42xf32>
    %56 = arith.maximumf %54, %55 : vector<16x42xf32>
    %57 = arith.truncf %56 : vector<16x42xf32> to vector<16x42xbf16>
    %c0_39 = arith.constant 0 : index
    %c0_40 = arith.constant 0 : index
    %c0_41 = arith.constant 0 : index
    %58 = vector.load %arg4[%c0_39, %c0_40, %c0_41] : memref<7x42x10xbf16, #tpu.memory_space<vmem>>, vector<1x42x10xbf16>
    %59 = vector.shape_cast %58 : vector<1x42x10xbf16> to vector<42x10xbf16>
    %cst_42 = arith.constant dense<0.000000e+00> : vector<16x10xf32>
    %60 = tpu.matmul %57, %59, %cst_42 {dimension_numbers = #tpu.dot_dimension_numbers<[1], [0], [0], [1], [0, 0, 1, 1], [], []>} : vector<16x42xbf16>, vector<42x10xbf16>, vector<16x10xf32> -> vector<16x10xf32>
    %61 = arith.addf %46, %60 : vector<16x10xf32>
    %62 = vector.extract_strided_slice %45 {offsets = [48, 0], sizes = [16, 42], strides = [1, 1]} : vector<336x42xf32> to vector<16x42xf32>
    %63 = vector.extract_strided_slice %45 {offsets = [64, 0], sizes = [16, 42], strides = [1, 1]} : vector<336x42xf32> to vector<16x42xf32>
    %64 = arith.maximumf %62, %63 : vector<16x42xf32>
    %65 = vector.extract_strided_slice %45 {offsets = [80, 0], sizes = [16, 42], strides = [1, 1]} : vector<336x42xf32> to vector<16x42xf32>
    %66 = arith.maximumf %64, %65 : vector<16x42xf32>
    %c0_43 = arith.constant 0 : index
    %c0_44 = arith.constant 0 : index
    %67 = vector.load %arg3[%c0_43, %c0_44] : memref<1x42xf32, #tpu.memory_space<vmem>>, vector<1x42xf32>
    %68 = vector.broadcast %67 : vector<1x42xf32> to vector<16x42xf32>
    %69 = arith.addf %66, %68 : vector<16x42xf32>
    %cst_45 = arith.constant 0.000000e+00 : f32
    %70 = vector.broadcast %cst_45 : f32 to vector<16x42xf32>
    %71 = arith.maximumf %69, %70 : vector<16x42xf32>
    %72 = arith.truncf %71 : vector<16x42xf32> to vector<16x42xbf16>
    %c1_46 = arith.constant 1 : index
    %c0_47 = arith.constant 0 : index
    %c0_48 = arith.constant 0 : index
    %73 = vector.load %arg4[%c1_46, %c0_47, %c0_48] : memref<7x42x10xbf16, #tpu.memory_space<vmem>>, vector<1x42x10xbf16>
    %74 = vector.shape_cast %73 : vector<1x42x10xbf16> to vector<42x10xbf16>
    %cst_49 = arith.constant dense<0.000000e+00> : vector<16x10xf32>
    %75 = tpu.matmul %72, %74, %cst_49 {dimension_numbers = #tpu.dot_dimension_numbers<[1], [0], [0], [1], [0, 0, 1, 1], [], []>} : vector<16x42xbf16>, vector<42x10xbf16>, vector<16x10xf32> -> vector<16x10xf32>
    %76 = arith.addf %61, %75 : vector<16x10xf32>
    %77 = vector.extract_strided_slice %45 {offsets = [96, 0], sizes = [16, 42], strides = [1, 1]} : vector<336x42xf32> to vector<16x42xf32>
    %78 = vector.extract_strided_slice %45 {offsets = [112, 0], sizes = [16, 42], strides = [1, 1]} : vector<336x42xf32> to vector<16x42xf32>
    %79 = arith.maximumf %77, %78 : vector<16x42xf32>
    %80 = vector.extract_strided_slice %45 {offsets = [128, 0], sizes = [16, 42], strides = [1, 1]} : vector<336x42xf32> to vector<16x42xf32>
    %81 = arith.maximumf %79, %80 : vector<16x42xf32>
    %c0_50 = arith.constant 0 : index
    %c0_51 = arith.constant 0 : index
    %82 = vector.load %arg3[%c0_50, %c0_51] : memref<1x42xf32, #tpu.memory_space<vmem>>, vector<1x42xf32>
    %83 = vector.broadcast %82 : vector<1x42xf32> to vector<16x42xf32>
    %84 = arith.addf %81, %83 : vector<16x42xf32>
    %cst_52 = arith.constant 0.000000e+00 : f32
    %85 = vector.broadcast %cst_52 : f32 to vector<16x42xf32>
    %86 = arith.maximumf %84, %85 : vector<16x42xf32>
    %87 = arith.truncf %86 : vector<16x42xf32> to vector<16x42xbf16>
    %c2_53 = arith.constant 2 : index
    %c0_54 = arith.constant 0 : index
    %c0_55 = arith.constant 0 : index
    %88 = vector.load %arg4[%c2_53, %c0_54, %c0_55] : memref<7x42x10xbf16, #tpu.memory_space<vmem>>, vector<1x42x10xbf16>
    %89 = vector.shape_cast %88 : vector<1x42x10xbf16> to vector<42x10xbf16>
    %cst_56 = arith.constant dense<0.000000e+00> : vector<16x10xf32>
    %90 = tpu.matmul %87, %89, %cst_56 {dimension_numbers = #tpu.dot_dimension_numbers<[1], [0], [0], [1], [0, 0, 1, 1], [], []>} : vector<16x42xbf16>, vector<42x10xbf16>, vector<16x10xf32> -> vector<16x10xf32>
    %91 = arith.addf %76, %90 : vector<16x10xf32>
    %92 = vector.extract_strided_slice %45 {offsets = [144, 0], sizes = [16, 42], strides = [1, 1]} : vector<336x42xf32> to vector<16x42xf32>
    %93 = vector.extract_strided_slice %45 {offsets = [160, 0], sizes = [16, 42], strides = [1, 1]} : vector<336x42xf32> to vector<16x42xf32>
    %94 = arith.maximumf %92, %93 : vector<16x42xf32>
    %95 = vector.extract_strided_slice %45 {offsets = [176, 0], sizes = [16, 42], strides = [1, 1]} : vector<336x42xf32> to vector<16x42xf32>
    %96 = arith.maximumf %94, %95 : vector<16x42xf32>
    %c0_57 = arith.constant 0 : index
    %c0_58 = arith.constant 0 : index
    %97 = vector.load %arg3[%c0_57, %c0_58] : memref<1x42xf32, #tpu.memory_space<vmem>>, vector<1x42xf32>
    %98 = vector.broadcast %97 : vector<1x42xf32> to vector<16x42xf32>
    %99 = arith.addf %96, %98 : vector<16x42xf32>
    %cst_59 = arith.constant 0.000000e+00 : f32
    %100 = vector.broadcast %cst_59 : f32 to vector<16x42xf32>
    %101 = arith.maximumf %99, %100 : vector<16x42xf32>
    %102 = arith.truncf %101 : vector<16x42xf32> to vector<16x42xbf16>
    %c3_60 = arith.constant 3 : index
    %c0_61 = arith.constant 0 : index
    %c0_62 = arith.constant 0 : index
    %103 = vector.load %arg4[%c3_60, %c0_61, %c0_62] : memref<7x42x10xbf16, #tpu.memory_space<vmem>>, vector<1x42x10xbf16>
    %104 = vector.shape_cast %103 : vector<1x42x10xbf16> to vector<42x10xbf16>
    %cst_63 = arith.constant dense<0.000000e+00> : vector<16x10xf32>
    %105 = tpu.matmul %102, %104, %cst_63 {dimension_numbers = #tpu.dot_dimension_numbers<[1], [0], [0], [1], [0, 0, 1, 1], [], []>} : vector<16x42xbf16>, vector<42x10xbf16>, vector<16x10xf32> -> vector<16x10xf32>
    %106 = arith.addf %91, %105 : vector<16x10xf32>
    %107 = vector.extract_strided_slice %45 {offsets = [192, 0], sizes = [16, 42], strides = [1, 1]} : vector<336x42xf32> to vector<16x42xf32>
    %108 = vector.extract_strided_slice %45 {offsets = [208, 0], sizes = [16, 42], strides = [1, 1]} : vector<336x42xf32> to vector<16x42xf32>
    %109 = arith.maximumf %107, %108 : vector<16x42xf32>
    %110 = vector.extract_strided_slice %45 {offsets = [224, 0], sizes = [16, 42], strides = [1, 1]} : vector<336x42xf32> to vector<16x42xf32>
    %111 = arith.maximumf %109, %110 : vector<16x42xf32>
    %c0_64 = arith.constant 0 : index
    %c0_65 = arith.constant 0 : index
    %112 = vector.load %arg3[%c0_64, %c0_65] : memref<1x42xf32, #tpu.memory_space<vmem>>, vector<1x42xf32>
    %113 = vector.broadcast %112 : vector<1x42xf32> to vector<16x42xf32>
    %114 = arith.addf %111, %113 : vector<16x42xf32>
    %cst_66 = arith.constant 0.000000e+00 : f32
    %115 = vector.broadcast %cst_66 : f32 to vector<16x42xf32>
    %116 = arith.maximumf %114, %115 : vector<16x42xf32>
    %117 = arith.truncf %116 : vector<16x42xf32> to vector<16x42xbf16>
    %c4_67 = arith.constant 4 : index
    %c0_68 = arith.constant 0 : index
    %c0_69 = arith.constant 0 : index
    %118 = vector.load %arg4[%c4_67, %c0_68, %c0_69] : memref<7x42x10xbf16, #tpu.memory_space<vmem>>, vector<1x42x10xbf16>
    %119 = vector.shape_cast %118 : vector<1x42x10xbf16> to vector<42x10xbf16>
    %cst_70 = arith.constant dense<0.000000e+00> : vector<16x10xf32>
    %120 = tpu.matmul %117, %119, %cst_70 {dimension_numbers = #tpu.dot_dimension_numbers<[1], [0], [0], [1], [0, 0, 1, 1], [], []>} : vector<16x42xbf16>, vector<42x10xbf16>, vector<16x10xf32> -> vector<16x10xf32>
    %121 = arith.addf %106, %120 : vector<16x10xf32>
    %122 = vector.extract_strided_slice %45 {offsets = [240, 0], sizes = [16, 42], strides = [1, 1]} : vector<336x42xf32> to vector<16x42xf32>
    %123 = vector.extract_strided_slice %45 {offsets = [256, 0], sizes = [16, 42], strides = [1, 1]} : vector<336x42xf32> to vector<16x42xf32>
    %124 = arith.maximumf %122, %123 : vector<16x42xf32>
    %125 = vector.extract_strided_slice %45 {offsets = [272, 0], sizes = [16, 42], strides = [1, 1]} : vector<336x42xf32> to vector<16x42xf32>
    %126 = arith.maximumf %124, %125 : vector<16x42xf32>
    %c0_71 = arith.constant 0 : index
    %c0_72 = arith.constant 0 : index
    %127 = vector.load %arg3[%c0_71, %c0_72] : memref<1x42xf32, #tpu.memory_space<vmem>>, vector<1x42xf32>
    %128 = vector.broadcast %127 : vector<1x42xf32> to vector<16x42xf32>
    %129 = arith.addf %126, %128 : vector<16x42xf32>
    %cst_73 = arith.constant 0.000000e+00 : f32
    %130 = vector.broadcast %cst_73 : f32 to vector<16x42xf32>
    %131 = arith.maximumf %129, %130 : vector<16x42xf32>
    %132 = arith.truncf %131 : vector<16x42xf32> to vector<16x42xbf16>
    %c5_74 = arith.constant 5 : index
    %c0_75 = arith.constant 0 : index
    %c0_76 = arith.constant 0 : index
    %133 = vector.load %arg4[%c5_74, %c0_75, %c0_76] : memref<7x42x10xbf16, #tpu.memory_space<vmem>>, vector<1x42x10xbf16>
    %134 = vector.shape_cast %133 : vector<1x42x10xbf16> to vector<42x10xbf16>
    %cst_77 = arith.constant dense<0.000000e+00> : vector<16x10xf32>
    %135 = tpu.matmul %132, %134, %cst_77 {dimension_numbers = #tpu.dot_dimension_numbers<[1], [0], [0], [1], [0, 0, 1, 1], [], []>} : vector<16x42xbf16>, vector<42x10xbf16>, vector<16x10xf32> -> vector<16x10xf32>
    %136 = arith.addf %121, %135 : vector<16x10xf32>
    %137 = vector.extract_strided_slice %45 {offsets = [288, 0], sizes = [16, 42], strides = [1, 1]} : vector<336x42xf32> to vector<16x42xf32>
    %138 = vector.extract_strided_slice %45 {offsets = [304, 0], sizes = [16, 42], strides = [1, 1]} : vector<336x42xf32> to vector<16x42xf32>
    %139 = arith.maximumf %137, %138 : vector<16x42xf32>
    %140 = vector.extract_strided_slice %45 {offsets = [320, 0], sizes = [16, 42], strides = [1, 1]} : vector<336x42xf32> to vector<16x42xf32>
    %141 = arith.maximumf %139, %140 : vector<16x42xf32>
    %c0_78 = arith.constant 0 : index
    %c0_79 = arith.constant 0 : index
    %142 = vector.load %arg3[%c0_78, %c0_79] : memref<1x42xf32, #tpu.memory_space<vmem>>, vector<1x42xf32>
    %143 = vector.broadcast %142 : vector<1x42xf32> to vector<16x42xf32>
    %144 = arith.addf %141, %143 : vector<16x42xf32>
    %cst_80 = arith.constant 0.000000e+00 : f32
    %145 = vector.broadcast %cst_80 : f32 to vector<16x42xf32>
    %146 = arith.maximumf %144, %145 : vector<16x42xf32>
    %147 = arith.truncf %146 : vector<16x42xf32> to vector<16x42xbf16>
    %c6_81 = arith.constant 6 : index
    %c0_82 = arith.constant 0 : index
    %c0_83 = arith.constant 0 : index
    %148 = vector.load %arg4[%c6_81, %c0_82, %c0_83] : memref<7x42x10xbf16, #tpu.memory_space<vmem>>, vector<1x42x10xbf16>
    %149 = vector.shape_cast %148 : vector<1x42x10xbf16> to vector<42x10xbf16>
    %cst_84 = arith.constant dense<0.000000e+00> : vector<16x10xf32>
    %150 = tpu.matmul %147, %149, %cst_84 {dimension_numbers = #tpu.dot_dimension_numbers<[1], [0], [0], [1], [0, 0, 1, 1], [], []>} : vector<16x42xbf16>, vector<42x10xbf16>, vector<16x10xf32> -> vector<16x10xf32>
    %151 = arith.addf %136, %150 : vector<16x10xf32>
    %c0_85 = arith.constant 0 : index
    %c0_86 = arith.constant 0 : index
    %152 = vector.load %arg5[%c0_85, %c0_86] : memref<1x10xf32, #tpu.memory_space<vmem>>, vector<1x10xf32>
    %153 = vector.broadcast %152 : vector<1x10xf32> to vector<16x10xf32>
    %154 = arith.addf %151, %153 : vector<16x10xf32>
    %c0_87 = arith.constant 0 : index
    %c0_88 = arith.constant 0 : index
    %155 = vector.load %arg6[%c0_87, %c0_88] : memref<16x10xf32, #tpu.memory_space<vmem>>, vector<16x10xf32>
    tpu.vector_store %arg6[%c0_87, %c0_88], %154 {strides = array<i32>} : memref<16x10xf32, #tpu.memory_space<vmem>>, vector<16x10xf32>,
    return
  }
  func.func @transform_0(%arg0: i32) -> (i32, i32, i32) {
    %c0_i32 = arith.constant 0 : i32
    %c0_i32_0 = arith.constant 0 : i32
    %c0_i32_1 = arith.constant 0 : i32
    return %arg0, %c0_i32, %c0_i32_0 : i32, i32, i32
  }
  func.func @transform_1(%arg0: i32) -> (i32, i32, i32) {
    %c0_i32 = arith.constant 0 : i32
    %c0_i32_0 = arith.constant 0 : i32
    %c0_i32_1 = arith.constant 0 : i32
    %c0_i32_2 = arith.constant 0 : i32
    return %c0_i32, %c0_i32_0, %c0_i32_1 : i32, i32, i32
  }
  func.func @transform_2(%arg0: i32) -> (i32, i32) {
    %c0_i32 = arith.constant 0 : i32
    %c0_i32_0 = arith.constant 0 : i32
    %c0_i32_1 = arith.constant 0 : i32
    return %c0_i32, %c0_i32_0 : i32, i32
  }
  func.func @transform_3(%arg0: i32) -> (i32, i32, i32) {
    %c0_i32 = arith.constant 0 : i32
    %c0_i32_0 = arith.constant 0 : i32
    %c0_i32_1 = arith.constant 0 : i32
    %c0_i32_2 = arith.constant 0 : i32
    return %c0_i32, %c0_i32_0, %c0_i32_1 : i32, i32, i32
  }
  func.func @transform_4(%arg0: i32) -> (i32, i32) {
    %c0_i32 = arith.constant 0 : i32
    %c0_i32_0 = arith.constant 0 : i32
    %c0_i32_1 = arith.constant 0 : i32
    return %c0_i32, %c0_i32_0 : i32, i32
  }
  func.func @transform_5(%arg0: i32) -> (i32, i32) {
    %c0_i32 = arith.constant 0 : i32
    %c0_i32_0 = arith.constant 0 : i32
    return %arg0, %c0_i32 : i32, i32
  }
}

</mosaic_0001>

<llo_original>
// kernel: mnist_forward.1
$region0: #{mnist_forward.1}
  #allocation0 [shape = 'u32[]', space=smem, size = 0x4, offset = 0x4, fixed_abs, tag = 'smem constant byte address 0x4 - core index']
  #allocation1 [shape = 'u32[144,128]{1,0:T(1,128)}', space=vmem, size = 0x12000, scoped, tag = 'internal scratch']
  %s0 = inlined_call_operand.vmem [shape: bf16[1,448,84], index: 0, kind: input, shape index: {}]
  %s1 = inlined_call_operand.vmem [shape: bf16[7,84,126], index: 1, kind: input, shape index: {}]
  %s2 = inlined_call_operand.vmem [shape: f32[1,42], index: 2, kind: input, shape index: {}]
  %s3 = inlined_call_operand.vmem [shape: bf16[7,42,10], index: 3, kind: input, shape index: {}]
  %s4 = inlined_call_operand.vmem [shape: f32[1,10], index: 4, kind: input, shape index: {}]
  %s5 = inlined_call_operand.vmem [shape: f32[16,10], index: 5, kind: output, shape index: {}]
  %s6 = sld [smem:[#allocation0]]
  $region30: #{mnist_forward.1} parent=0
    _
  %s8 = ssub.s32 1, %s6
  %s9 = scalar_select 0, %s8, %s6
  // Predicated region
  $region2: #{mnist_forward.1} parent=0 // pred_check
    _
  $region3: #{mnist_forward.1} parent=0 // pred_check_branch
    %11 = sbr.rel (0) target = $region5
  $region4: #{mnist_forward.1} parent=0 // pred_region
    _
  $region5: #{mnist_forward.1} parent=0 // pred_fallthru
    _
  // Predicated region
  $region6: #{mnist_forward.1} parent=0 // pred_check
    _
  $region7: #{mnist_forward.1} parent=0 // pred_check_branch
    %13 = sbr.rel (0) target = $region9
  $region8: #{mnist_forward.1} parent=0 // pred_region
    _
  $region9: #{mnist_forward.1} parent=0 // pred_fallthru
    _
  // Predicated region
  $region10: #{mnist_forward.1} parent=0 // pred_check
    _
  $region11: #{mnist_forward.1} parent=0 // pred_check_branch
    %15 = sbr.rel (0) target = $region13
  $region12: #{mnist_forward.1} parent=0 // pred_region
    _
  $region13: #{mnist_forward.1} parent=0 // pred_fallthru
    _
  // Predicated region
  $region14: #{mnist_forward.1} parent=0 // pred_check
    _
  $region15: #{mnist_forward.1} parent=0 // pred_check_branch
    %17 = sbr.rel (0) target = $region17
  $region16: #{mnist_forward.1} parent=0 // pred_region
    _
  $region17: #{mnist_forward.1} parent=0 // pred_fallthru
    _
  // Predicated region
  $region18: #{mnist_forward.1} parent=0 // pred_check
    _
  $region19: #{mnist_forward.1} parent=0 // pred_check_branch
    %19 = sbr.rel (0) target = $region21
  $region20: #{mnist_forward.1} parent=0 // pred_region
    _
  $region21: #{mnist_forward.1} parent=0 // pred_fallthru
    _
  %v21 = vld [vmem:[%s0] sm:$0xf]
  %v22 = vld [vmem:[%s0 + $0x4] sm:$0xf]
  %v23 = vld [vmem:[%s0 + $0x8] sm:$0xf]
  %v24 = vld [vmem:[%s0 + $0xc] sm:$0xf]
  %v25 = vld [vmem:[%s0 + $0x10] sm:$0xf]
  %v26 = vld [vmem:[%s0 + $0x14] sm:$0xf]
  %v27 = vld [vmem:[%s0 + $0x18] sm:$0xf]
  %v28 = vld [vmem:[%s0 + $0x1c] sm:$0xf]
  %v29 = vld [vmem:[%s0 + $0x20] sm:$0xf]
  %v30 = vld [vmem:[%s0 + $0x24] sm:$0xf]
  %v31 = vld [vmem:[%s0 + $0x28] sm:$0xf]
  %v32 = vld [vmem:[%s0 + $0x2c] sm:$0xf]
  %v33 = vld [vmem:[%s0 + $0x30] sm:$0xf]
  %v34 = vld [vmem:[%s0 + $0x34] sm:$0xf]
  %v35 = vld [vmem:[%s0 + $0x38] sm:$0xf]
  %v36 = vld [vmem:[%s0 + $0x3c] sm:$0xf]
  %v37 = vld [vmem:[%s0 + $0x40] sm:$0xf]
  %v38 = vld [vmem:[%s0 + $0x44] sm:$0xf]
  %v39 = vld [vmem:[%s0 + $0x48] sm:$0xf]
  %v40 = vld [vmem:[%s0 + $0x4c] sm:$0xf]
  %v41 = vld [vmem:[%s0 + $0x50] sm:$0xf]
  %v42 = vld [vmem:[%s0 + $0x54] sm:$0xf]
  %v43 = vld [vmem:[%s0 + $0x58] sm:$0xf]
  %v44 = vld [vmem:[%s0 + $0x5c] sm:$0xf]
  %v45 = vld [vmem:[%s0 + $0x60] sm:$0xf]
  %v46 = vld [vmem:[%s0 + $0x64] sm:$0xf]
  %v47 = vld [vmem:[%s0 + $0x68] sm:$0xf]
  %v48 = vld [vmem:[%s0 + $0x6c] sm:$0xf]
  %v49 = vld [vmem:[%s0 + $0x70] sm:$0xf]
  %v50 = vld [vmem:[%s0 + $0x74] sm:$0xf]
  %v51 = vld [vmem:[%s0 + $0x78] sm:$0xf]
  %v52 = vld [vmem:[%s0 + $0x7c] sm:$0xf]
  %v53 = vld [vmem:[%s0 + $0x80] sm:$0xf]
  %v54 = vld [vmem:[%s0 + $0x84] sm:$0xf]
  %v55 = vld [vmem:[%s0 + $0x88] sm:$0xf]
  %v56 = vld [vmem:[%s0 + $0x8c] sm:$0xf]
  %v57 = vld [vmem:[%s0 + $0x90] sm:$0xf]
  %v58 = vld [vmem:[%s0 + $0x94] sm:$0xf]
  %v59 = vld [vmem:[%s0 + $0x98] sm:$0xf]
  %v60 = vld [vmem:[%s0 + $0x9c] sm:$0xf]
  %v61 = vld [vmem:[%s0 + $0xa0] sm:$0xf]
  %v62 = vld [vmem:[%s0 + $0xa4] sm:$0xf]
  %v63 = vld [vmem:[%s1] sm:$0xf]
  %v64 = vld [vmem:[%s1 + $0x4] sm:$0xf]
  %v65 = vld [vmem:[%s1 + $0x8] sm:$0xf]
  %v66 = vld [vmem:[%s1 + $0xc] sm:$0xf]
  %v67 = vld [vmem:[%s1 + $0x10] sm:$0xf]
  %v68 = vld [vmem:[%s1 + $0x14] sm:$0xf]
  %v69 = vld [vmem:[%s1 + $0x18] sm:$0xf]
  %v70 = vld [vmem:[%s1 + $0x1c] sm:$0xf]
  %v71 = vld [vmem:[%s1 + $0x20] sm:$0xf]
  %v72 = vld [vmem:[%s1 + $0x24] sm:$0xf]
  %v73 = vld [vmem:[%s1 + $0x28] sm:$0x3]
  %v74 = vld [vmem:[%s0 + $0xa8] sm:$0xf]
  %v75 = vld [vmem:[%s0 + $0xac] sm:$0xf]
  %s76 = scalar_lea.vmem %s1, 44
  %v77 = vld [vmem:[%s76] sm:$0xf]
  %v78 = vld [vmem:[%s76 + $0x4] sm:$0xf]
  %v79 = vld [vmem:[%s76 + $0x8] sm:$0xf]
  %v80 = vld [vmem:[%s76 + $0xc] sm:$0xf]
  %v81 = vld [vmem:[%s76 + $0x10] sm:$0xf]
  %v82 = vld [vmem:[%s76 + $0x14] sm:$0xf]
  %v83 = vld [vmem:[%s76 + $0x18] sm:$0xf]
  %v84 = vld [vmem:[%s76 + $0x1c] sm:$0xf]
  %v85 = vld [vmem:[%s76 + $0x20] sm:$0xf]
  %v86 = vld [vmem:[%s76 + $0x24] sm:$0xf]
  %v87 = vld [vmem:[%s76 + $0x28] sm:$0x3]
  %v130 = vunpack.c.l.b16 %v23
  %v131 = vunpack.c.l.b16 %v24
  %v132 = vunpack.c.l.b16 %v25
  %v133 = vunpack.c.l.b16 %v26
  %v134 = vunpack.c.l.b16 %v27
  %v135 = vunpack.c.l.b16 %v28
  %v136 = vunpack.c.l.b16 %v29
  %v137 = vunpack.c.l.b16 %v30
  %v138 = vunpack.c.l.b16 %v31
  %v139 = vunpack.c.l.b16 %v32
  %v140 = vunpack.c.l.b16 %v33
  %v141 = vunpack.c.l.b16 %v34
  %v142 = vunpack.c.l.b16 %v35
  %v143 = vunpack.c.l.b16 %v36
  %v144 = vunpack.c.l.b16 %v37
  %v145 = vunpack.c.l.b16 %v38
  %v146 = vunpack.c.l.b16 %v39
  %v147 = vunpack.c.l.b16 %v40
  %v148 = vunpack.c.l.b16 %v41
  %v149 = vunpack.c.l.b16 %v42
  %v150 = vunpack.c.l.b16 %v43
  %v151 = vunpack.c.l.b16 %v44
  %v152 = vunpack.c.l.b16 %v45
  %v153 = vunpack.c.l.b16 %v46
  %v154 = vunpack.c.l.b16 %v47
  %v155 = vunpack.c.l.b16 %v48
  %v156 = vunpack.c.l.b16 %v49
  %v157 = vunpack.c.l.b16 %v50
  %v158 = vunpack.c.l.b16 %v51
  %v159 = vunpack.c.l.b16 %v52
  %v160 = vunpack.c.l.b16 %v53
  %v161 = vunpack.c.l.b16 %v54
  %v162 = vunpack.c.l.b16 %v55
  %v163 = vunpack.c.l.b16 %v56
  %v164 = vunpack.c.l.b16 %v57
  %v165 = vunpack.c.l.b16 %v58
  %v166 = vunpack.c.l.b16 %v59
  %v167 = vunpack.c.l.b16 %v60
  %v168 = vunpack.c.l.b16 %v61
  %v169 = vunpack.c.l.b16 %v62
  %v170 = vunpack.c.l.b16 %v74
  %v171 = vunpack.c.l.b16 %v75
  %v172 = vpack.c.b16 %v131, %v130
  %v173 = vpack.c.b16 %v133, %v132
  %v174 = vpack.c.b16 %v135, %v134
  %v175 = vpack.c.b16 %v137, %v136
  %v176 = vpack.c.b16 %v139, %v138
  %v177 = vpack.c.b16 %v141, %v140
  %v178 = vpack.c.b16 %v143, %v142
  %v179 = vpack.c.b16 %v145, %v144
  %v180 = vpack.c.b16 %v147, %v146
  %v181 = vpack.c.b16 %v149, %v148
  %v182 = vpack.c.b16 %v151, %v150
  %v183 = vpack.c.b16 %v153, %v152
  %v184 = vpack.c.b16 %v155, %v154
  %v185 = vpack.c.b16 %v157, %v156
  %v186 = vpack.c.b16 %v159, %v158
  %v187 = vpack.c.b16 %v161, %v160
  %v188 = vpack.c.b16 %v163, %v162
  %v189 = vpack.c.b16 %v165, %v164
  %v190 = vpack.c.b16 %v167, %v166
  %v191 = vpack.c.b16 %v169, %v168
  %v192 = vpack.c.b16 %v171, %v170
  %v204 = vunpack.c.l.b16 %v77
  %v205 = vunpack.c.l.b16 %v78
  %v206 = vunpack.c.l.b16 %v79
  %v207 = vunpack.c.l.b16 %v80
  %v208 = vunpack.c.l.b16 %v81
  %v209 = vunpack.c.l.b16 %v82
  %v210 = vunpack.c.l.b16 %v83
  %v211 = vunpack.c.l.b16 %v84
  %v212 = vunpack.c.l.b16 %v85
  %v213 = vunpack.c.l.b16 %v86
  %v214 = vunpack.c.l.b16 %v87
  %v215 = vpack.c.b16 %v205, %v204
  %v216 = vpack.c.b16 %v207, %v206
  %v217 = vpack.c.b16 %v209, %v208
  %v218 = vpack.c.b16 %v211, %v210
  %v219 = vpack.c.b16 %v213, %v212
  %v220 = vpack.c.b16 %v214, %v214
  %vm226 = vcmask 687104
  %v228 = vsel %vm226, %v172, 0
  %v231 = vsel %vm226, %v173, 0
  %v234 = vsel %vm226, %v174, 0
  %v237 = vsel %vm226, %v175, 0
  %v240 = vsel %vm226, %v176, 0
  %v243 = vsel %vm226, %v177, 0
  %v246 = vsel %vm226, %v178, 0
  %v249 = vsel %vm226, %v179, 0
  %v252 = vsel %vm226, %v180, 0
  %v255 = vsel %vm226, %v181, 0
  %v258 = vsel %vm226, %v182, 0
  %v261 = vsel %vm226, %v183, 0
  %v264 = vsel %vm226, %v184, 0
  %v267 = vsel %vm226, %v185, 0
  %v270 = vsel %vm226, %v186, 0
  %v273 = vsel %vm226, %v187, 0
  %v276 = vsel %vm226, %v188, 0
  %v279 = vsel %vm226, %v189, 0
  %v282 = vsel %vm226, %v190, 0
  %v285 = vsel %vm226, %v191, 0
  %v288 = vsel %vm226, %v192, 0
  %vm290 = vcmask 1041408
  %v292 = vsel %vm290, %v220, 0
  %294 = vmatprep.subr.bf16.mxu0 0
  %295 = vmatpush1.bf16.msra.mxu0 0
  %296 = vmatprep.subr.bf16.mxu0 0
  %297 = vmatpush1.bf16.msra.mxu0 0
  %298 = vmatprep.subr.bf16.mxu0 0
  %299 = vmatpush1.bf16.msra.mxu0 %v292
  %300 = vmatprep.subr.bf16.mxu0 0
  %301 = vmatpush1.bf16.msra.mxu0 %v219
  %302 = vmatprep.subr.bf16.mxu0 0
  %303 = vmatpush1.bf16.msra.mxu0 %v218
  %304 = vmatprep.subr.bf16.mxu0 0
  %305 = vmatpush1.bf16.msra.mxu0 %v217
  %306 = vmatprep.subr.bf16.mxu0 0
  %307 = vmatpush1.bf16.msra.mxu0 %v216
  %308 = vmatprep.subr.bf16.mxu0 0
  %309 = vmatpush1.bf16.msra.mxu0 %v215
  %310 = vmatprep.subr.bf16.mxu0 0
  %311 = vmatpush2.bf16.msra.mxu0 0
  %312 = vmatprep.subr.bf16.mxu0 0
  %313 = vmatpush2.bf16.msra.mxu0 0
  %314 = vmatprep.subr.bf16.mxu0 0
  %315 = vmatpush2.bf16.msra.mxu0 0
  %316 = vmatprep.subr.bf16.mxu0 0
  %317 = vmatpush2.bf16.msra.mxu0 0
  %318 = vmatprep.subr.bf16.mxu0 0
  %319 = vmatpush2.bf16.msra.mxu0 0
  %320 = vmatprep.subr.bf16.mxu0 0
  %321 = vmatpush2.bf16.msra.mxu0 0
  %322 = vmatprep.subr.bf16.mxu0 0
  %323 = vmatpush2.bf16.msra.mxu0 0
  %324 = vmatprep.subr.bf16.mxu0 0
  %325 = vmatpush2.bf16.msra.mxu0 0
  %326 = vmatprep.mubr.bf16.mxu0 0
  %327 = vmatmul.mubr.bf16.gmra.mxu0 %v228
  %v328 = vpop.f32.mrf.mxu0
  %v329 = vadd.f32 0.0, %v328
  %v330 = vpop.f32.mrf.mxu0
  %v331 = vpop.f32.mrf.mxu0
  %v332 = vadd.f32 0.0, %v331
  %v333 = vpop.f32.mrf.mxu0
  %334 = vmatprep.mubr.bf16.mxu0 0
  %335 = vmatmul.mubr.bf16.gmra.mxu0 %v231
  %v336 = vpop.f32.mrf.mxu0
  %v337 = vadd.f32 0.0, %v336
  %v338 = vpop.f32.mrf.mxu0
  %v339 = vpop.f32.mrf.mxu0
  %v340 = vadd.f32 0.0, %v339
  %v341 = vpop.f32.mrf.mxu0
  %342 = vmatprep.mubr.bf16.mxu0 0
  %343 = vmatmul.mubr.bf16.gmra.mxu0 %v234
  %v344 = vpop.f32.mrf.mxu0
  %v345 = vadd.f32 0.0, %v344
  %v346 = vpop.f32.mrf.mxu0
  %v347 = vpop.f32.mrf.mxu0
  %v348 = vadd.f32 0.0, %v347
  %v349 = vpop.f32.mrf.mxu0
  %350 = vmatprep.mubr.bf16.mxu0 0
  %351 = vmatmul.mubr.bf16.gmra.mxu0 %v237
  %v352 = vpop.f32.mrf.mxu0
  %v353 = vadd.f32 0.0, %v352
  %v354 = vpop.f32.mrf.mxu0
  %v355 = vpop.f32.mrf.mxu0
  %v356 = vadd.f32 0.0, %v355
  %v357 = vpop.f32.mrf.mxu0
  %358 = vmatprep.mubr.bf16.mxu0 0
  %359 = vmatmul.mubr.bf16.gmra.mxu0 %v240
  %v360 = vpop.f32.mrf.mxu0
  %v361 = vadd.f32 0.0, %v360
  %v362 = vpop.f32.mrf.mxu0
  %v363 = vpop.f32.mrf.mxu0
  %v364 = vadd.f32 0.0, %v363
  %v365 = vpop.f32.mrf.mxu0
  %366 = vmatprep.mubr.bf16.mxu0 0
  %367 = vmatmul.mubr.bf16.gmra.mxu0 %v243
  %v368 = vpop.f32.mrf.mxu0
  %v369 = vadd.f32 0.0, %v368
  %v370 = vpop.f32.mrf.mxu0
  %v371 = vpop.f32.mrf.mxu0
  %v372 = vadd.f32 0.0, %v371
  %v373 = vpop.f32.mrf.mxu0
  %374 = vmatprep.mubr.bf16.mxu0 0
  %375 = vmatmul.mubr.bf16.gmra.mxu0 %v246
  %v376 = vpop.f32.mrf.mxu0
  %v377 = vadd.f32 0.0, %v376
  %v378 = vpop.f32.mrf.mxu0
  %v379 = vpop.f32.mrf.mxu0
  %v380 = vadd.f32 0.0, %v379
  %v381 = vpop.f32.mrf.mxu0
  %382 = vmatprep.mubr.bf16.mxu0 0
  %383 = vmatmul.mubr.bf16.gmra.mxu0 %v249
  %v384 = vpop.f32.mrf.mxu0
  %v385 = vadd.f32 0.0, %v384
  %v386 = vpop.f32.mrf.mxu0
  %v387 = vpop.f32.mrf.mxu0
  %v388 = vadd.f32 0.0, %v387
  %v389 = vpop.f32.mrf.mxu0
  %390 = vmatprep.mubr.bf16.mxu0 0
  %391 = vmatmul.mubr.bf16.gmra.mxu0 %v252
  %v392 = vpop.f32.mrf.mxu0
  %v393 = vadd.f32 0.0, %v392
  %v394 = vpop.f32.mrf.mxu0
  %v395 = vpop.f32.mrf.mxu0
  %v396 = vadd.f32 0.0, %v395
  %v397 = vpop.f32.mrf.mxu0
  %398 = vmatprep.mubr.bf16.mxu0 0
  %399 = vmatmul.mubr.bf16.gmra.mxu0 %v255
  %v400 = vpop.f32.mrf.mxu0
  %v401 = vadd.f32 0.0, %v400
  %v402 = vpop.f32.mrf.mxu0
  %v403 = vpop.f32.mrf.mxu0
  %v404 = vadd.f32 0.0, %v403
  %v405 = vpop.f32.mrf.mxu0
  %406 = vmatprep.mubr.bf16.mxu0 0
  %407 = vmatmul.mubr.bf16.gmra.mxu0 %v258
  %v408 = vpop.f32.mrf.mxu0
  %v409 = vadd.f32 0.0, %v408
  %v410 = vpop.f32.mrf.mxu0
  %v411 = vpop.f32.mrf.mxu0
  %v412 = vadd.f32 0.0, %v411
  %v413 = vpop.f32.mrf.mxu0
  %414 = vmatprep.mubr.bf16.mxu0 0
  %415 = vmatmul.mubr.bf16.gmra.mxu0 %v261
  %v416 = vpop.f32.mrf.mxu0
  %v417 = vadd.f32 0.0, %v416
  %v418 = vpop.f32.mrf.mxu0
  %v419 = vpop.f32.mrf.mxu0
  %v420 = vadd.f32 0.0, %v419
  %v421 = vpop.f32.mrf.mxu0
  %422 = vmatprep.mubr.bf16.mxu0 0
  %423 = vmatmul.mubr.bf16.gmra.mxu0 %v264
  %v424 = vpop.f32.mrf.mxu0
  %v425 = vadd.f32 0.0, %v424
  %v426 = vpop.f32.mrf.mxu0
  %v427 = vpop.f32.mrf.mxu0
  %v428 = vadd.f32 0.0, %v427
  %v429 = vpop.f32.mrf.mxu0
  %430 = vmatprep.mubr.bf16.mxu0 0
  %431 = vmatmul.mubr.bf16.gmra.mxu0 %v267
  %v432 = vpop.f32.mrf.mxu0
  %v433 = vadd.f32 0.0, %v432
  %v434 = vpop.f32.mrf.mxu0
  %v435 = vpop.f32.mrf.mxu0
  %v436 = vadd.f32 0.0, %v435
  %v437 = vpop.f32.mrf.mxu0
  %438 = vmatprep.mubr.bf16.mxu0 0
  %439 = vmatmul.mubr.bf16.gmra.mxu0 %v270
  %v440 = vpop.f32.mrf.mxu0
  %v441 = vadd.f32 0.0, %v440
  %v442 = vpop.f32.mrf.mxu0
  %v443 = vpop.f32.mrf.mxu0
  %v444 = vadd.f32 0.0, %v443
  %v445 = vpop.f32.mrf.mxu0
  %446 = vmatprep.mubr.bf16.mxu0 0
  %447 = vmatmul.mubr.bf16.gmra.mxu0 %v273
  %v448 = vpop.f32.mrf.mxu0
  %v449 = vadd.f32 0.0, %v448
  %v450 = vpop.f32.mrf.mxu0
  %v451 = vpop.f32.mrf.mxu0
  %v452 = vadd.f32 0.0, %v451
  %v453 = vpop.f32.mrf.mxu0
  %454 = vmatprep.mubr.bf16.mxu0 0
  %455 = vmatmul.mubr.bf16.gmra.mxu0 %v276
  %v456 = vpop.f32.mrf.mxu0
  %v457 = vadd.f32 0.0, %v456
  %v458 = vpop.f32.mrf.mxu0
  %v459 = vpop.f32.mrf.mxu0
  %v460 = vadd.f32 0.0, %v459
  %v461 = vpop.f32.mrf.mxu0
  %462 = vmatprep.mubr.bf16.mxu0 0
  %463 = vmatmul.mubr.bf16.gmra.mxu0 %v279
  %v464 = vpop.f32.mrf.mxu0
  %v465 = vadd.f32 0.0, %v464
  %v466 = vpop.f32.mrf.mxu0
  %v467 = vpop.f32.mrf.mxu0
  %v468 = vadd.f32 0.0, %v467
  %v469 = vpop.f32.mrf.mxu0
  %470 = vmatprep.mubr.bf16.mxu0 0
  %471 = vmatmul.mubr.bf16.gmra.mxu0 %v282
  %v472 = vpop.f32.mrf.mxu0
  %v473 = vadd.f32 0.0, %v472
  %v474 = vpop.f32.mrf.mxu0
  %v475 = vpop.f32.mrf.mxu0
  %v476 = vadd.f32 0.0, %v475
  %v477 = vpop.f32.mrf.mxu0
  %478 = vmatprep.mubr.bf16.mxu0 0
  %479 = vmatmul.mubr.bf16.gmra.mxu0 %v285
  %v480 = vpop.f32.mrf.mxu0
  %v481 = vadd.f32 0.0, %v480
  %v482 = vpop.f32.mrf.mxu0
  %v483 = vpop.f32.mrf.mxu0
  %v484 = vadd.f32 0.0, %v483
  %v485 = vpop.f32.mrf.mxu0
  %486 = vmatprep.mubr.bf16.mxu0 0
  %487 = vmatmul.mubr.bf16.gmra.mxu0 %v288
  %v488 = vpop.f32.mrf.mxu0
  %v489 = vadd.f32 0.0, %v488
  %v490 = vpop.f32.mrf.mxu0
  %v491 = vpop.f32.mrf.mxu0
  %v492 = vadd.f32 0.0, %v491
  %v493 = vpop.f32.mrf.mxu0
  %494 = vdwg.mxu0
  %v497 = vunpack.c.l.b16 %v21
  %v498 = vunpack.c.l.b16 %v22
  %v499 = vpack.c.b16 %v498, %v497
  %v511 = vunpack.c.l.b16 %v63
  %v512 = vunpack.c.l.b16 %v64
  %v513 = vunpack.c.l.b16 %v65
  %v514 = vunpack.c.l.b16 %v66
  %v515 = vunpack.c.l.b16 %v67
  %v516 = vunpack.c.l.b16 %v68
  %v517 = vunpack.c.l.b16 %v69
  %v518 = vunpack.c.l.b16 %v70
  %v519 = vunpack.c.l.b16 %v71
  %v520 = vunpack.c.l.b16 %v72
  %v521 = vunpack.c.l.b16 %v73
  %v522 = vpack.c.b16 %v512, %v511
  %v523 = vpack.c.b16 %v514, %v513
  %v524 = vpack.c.b16 %v516, %v515
  %v525 = vpack.c.b16 %v518, %v517
  %v526 = vpack.c.b16 %v520, %v519
  %v527 = vpack.c.b16 %v521, %v521
  %v534 = vsel %vm226, %v499, 0
  %v537 = vsel %vm290, %v527, 0
  %539 = vmatprep.subr.bf16.mxu0 0
  %540 = vmatpush1.bf16.msra.mxu0 0
  %541 = vmatprep.subr.bf16.mxu0 0
  %542 = vmatpush1.bf16.msra.mxu0 0
  %543 = vmatprep.subr.bf16.mxu0 0
  %544 = vmatpush1.bf16.msra.mxu0 %v537
  %545 = vmatprep.subr.bf16.mxu0 0
  %546 = vmatpush1.bf16.msra.mxu0 %v526
  %547 = vmatprep.subr.bf16.mxu0 0
  %548 = vmatpush1.bf16.msra.mxu0 %v525
  %549 = vmatprep.subr.bf16.mxu0 0
  %550 = vmatpush1.bf16.msra.mxu0 %v524
  %551 = vmatprep.subr.bf16.mxu0 0
  %552 = vmatpush1.bf16.msra.mxu0 %v523
  %553 = vmatprep.subr.bf16.mxu0 0
  %554 = vmatpush1.bf16.msra.mxu0 %v522
  %555 = vmatprep.subr.bf16.mxu0 0
  %556 = vmatpush2.bf16.msra.mxu0 0
  %557 = vmatprep.subr.bf16.mxu0 0
  %558 = vmatpush2.bf16.msra.mxu0 0
  %559 = vmatprep.subr.bf16.mxu0 0
  %560 = vmatpush2.bf16.msra.mxu0 0
  %561 = vmatprep.subr.bf16.mxu0 0
  %562 = vmatpush2.bf16.msra.mxu0 0
  %563 = vmatprep.subr.bf16.mxu0 0
  %564 = vmatpush2.bf16.msra.mxu0 0
  %565 = vmatprep.subr.bf16.mxu0 0
  %566 = vmatpush2.bf16.msra.mxu0 0
  %567 = vmatprep.subr.bf16.mxu0 0
  %568 = vmatpush2.bf16.msra.mxu0 0
  %569 = vmatprep.subr.bf16.mxu0 0
  %570 = vmatpush2.bf16.msra.mxu0 0
  %571 = vmatprep.mubr.bf16.mxu0 0
  %572 = vmatmul.mubr.bf16.gmra.mxu0 %v534
  %v573 = vpop.f32.mrf.mxu0
  %v574 = vadd.f32 %v329, %v573
  %v575 = vpop.f32.mrf.mxu0
  %v576 = vpop.f32.mrf.mxu0
  %v577 = vadd.f32 %v332, %v576
  %v578 = vpop.f32.mrf.mxu0
  %579 = vmatprep.mubr.bf16.mxu0 0
  %580 = vmatmul.mubr.bf16.gmra.mxu0 %v228
  %v581 = vpop.f32.mrf.mxu0
  %v582 = vadd.f32 %v337, %v581
  %v583 = vpop.f32.mrf.mxu0
  %v584 = vpop.f32.mrf.mxu0
  %v585 = vadd.f32 %v340, %v584
  %v586 = vpop.f32.mrf.mxu0
  %587 = vmatprep.mubr.bf16.mxu0 0
  %588 = vmatmul.mubr.bf16.gmra.mxu0 %v231
  %v589 = vpop.f32.mrf.mxu0
  %v590 = vadd.f32 %v345, %v589
  %v591 = vpop.f32.mrf.mxu0
  %v592 = vpop.f32.mrf.mxu0
  %v593 = vadd.f32 %v348, %v592
  %v594 = vpop.f32.mrf.mxu0
  %595 = vmatprep.mubr.bf16.mxu0 0
  %596 = vmatmul.mubr.bf16.gmra.mxu0 %v234
  %v597 = vpop.f32.mrf.mxu0
  %v598 = vadd.f32 %v353, %v597
  %v599 = vpop.f32.mrf.mxu0
  %v600 = vpop.f32.mrf.mxu0
  %v601 = vadd.f32 %v356, %v600
  %v602 = vpop.f32.mrf.mxu0
  %603 = vmatprep.mubr.bf16.mxu0 0
  %604 = vmatmul.mubr.bf16.gmra.mxu0 %v237
  %v605 = vpop.f32.mrf.mxu0
  %v606 = vadd.f32 %v361, %v605
  %v607 = vpop.f32.mrf.mxu0
  %v608 = vpop.f32.mrf.mxu0
  %v609 = vadd.f32 %v364, %v608
  %v610 = vpop.f32.mrf.mxu0
  %611 = vmatprep.mubr.bf16.mxu0 0
  %612 = vmatmul.mubr.bf16.gmra.mxu0 %v240
  %v613 = vpop.f32.mrf.mxu0
  %v614 = vadd.f32 %v369, %v613
  %v615 = vpop.f32.mrf.mxu0
  %v616 = vpop.f32.mrf.mxu0
  %v617 = vadd.f32 %v372, %v616
  %v618 = vpop.f32.mrf.mxu0
  %619 = vmatprep.mubr.bf16.mxu0 0
  %620 = vmatmul.mubr.bf16.gmra.mxu0 %v243
  %v621 = vpop.f32.mrf.mxu0
  %v622 = vadd.f32 %v377, %v621
  %v623 = vpop.f32.mrf.mxu0
  %v624 = vpop.f32.mrf.mxu0
  %v625 = vadd.f32 %v380, %v624
  %v626 = vpop.f32.mrf.mxu0
  %627 = vmatprep.mubr.bf16.mxu0 0
  %628 = vmatmul.mubr.bf16.gmra.mxu0 %v246
  %v629 = vpop.f32.mrf.mxu0
  %v630 = vadd.f32 %v385, %v629
  %v631 = vpop.f32.mrf.mxu0
  %v632 = vpop.f32.mrf.mxu0
  %v633 = vadd.f32 %v388, %v632
  %v634 = vpop.f32.mrf.mxu0
  %635 = vmatprep.mubr.bf16.mxu0 0
  %636 = vmatmul.mubr.bf16.gmra.mxu0 %v249
  %v637 = vpop.f32.mrf.mxu0
  %v638 = vadd.f32 %v393, %v637
  %v639 = vpop.f32.mrf.mxu0
  %v640 = vpop.f32.mrf.mxu0
  %v641 = vadd.f32 %v396, %v640
  %v642 = vpop.f32.mrf.mxu0
  %643 = vmatprep.mubr.bf16.mxu0 0
  %644 = vmatmul.mubr.bf16.gmra.mxu0 %v252
  %v645 = vpop.f32.mrf.mxu0
  %v646 = vadd.f32 %v401, %v645
  %v647 = vpop.f32.mrf.mxu0
  %v648 = vpop.f32.mrf.mxu0
  %v649 = vadd.f32 %v404, %v648
  %v650 = vpop.f32.mrf.mxu0
  %651 = vmatprep.mubr.bf16.mxu0 0
  %652 = vmatmul.mubr.bf16.gmra.mxu0 %v255
  %v653 = vpop.f32.mrf.mxu0
  %v654 = vadd.f32 %v409, %v653
  %v655 = vpop.f32.mrf.mxu0
  %v656 = vpop.f32.mrf.mxu0
  %v657 = vadd.f32 %v412, %v656
  %v658 = vpop.f32.mrf.mxu0
  %659 = vmatprep.mubr.bf16.mxu0 0
  %660 = vmatmul.mubr.bf16.gmra.mxu0 %v258
  %v661 = vpop.f32.mrf.mxu0
  %v662 = vadd.f32 %v417, %v661
  %v663 = vpop.f32.mrf.mxu0
  %v664 = vpop.f32.mrf.mxu0
  %v665 = vadd.f32 %v420, %v664
  %v666 = vpop.f32.mrf.mxu0
  %667 = vmatprep.mubr.bf16.mxu0 0
  %668 = vmatmul.mubr.bf16.gmra.mxu0 %v261
  %v669 = vpop.f32.mrf.mxu0
  %v670 = vadd.f32 %v425, %v669
  %v671 = vpop.f32.mrf.mxu0
  %v672 = vpop.f32.mrf.mxu0
  %v673 = vadd.f32 %v428, %v672
  %v674 = vpop.f32.mrf.mxu0
  %675 = vmatprep.mubr.bf16.mxu0 0
  %676 = vmatmul.mubr.bf16.gmra.mxu0 %v264
  %v677 = vpop.f32.mrf.mxu0
  %v678 = vadd.f32 %v433, %v677
  %v679 = vpop.f32.mrf.mxu0
  %v680 = vpop.f32.mrf.mxu0
  %v681 = vadd.f32 %v436, %v680
  %v682 = vpop.f32.mrf.mxu0
  %683 = vmatprep.mubr.bf16.mxu0 0
  %684 = vmatmul.mubr.bf16.gmra.mxu0 %v267
  %v685 = vpop.f32.mrf.mxu0
  %v686 = vadd.f32 %v441, %v685
  %v687 = vpop.f32.mrf.mxu0
  %v688 = vpop.f32.mrf.mxu0
  %v689 = vadd.f32 %v444, %v688
  %v690 = vpop.f32.mrf.mxu0
  %691 = vmatprep.mubr.bf16.mxu0 0
  %692 = vmatmul.mubr.bf16.gmra.mxu0 %v270
  %v693 = vpop.f32.mrf.mxu0
  %v694 = vadd.f32 %v449, %v693
  %v695 = vpop.f32.mrf.mxu0
  %v696 = vpop.f32.mrf.mxu0
  %v697 = vadd.f32 %v452, %v696
  %v698 = vpop.f32.mrf.mxu0
  %699 = vmatprep.mubr.bf16.mxu0 0
  %700 = vmatmul.mubr.bf16.gmra.mxu0 %v273
  %v701 = vpop.f32.mrf.mxu0
  %v702 = vadd.f32 %v457, %v701
  %v703 = vpop.f32.mrf.mxu0
  %v704 = vpop.f32.mrf.mxu0
  %v705 = vadd.f32 %v460, %v704
  %v706 = vpop.f32.mrf.mxu0
  %707 = vmatprep.mubr.bf16.mxu0 0
  %708 = vmatmul.mubr.bf16.gmra.mxu0 %v276
  %v709 = vpop.f32.mrf.mxu0
  %v710 = vadd.f32 %v465, %v709
  %v711 = vpop.f32.mrf.mxu0
  %v712 = vpop.f32.mrf.mxu0
  %v713 = vadd.f32 %v468, %v712
  %v714 = vpop.f32.mrf.mxu0
  %715 = vmatprep.mubr.bf16.mxu0 0
  %716 = vmatmul.mubr.bf16.gmra.mxu0 %v279
  %v717 = vpop.f32.mrf.mxu0
  %v718 = vadd.f32 %v473, %v717
  %v719 = vpop.f32.mrf.mxu0
  %v720 = vpop.f32.mrf.mxu0
  %v721 = vadd.f32 %v476, %v720
  %v722 = vpop.f32.mrf.mxu0
  %723 = vmatprep.mubr.bf16.mxu0 0
  %724 = vmatmul.mubr.bf16.gmra.mxu0 %v282
  %v725 = vpop.f32.mrf.mxu0
  %v726 = vadd.f32 %v481, %v725
  %v727 = vpop.f32.mrf.mxu0
  %v728 = vpop.f32.mrf.mxu0
  %v729 = vadd.f32 %v484, %v728
  %v730 = vpop.f32.mrf.mxu0
  %731 = vmatprep.mubr.bf16.mxu0 0
  %732 = vmatmul.mubr.bf16.gmra.mxu0 %v285
  %v733 = vpop.f32.mrf.mxu0
  %v734 = vadd.f32 %v489, %v733
  %v735 = vpop.f32.mrf.mxu0
  %v736 = vpop.f32.mrf.mxu0
  %v737 = vadd.f32 %v492, %v736
  %v738 = vpop.f32.mrf.mxu0
  %739 = vdwg.mxu0
  %v740 = vld [vmem:[%s0 + $0x10] sm:$0xf]
  %v741 = vld [vmem:[%s0 + $0x14] sm:$0xf]
  %v742 = vld [vmem:[%s0 + $0x18] sm:$0xf]
  %v743 = vld [vmem:[%s0 + $0x1c] sm:$0xf]
  %v744 = vld [vmem:[%s0 + $0x20] sm:$0xf]
  %v745 = vld [vmem:[%s0 + $0x24] sm:$0xf]
  %v746 = vld [vmem:[%s0 + $0x28] sm:$0xf]
  %v747 = vld [vmem:[%s0 + $0x2c] sm:$0xf]
  %v748 = vld [vmem:[%s0 + $0x30] sm:$0xf]
  %v749 = vld [vmem:[%s0 + $0x34] sm:$0xf]
  %v750 = vld [vmem:[%s0 + $0x38] sm:$0xf]
  %v751 = vld [vmem:[%s0 + $0x3c] sm:$0xf]
  %v752 = vld [vmem:[%s0 + $0x40] sm:$0xf]
  %v753 = vld [vmem:[%s0 + $0x44] sm:$0xf]
  %v754 = vld [vmem:[%s0 + $0x48] sm:$0xf]
  %v755 = vld [vmem:[%s0 + $0x4c] sm:$0xf]
  %v756 = vld [vmem:[%s0 + $0x50] sm:$0xf]
  %v757 = vld [vmem:[%s0 + $0x54] sm:$0xf]
  %v758 = vld [vmem:[%s0 + $0x58] sm:$0xf]
  %v759 = vld [vmem:[%s0 + $0x5c] sm:$0xf]
  %v760 = vld [vmem:[%s0 + $0x60] sm:$0xf]
  %v761 = vld [vmem:[%s0 + $0x64] sm:$0xf]
  %v762 = vld [vmem:[%s0 + $0x68] sm:$0xf]
  %v763 = vld [vmem:[%s0 + $0x6c] sm:$0xf]
  %v764 = vld [vmem:[%s0 + $0x70] sm:$0xf]
  %v765 = vld [vmem:[%s0 + $0x74] sm:$0xf]
  %v766 = vld [vmem:[%s0 + $0x78] sm:$0xf]
  %v767 = vld [vmem:[%s0 + $0x7c] sm:$0xf]
  %v768 = vld [vmem:[%s0 + $0x80] sm:$0xf]
  %v769 = vld [vmem:[%s0 + $0x84] sm:$0xf]
  %v770 = vld [vmem:[%s0 + $0x88] sm:$0xf]
  %v771 = vld [vmem:[%s0 + $0x8c] sm:$0xf]
  %v772 = vld [vmem:[%s0 + $0x90] sm:$0xf]
  %v773 = vld [vmem:[%s0 + $0x94] sm:$0xf]
  %v774 = vld [vmem:[%s0 + $0x98] sm:$0xf]
  %v775 = vld [vmem:[%s0 + $0x9c] sm:$0xf]
  %v776 = vld [vmem:[%s0 + $0xa0] sm:$0xf]
  %v777 = vld [vmem:[%s0 + $0xa4] sm:$0xf]
  %v778 = vld [vmem:[%s0 + $0xa8] sm:$0xf]
  %v779 = vld [vmem:[%s0 + $0xac] sm:$0xf]
  %v780 = vld [vmem:[%s0 + $0xb0] sm:$0xf]
  %v781 = vld [vmem:[%s0 + $0xb4] sm:$0xf]
  %s782 = scalar_lea.vmem %s1, 88
  %v783 = vld [vmem:[%s782] sm:$0xf]
  %v784 = vld [vmem:[%s782 + $0x4] sm:$0xf]
  %v785 = vld [vmem:[%s782 + $0x8] sm:$0xf]
  %v786 = vld [vmem:[%s782 + $0xc] sm:$0xf]
  %v787 = vld [vmem:[%s782 + $0x10] sm:$0xf]
  %v788 = vld [vmem:[%s782 + $0x14] sm:$0xf]
  %v789 = vld [vmem:[%s782 + $0x18] sm:$0xf]
  %v790 = vld [vmem:[%s782 + $0x1c] sm:$0xf]
  %v791 = vld [vmem:[%s782 + $0x20] sm:$0xf]
  %v792 = vld [vmem:[%s782 + $0x24] sm:$0xf]
  %v793 = vld [vmem:[%s782 + $0x28] sm:$0x3]
  %v836 = vunpack.c.l.b16 %v740
  %v837 = vunpack.c.l.b16 %v741
  %v838 = vunpack.c.l.b16 %v742
  %v839 = vunpack.c.l.b16 %v743
  %v840 = vunpack.c.l.b16 %v744
  %v841 = vunpack.c.l.b16 %v745
  %v842 = vunpack.c.l.b16 %v746
  %v843 = vunpack.c.l.b16 %v747
  %v844 = vunpack.c.l.b16 %v748
  %v845 = vunpack.c.l.b16 %v749
  %v846 = vunpack.c.l.b16 %v750
  %v847 = vunpack.c.l.b16 %v751
  %v848 = vunpack.c.l.b16 %v752
  %v849 = vunpack.c.l.b16 %v753
  %v850 = vunpack.c.l.b16 %v754
  %v851 = vunpack.c.l.b16 %v755
  %v852 = vunpack.c.l.b16 %v756
  %v853 = vunpack.c.l.b16 %v757
  %v854 = vunpack.c.l.b16 %v758
  %v855 = vunpack.c.l.b16 %v759
  %v856 = vunpack.c.l.b16 %v760
  %v857 = vunpack.c.l.b16 %v761
  %v858 = vunpack.c.l.b16 %v762
  %v859 = vunpack.c.l.b16 %v763
  %v860 = vunpack.c.l.b16 %v764
  %v861 = vunpack.c.l.b16 %v765
  %v862 = vunpack.c.l.b16 %v766
  %v863 = vunpack.c.l.b16 %v767
  %v864 = vunpack.c.l.b16 %v768
  %v865 = vunpack.c.l.b16 %v769
  %v866 = vunpack.c.l.b16 %v770
  %v867 = vunpack.c.l.b16 %v771
  %v868 = vunpack.c.l.b16 %v772
  %v869 = vunpack.c.l.b16 %v773
  %v870 = vunpack.c.l.b16 %v774
  %v871 = vunpack.c.l.b16 %v775
  %v872 = vunpack.c.l.b16 %v776
  %v873 = vunpack.c.l.b16 %v777
  %v874 = vunpack.c.l.b16 %v778
  %v875 = vunpack.c.l.b16 %v779
  %v876 = vunpack.c.l.b16 %v780
  %v877 = vunpack.c.l.b16 %v781
  %v878 = vpack.c.b16 %v837, %v836
  %v879 = vpack.c.b16 %v839, %v838
  %v880 = vpack.c.b16 %v841, %v840
  %v881 = vpack.c.b16 %v843, %v842
  %v882 = vpack.c.b16 %v845, %v844
  %v883 = vpack.c.b16 %v847, %v846
  %v884 = vpack.c.b16 %v849, %v848
  %v885 = vpack.c.b16 %v851, %v850
  %v886 = vpack.c.b16 %v853, %v852
  %v887 = vpack.c.b16 %v855, %v854
  %v888 = vpack.c.b16 %v857, %v856
  %v889 = vpack.c.b16 %v859, %v858
  %v890 = vpack.c.b16 %v861, %v860
  %v891 = vpack.c.b16 %v863, %v862
  %v892 = vpack.c.b16 %v865, %v864
  %v893 = vpack.c.b16 %v867, %v866
  %v894 = vpack.c.b16 %v869, %v868
  %v895 = vpack.c.b16 %v871, %v870
  %v896 = vpack.c.b16 %v873, %v872
  %v897 = vpack.c.b16 %v875, %v874
  %v898 = vpack.c.b16 %v877, %v876
  %v910 = vunpack.c.l.b16 %v783
  %v911 = vunpack.c.l.b16 %v784
  %v912 = vunpack.c.l.b16 %v785
  %v913 = vunpack.c.l.b16 %v786
  %v914 = vunpack.c.l.b16 %v787
  %v915 = vunpack.c.l.b16 %v788
  %v916 = vunpack.c.l.b16 %v789
  %v917 = vunpack.c.l.b16 %v790
  %v918 = vunpack.c.l.b16 %v791
  %v919 = vunpack.c.l.b16 %v792
  %v920 = vunpack.c.l.b16 %v793
  %v921 = vpack.c.b16 %v911, %v910
  %v922 = vpack.c.b16 %v913, %v912
  %v923 = vpack.c.b16 %v915, %v914
  %v924 = vpack.c.b16 %v917, %v916
  %v925 = vpack.c.b16 %v919, %v918
  %v926 = vpack.c.b16 %v920, %v920
  %v933 = vsel %vm226, %v878, 0
  %v936 = vsel %vm226, %v879, 0
  %v939 = vsel %vm226, %v880, 0
  %v942 = vsel %vm226, %v881, 0
  %v945 = vsel %vm226, %v882, 0
  %v948 = vsel %vm226, %v883, 0
  %v951 = vsel %vm226, %v884, 0
  %v954 = vsel %vm226, %v885, 0
  %v957 = vsel %vm226, %v886, 0
  %v960 = vsel %vm226, %v887, 0
  %v963 = vsel %vm226, %v888, 0
  %v966 = vsel %vm226, %v889, 0
  %v969 = vsel %vm226, %v890, 0
  %v972 = vsel %vm226, %v891, 0
  %v975 = vsel %vm226, %v892, 0
  %v978 = vsel %vm226, %v893, 0
  %v981 = vsel %vm226, %v894, 0
  %v984 = vsel %vm226, %v895, 0
  %v987 = vsel %vm226, %v896, 0
  %v990 = vsel %vm226, %v897, 0
  %v993 = vsel %vm226, %v898, 0
  %v996 = vsel %vm290, %v926, 0
  %998 = vmatprep.subr.bf16.mxu0 0
  %999 = vmatpush1.bf16.msra.mxu0 0
  %1000 = vmatprep.subr.bf16.mxu0 0
  %1001 = vmatpush1.bf16.msra.mxu0 0
  %1002 = vmatprep.subr.bf16.mxu0 0
  %1003 = vmatpush1.bf16.msra.mxu0 %v996
  %1004 = vmatprep.subr.bf16.mxu0 0
  %1005 = vmatpush1.bf16.msra.mxu0 %v925
  %1006 = vmatprep.subr.bf16.mxu0 0
  %1007 = vmatpush1.bf16.msra.mxu0 %v924
  %1008 = vmatprep.subr.bf16.mxu0 0
  %1009 = vmatpush1.bf16.msra.mxu0 %v923
  %1010 = vmatprep.subr.bf16.mxu0 0
  %1011 = vmatpush1.bf16.msra.mxu0 %v922
  %1012 = vmatprep.subr.bf16.mxu0 0
  %1013 = vmatpush1.bf16.msra.mxu0 %v921
  %1014 = vmatprep.subr.bf16.mxu0 0
  %1015 = vmatpush2.bf16.msra.mxu0 0
  %1016 = vmatprep.subr.bf16.mxu0 0
  %1017 = vmatpush2.bf16.msra.mxu0 0
  %1018 = vmatprep.subr.bf16.mxu0 0
  %1019 = vmatpush2.bf16.msra.mxu0 0
  %1020 = vmatprep.subr.bf16.mxu0 0
  %1021 = vmatpush2.bf16.msra.mxu0 0
  %1022 = vmatprep.subr.bf16.mxu0 0
  %1023 = vmatpush2.bf16.msra.mxu0 0
  %1024 = vmatprep.subr.bf16.mxu0 0
  %1025 = vmatpush2.bf16.msra.mxu0 0
  %1026 = vmatprep.subr.bf16.mxu0 0
  %1027 = vmatpush2.bf16.msra.mxu0 0
  %1028 = vmatprep.subr.bf16.mxu0 0
  %1029 = vmatpush2.bf16.msra.mxu0 0
  %1030 = vmatprep.mubr.bf16.mxu0 0
  %1031 = vmatmul.mubr.bf16.gmra.mxu0 %v933
  %v1032 = vpop.f32.mrf.mxu0
  %v1033 = vadd.f32 0.0, %v1032
  %v1034 = vpop.f32.mrf.mxu0
  %v1035 = vpop.f32.mrf.mxu0
  %v1036 = vadd.f32 0.0, %v1035
  %v1037 = vpop.f32.mrf.mxu0
  %1038 = vmatprep.mubr.bf16.mxu0 0
  %1039 = vmatmul.mubr.bf16.gmra.mxu0 %v936
  %v1040 = vpop.f32.mrf.mxu0
  %v1041 = vadd.f32 0.0, %v1040
  %v1042 = vpop.f32.mrf.mxu0
  %v1043 = vpop.f32.mrf.mxu0
  %v1044 = vadd.f32 0.0, %v1043
  %v1045 = vpop.f32.mrf.mxu0
  %1046 = vmatprep.mubr.bf16.mxu0 0
  %1047 = vmatmul.mubr.bf16.gmra.mxu0 %v939
  %v1048 = vpop.f32.mrf.mxu0
  %v1049 = vadd.f32 0.0, %v1048
  %v1050 = vpop.f32.mrf.mxu0
  %v1051 = vpop.f32.mrf.mxu0
  %v1052 = vadd.f32 0.0, %v1051
  %v1053 = vpop.f32.mrf.mxu0
  %1054 = vmatprep.mubr.bf16.mxu0 0
  %1055 = vmatmul.mubr.bf16.gmra.mxu0 %v942
  %v1056 = vpop.f32.mrf.mxu0
  %v1057 = vadd.f32 0.0, %v1056
  %v1058 = vpop.f32.mrf.mxu0
  %v1059 = vpop.f32.mrf.mxu0
  %v1060 = vadd.f32 0.0, %v1059
  %v1061 = vpop.f32.mrf.mxu0
  %1062 = vmatprep.mubr.bf16.mxu0 0
  %1063 = vmatmul.mubr.bf16.gmra.mxu0 %v945
  %v1064 = vpop.f32.mrf.mxu0
  %v1065 = vadd.f32 0.0, %v1064
  %v1066 = vpop.f32.mrf.mxu0
  %v1067 = vpop.f32.mrf.mxu0
  %v1068 = vadd.f32 0.0, %v1067
  %v1069 = vpop.f32.mrf.mxu0
  %1070 = vmatprep.mubr.bf16.mxu0 0
  %1071 = vmatmul.mubr.bf16.gmra.mxu0 %v948
  %v1072 = vpop.f32.mrf.mxu0
  %v1073 = vadd.f32 0.0, %v1072
  %v1074 = vpop.f32.mrf.mxu0
  %v1075 = vpop.f32.mrf.mxu0
  %v1076 = vadd.f32 0.0, %v1075
  %v1077 = vpop.f32.mrf.mxu0
  %1078 = vmatprep.mubr.bf16.mxu0 0
  %1079 = vmatmul.mubr.bf16.gmra.mxu0 %v951
  %v1080 = vpop.f32.mrf.mxu0
  %v1081 = vadd.f32 0.0, %v1080
  %v1082 = vpop.f32.mrf.mxu0
  %v1083 = vpop.f32.mrf.mxu0
  %v1084 = vadd.f32 0.0, %v1083
  %v1085 = vpop.f32.mrf.mxu0
  %1086 = vmatprep.mubr.bf16.mxu0 0
  %1087 = vmatmul.mubr.bf16.gmra.mxu0 %v954
  %v1088 = vpop.f32.mrf.mxu0
  %v1089 = vadd.f32 0.0, %v1088
  %v1090 = vpop.f32.mrf.mxu0
  %v1091 = vpop.f32.mrf.mxu0
  %v1092 = vadd.f32 0.0, %v1091
  %v1093 = vpop.f32.mrf.mxu0
  %1094 = vmatprep.mubr.bf16.mxu0 0
  %1095 = vmatmul.mubr.bf16.gmra.mxu0 %v957
  %v1096 = vpop.f32.mrf.mxu0
  %v1097 = vadd.f32 0.0, %v1096
  %v1098 = vpop.f32.mrf.mxu0
  %v1099 = vpop.f32.mrf.mxu0
  %v1100 = vadd.f32 0.0, %v1099
  %v1101 = vpop.f32.mrf.mxu0
  %1102 = vmatprep.mubr.bf16.mxu0 0
  %1103 = vmatmul.mubr.bf16.gmra.mxu0 %v960
  %v1104 = vpop.f32.mrf.mxu0
  %v1105 = vadd.f32 0.0, %v1104
  %v1106 = vpop.f32.mrf.mxu0
  %v1107 = vpop.f32.mrf.mxu0
  %v1108 = vadd.f32 0.0, %v1107
  %v1109 = vpop.f32.mrf.mxu0
  %1110 = vmatprep.mubr.bf16.mxu0 0
  %1111 = vmatmul.mubr.bf16.gmra.mxu0 %v963
  %v1112 = vpop.f32.mrf.mxu0
  %v1113 = vadd.f32 0.0, %v1112
  %v1114 = vpop.f32.mrf.mxu0
  %v1115 = vpop.f32.mrf.mxu0
  %v1116 = vadd.f32 0.0, %v1115
  %v1117 = vpop.f32.mrf.mxu0
  %1118 = vmatprep.mubr.bf16.mxu0 0
  %1119 = vmatmul.mubr.bf16.gmra.mxu0 %v966
  %v1120 = vpop.f32.mrf.mxu0
  %v1121 = vadd.f32 0.0, %v1120
  %v1122 = vpop.f32.mrf.mxu0
  %v1123 = vpop.f32.mrf.mxu0
  %v1124 = vadd.f32 0.0, %v1123
  %v1125 = vpop.f32.mrf.mxu0
  %1126 = vmatprep.mubr.bf16.mxu0 0
  %1127 = vmatmul.mubr.bf16.gmra.mxu0 %v969
  %v1128 = vpop.f32.mrf.mxu0
  %v1129 = vadd.f32 0.0, %v1128
  %v1130 = vpop.f32.mrf.mxu0
  %v1131 = vpop.f32.mrf.mxu0
  %v1132 = vadd.f32 0.0, %v1131
  %v1133 = vpop.f32.mrf.mxu0
  %1134 = vmatprep.mubr.bf16.mxu0 0
  %1135 = vmatmul.mubr.bf16.gmra.mxu0 %v972
  %v1136 = vpop.f32.mrf.mxu0
  %v1137 = vadd.f32 0.0, %v1136
  %v1138 = vpop.f32.mrf.mxu0
  %v1139 = vpop.f32.mrf.mxu0
  %v1140 = vadd.f32 0.0, %v1139
  %v1141 = vpop.f32.mrf.mxu0
  %1142 = vmatprep.mubr.bf16.mxu0 0
  %1143 = vmatmul.mubr.bf16.gmra.mxu0 %v975
  %v1144 = vpop.f32.mrf.mxu0
  %v1145 = vadd.f32 0.0, %v1144
  %v1146 = vpop.f32.mrf.mxu0
  %v1147 = vpop.f32.mrf.mxu0
  %v1148 = vadd.f32 0.0, %v1147
  %v1149 = vpop.f32.mrf.mxu0
  %1150 = vmatprep.mubr.bf16.mxu0 0
  %1151 = vmatmul.mubr.bf16.gmra.mxu0 %v978
  %v1152 = vpop.f32.mrf.mxu0
  %v1153 = vadd.f32 0.0, %v1152
  %v1154 = vpop.f32.mrf.mxu0
  %v1155 = vpop.f32.mrf.mxu0
  %v1156 = vadd.f32 0.0, %v1155
  %v1157 = vpop.f32.mrf.mxu0
  %1158 = vmatprep.mubr.bf16.mxu0 0
  %1159 = vmatmul.mubr.bf16.gmra.mxu0 %v981
  %v1160 = vpop.f32.mrf.mxu0
  %v1161 = vadd.f32 0.0, %v1160
  %v1162 = vpop.f32.mrf.mxu0
  %v1163 = vpop.f32.mrf.mxu0
  %v1164 = vadd.f32 0.0, %v1163
  %v1165 = vpop.f32.mrf.mxu0
  %1166 = vmatprep.mubr.bf16.mxu0 0
  %1167 = vmatmul.mubr.bf16.gmra.mxu0 %v984
  %v1168 = vpop.f32.mrf.mxu0
  %v1169 = vadd.f32 0.0, %v1168
  %v1170 = vpop.f32.mrf.mxu0
  %v1171 = vpop.f32.mrf.mxu0
  %v1172 = vadd.f32 0.0, %v1171
  %v1173 = vpop.f32.mrf.mxu0
  %1174 = vmatprep.mubr.bf16.mxu0 0
  %1175 = vmatmul.mubr.bf16.gmra.mxu0 %v987
  %v1176 = vpop.f32.mrf.mxu0
  %v1177 = vadd.f32 0.0, %v1176
  %v1178 = vpop.f32.mrf.mxu0
  %v1179 = vpop.f32.mrf.mxu0
  %v1180 = vadd.f32 0.0, %v1179
  %v1181 = vpop.f32.mrf.mxu0
  %1182 = vmatprep.mubr.bf16.mxu0 0
  %1183 = vmatmul.mubr.bf16.gmra.mxu0 %v990
  %v1184 = vpop.f32.mrf.mxu0
  %v1185 = vadd.f32 0.0, %v1184
  %v1186 = vpop.f32.mrf.mxu0
  %v1187 = vpop.f32.mrf.mxu0
  %v1188 = vadd.f32 0.0, %v1187
  %v1189 = vpop.f32.mrf.mxu0
  %1190 = vmatprep.mubr.bf16.mxu0 0
  %1191 = vmatmul.mubr.bf16.gmra.mxu0 %v993
  %v1192 = vpop.f32.mrf.mxu0
  %v1193 = vadd.f32 0.0, %v1192
  %v1194 = vpop.f32.mrf.mxu0
  %v1195 = vpop.f32.mrf.mxu0
  %v1196 = vadd.f32 0.0, %v1195
  %v1197 = vpop.f32.mrf.mxu0
  %1198 = vdwg.mxu0
  %v1199 = vadd.f32 %v574, %v1033
  %v1200 = vadd.f32 %v577, %v1036
  %v1201 = vadd.f32 %v582, %v1041
  %v1202 = vadd.f32 %v585, %v1044
  %v1203 = vadd.f32 %v590, %v1049
  %v1204 = vadd.f32 %v593, %v1052
  %v1205 = vadd.f32 %v598, %v1057
  %v1206 = vadd.f32 %v601, %v1060
  %v1207 = vadd.f32 %v606, %v1065
  %v1208 = vadd.f32 %v609, %v1068
  %v1209 = vadd.f32 %v614, %v1073
  %v1210 = vadd.f32 %v617, %v1076
  %v1211 = vadd.f32 %v622, %v1081
  %v1212 = vadd.f32 %v625, %v1084
  %v1213 = vadd.f32 %v630, %v1089
  %v1214 = vadd.f32 %v633, %v1092
  %v1215 = vadd.f32 %v638, %v1097
  %v1216 = vadd.f32 %v641, %v1100
  %v1217 = vadd.f32 %v646, %v1105
  %v1218 = vadd.f32 %v649, %v1108
  %v1219 = vadd.f32 %v654, %v1113
  %v1220 = vadd.f32 %v657, %v1116
  %v1221 = vadd.f32 %v662, %v1121
  %v1222 = vadd.f32 %v665, %v1124
  %v1223 = vadd.f32 %v670, %v1129
  %v1224 = vadd.f32 %v673, %v1132
  %v1225 = vadd.f32 %v678, %v1137
  %v1226 = vadd.f32 %v681, %v1140
  %v1227 = vadd.f32 %v686, %v1145
  %v1228 = vadd.f32 %v689, %v1148
  %v1229 = vadd.f32 %v694, %v1153
  %v1230 = vadd.f32 %v697, %v1156
  %v1231 = vadd.f32 %v702, %v1161
  %v1232 = vadd.f32 %v705, %v1164
  %v1233 = vadd.f32 %v710, %v1169
  %v1234 = vadd.f32 %v713, %v1172
  %v1235 = vadd.f32 %v718, %v1177
  %v1236 = vadd.f32 %v721, %v1180
  %v1237 = vadd.f32 %v726, %v1185
  %v1238 = vadd.f32 %v729, %v1188
  %v1239 = vadd.f32 %v734, %v1193
  %v1240 = vadd.f32 %v737, %v1196
  %v1241 = vld [vmem:[%s0 + $0x18] sm:$0xf]
  %v1242 = vld [vmem:[%s0 + $0x1c] sm:$0xf]
  %v1243 = vld [vmem:[%s0 + $0x20] sm:$0xf]
  %v1244 = vld [vmem:[%s0 + $0x24] sm:$0xf]
  %v1245 = vld [vmem:[%s0 + $0x28] sm:$0xf]
  %v1246 = vld [vmem:[%s0 + $0x2c] sm:$0xf]
  %v1247 = vld [vmem:[%s0 + $0x30] sm:$0xf]
  %v1248 = vld [vmem:[%s0 + $0x34] sm:$0xf]
  %v1249 = vld [vmem:[%s0 + $0x38] sm:$0xf]
  %v1250 = vld [vmem:[%s0 + $0x3c] sm:$0xf]
  %v1251 = vld [vmem:[%s0 + $0x40] sm:$0xf]
  %v1252 = vld [vmem:[%s0 + $0x44] sm:$0xf]
  %v1253 = vld [vmem:[%s0 + $0x48] sm:$0xf]
  %v1254 = vld [vmem:[%s0 + $0x4c] sm:$0xf]
  %v1255 = vld [vmem:[%s0 + $0x50] sm:$0xf]
  %v1256 = vld [vmem:[%s0 + $0x54] sm:$0xf]
  %v1257 = vld [vmem:[%s0 + $0x58] sm:$0xf]
  %v1258 = vld [vmem:[%s0 + $0x5c] sm:$0xf]
  %v1259 = vld [vmem:[%s0 + $0x60] sm:$0xf]
  %v1260 = vld [vmem:[%s0 + $0x64] sm:$0xf]
  %v1261 = vld [vmem:[%s0 + $0x68] sm:$0xf]
  %v1262 = vld [vmem:[%s0 + $0x6c] sm:$0xf]
  %v1263 = vld [vmem:[%s0 + $0x70] sm:$0xf]
  %v1264 = vld [vmem:[%s0 + $0x74] sm:$0xf]
  %v1265 = vld [vmem:[%s0 + $0x78] sm:$0xf]
  %v1266 = vld [vmem:[%s0 + $0x7c] sm:$0xf]
  %v1267 = vld [vmem:[%s0 + $0x80] sm:$0xf]
  %v1268 = vld [vmem:[%s0 + $0x84] sm:$0xf]
  %v1269 = vld [vmem:[%s0 + $0x88] sm:$0xf]
  %v1270 = vld [vmem:[%s0 + $0x8c] sm:$0xf]
  %v1271 = vld [vmem:[%s0 + $0x90] sm:$0xf]
  %v1272 = vld [vmem:[%s0 + $0x94] sm:$0xf]
  %v1273 = vld [vmem:[%s0 + $0x98] sm:$0xf]
  %v1274 = vld [vmem:[%s0 + $0x9c] sm:$0xf]
  %v1275 = vld [vmem:[%s0 + $0xa0] sm:$0xf]
  %v1276 = vld [vmem:[%s0 + $0xa4] sm:$0xf]
  %v1277 = vld [vmem:[%s0 + $0xa8] sm:$0xf]
  %v1278 = vld [vmem:[%s0 + $0xac] sm:$0xf]
  %v1279 = vld [vmem:[%s0 + $0xb0] sm:$0xf]
  %v1280 = vld [vmem:[%s0 + $0xb4] sm:$0xf]
  %v1281 = vld [vmem:[%s0 + $0xb8] sm:$0xf]
  %v1282 = vld [vmem:[%s0 + $0xbc] sm:$0xf]
  %s1283 = scalar_lea.vmem %s1, 132
  %v1284 = vld [vmem:[%s1283] sm:$0xf]
  %v1285 = vld [vmem:[%s1283 + $0x4] sm:$0xf]
  %v1286 = vld [vmem:[%s1283 + $0x8] sm:$0xf]
  %v1287 = vld [vmem:[%s1283 + $0xc] sm:$0xf]
  %v1288 = vld [vmem:[%s1283 + $0x10] sm:$0xf]
  %v1289 = vld [vmem:[%s1283 + $0x14] sm:$0xf]
  %v1290 = vld [vmem:[%s1283 + $0x18] sm:$0xf]
  %v1291 = vld [vmem:[%s1283 + $0x1c] sm:$0xf]
  %v1292 = vld [vmem:[%s1283 + $0x20] sm:$0xf]
  %v1293 = vld [vmem:[%s1283 + $0x24] sm:$0xf]
  %v1294 = vld [vmem:[%s1283 + $0x28] sm:$0x3]
  %v1337 = vunpack.c.l.b16 %v1241
  %v1338 = vunpack.c.l.b16 %v1242
  %v1339 = vunpack.c.l.b16 %v1243
  %v1340 = vunpack.c.l.b16 %v1244
  %v1341 = vunpack.c.l.b16 %v1245
  %v1342 = vunpack.c.l.b16 %v1246
  %v1343 = vunpack.c.l.b16 %v1247
  %v1344 = vunpack.c.l.b16 %v1248
  %v1345 = vunpack.c.l.b16 %v1249
  %v1346 = vunpack.c.l.b16 %v1250
  %v1347 = vunpack.c.l.b16 %v1251
  %v1348 = vunpack.c.l.b16 %v1252
  %v1349 = vunpack.c.l.b16 %v1253
  %v1350 = vunpack.c.l.b16 %v1254
  %v1351 = vunpack.c.l.b16 %v1255
  %v1352 = vunpack.c.l.b16 %v1256
  %v1353 = vunpack.c.l.b16 %v1257
  %v1354 = vunpack.c.l.b16 %v1258
  %v1355 = vunpack.c.l.b16 %v1259
  %v1356 = vunpack.c.l.b16 %v1260
  %v1357 = vunpack.c.l.b16 %v1261
  %v1358 = vunpack.c.l.b16 %v1262
  %v1359 = vunpack.c.l.b16 %v1263
  %v1360 = vunpack.c.l.b16 %v1264
  %v1361 = vunpack.c.l.b16 %v1265
  %v1362 = vunpack.c.l.b16 %v1266
  %v1363 = vunpack.c.l.b16 %v1267
  %v1364 = vunpack.c.l.b16 %v1268
  %v1365 = vunpack.c.l.b16 %v1269
  %v1366 = vunpack.c.l.b16 %v1270
  %v1367 = vunpack.c.l.b16 %v1271
  %v1368 = vunpack.c.l.b16 %v1272
  %v1369 = vunpack.c.l.b16 %v1273
  %v1370 = vunpack.c.l.b16 %v1274
  %v1371 = vunpack.c.l.b16 %v1275
  %v1372 = vunpack.c.l.b16 %v1276
  %v1373 = vunpack.c.l.b16 %v1277
  %v1374 = vunpack.c.l.b16 %v1278
  %v1375 = vunpack.c.l.b16 %v1279
  %v1376 = vunpack.c.l.b16 %v1280
  %v1377 = vunpack.c.l.b16 %v1281
  %v1378 = vunpack.c.l.b16 %v1282
  %v1379 = vpack.c.b16 %v1338, %v1337
  %v1380 = vpack.c.b16 %v1340, %v1339
  %v1381 = vpack.c.b16 %v1342, %v1341
  %v1382 = vpack.c.b16 %v1344, %v1343
  %v1383 = vpack.c.b16 %v1346, %v1345
  %v1384 = vpack.c.b16 %v1348, %v1347
  %v1385 = vpack.c.b16 %v1350, %v1349
  %v1386 = vpack.c.b16 %v1352, %v1351
  %v1387 = vpack.c.b16 %v1354, %v1353
  %v1388 = vpack.c.b16 %v1356, %v1355
  %v1389 = vpack.c.b16 %v1358, %v1357
  %v1390 = vpack.c.b16 %v1360, %v1359
  %v1391 = vpack.c.b16 %v1362, %v1361
  %v1392 = vpack.c.b16 %v1364, %v1363
  %v1393 = vpack.c.b16 %v1366, %v1365
  %v1394 = vpack.c.b16 %v1368, %v1367
  %v1395 = vpack.c.b16 %v1370, %v1369
  %v1396 = vpack.c.b16 %v1372, %v1371
  %v1397 = vpack.c.b16 %v1374, %v1373
  %v1398 = vpack.c.b16 %v1376, %v1375
  %v1399 = vpack.c.b16 %v1378, %v1377
  %v1411 = vunpack.c.l.b16 %v1284
  %v1412 = vunpack.c.l.b16 %v1285
  %v1413 = vunpack.c.l.b16 %v1286
  %v1414 = vunpack.c.l.b16 %v1287
  %v1415 = vunpack.c.l.b16 %v1288
  %v1416 = vunpack.c.l.b16 %v1289
  %v1417 = vunpack.c.l.b16 %v1290
  %v1418 = vunpack.c.l.b16 %v1291
  %v1419 = vunpack.c.l.b16 %v1292
  %v1420 = vunpack.c.l.b16 %v1293
  %v1421 = vunpack.c.l.b16 %v1294
  %v1422 = vpack.c.b16 %v1412, %v1411
  %v1423 = vpack.c.b16 %v1414, %v1413
  %v1424 = vpack.c.b16 %v1416, %v1415
  %v1425 = vpack.c.b16 %v1418, %v1417
  %v1426 = vpack.c.b16 %v1420, %v1419
  %v1427 = vpack.c.b16 %v1421, %v1421
  %v1434 = vsel %vm226, %v1379, 0
  %v1437 = vsel %vm226, %v1380, 0
  %v1440 = vsel %vm226, %v1381, 0
  %v1443 = vsel %vm226, %v1382, 0
  %v1446 = vsel %vm226, %v1383, 0
  %v1449 = vsel %vm226, %v1384, 0
  %v1452 = vsel %vm226, %v1385, 0
  %v1455 = vsel %vm226, %v1386, 0
  %v1458 = vsel %vm226, %v1387, 0
  %v1461 = vsel %vm226, %v1388, 0
  %v1464 = vsel %vm226, %v1389, 0
  %v1467 = vsel %vm226, %v1390, 0
  %v1470 = vsel %vm226, %v1391, 0
  %v1473 = vsel %vm226, %v1392, 0
  %v1476 = vsel %vm226, %v1393, 0
  %v1479 = vsel %vm226, %v1394, 0
  %v1482 = vsel %vm226, %v1395, 0
  %v1485 = vsel %vm226, %v1396, 0
  %v1488 = vsel %vm226, %v1397, 0
  %v1491 = vsel %vm226, %v1398, 0
  %v1494 = vsel %vm226, %v1399, 0
  %v1497 = vsel %vm290, %v1427, 0
  %1499 = vmatprep.subr.bf16.mxu0 0
  %1500 = vmatpush1.bf16.msra.mxu0 0
  %1501 = vmatprep.subr.bf16.mxu0 0
  %1502 = vmatpush1.bf16.msra.mxu0 0
  %1503 = vmatprep.subr.bf16.mxu0 0
  %1504 = vmatpush1.bf16.msra.mxu0 %v1497
  %1505 = vmatprep.subr.bf16.mxu0 0
  %1506 = vmatpush1.bf16.msra.mxu0 %v1426
  %1507 = vmatprep.subr.bf16.mxu0 0
  %1508 = vmatpush1.bf16.msra.mxu0 %v1425
  %1509 = vmatprep.subr.bf16.mxu0 0
  %1510 = vmatpush1.bf16.msra.mxu0 %v1424
  %1511 = vmatprep.subr.bf16.mxu0 0
  %1512 = vmatpush1.bf16.msra.mxu0 %v1423
  %1513 = vmatprep.subr.bf16.mxu0 0
  %1514 = vmatpush1.bf16.msra.mxu0 %v1422
  %1515 = vmatprep.subr.bf16.mxu0 0
  %1516 = vmatpush2.bf16.msra.mxu0 0
  %1517 = vmatprep.subr.bf16.mxu0 0
  %1518 = vmatpush2.bf16.msra.mxu0 0
  %1519 = vmatprep.subr.bf16.mxu0 0
  %1520 = vmatpush2.bf16.msra.mxu0 0
  %1521 = vmatprep.subr.bf16.mxu0 0
  %1522 = vmatpush2.bf16.msra.mxu0 0
  %1523 = vmatprep.subr.bf16.mxu0 0
  %1524 = vmatpush2.bf16.msra.mxu0 0
  %1525 = vmatprep.subr.bf16.mxu0 0
  %1526 = vmatpush2.bf16.msra.mxu0 0
  %1527 = vmatprep.subr.bf16.mxu0 0
  %1528 = vmatpush2.bf16.msra.mxu0 0
  %1529 = vmatprep.subr.bf16.mxu0 0
  %1530 = vmatpush2.bf16.msra.mxu0 0
  %1531 = vmatprep.mubr.bf16.mxu0 0
  %1532 = vmatmul.mubr.bf16.gmra.mxu0 %v1434
  %v1533 = vpop.f32.mrf.mxu0
  %v1534 = vadd.f32 0.0, %v1533
  %v1535 = vpop.f32.mrf.mxu0
  %v1536 = vpop.f32.mrf.mxu0
  %v1537 = vadd.f32 0.0, %v1536
  %v1538 = vpop.f32.mrf.mxu0
  %1539 = vmatprep.mubr.bf16.mxu0 0
  %1540 = vmatmul.mubr.bf16.gmra.mxu0 %v1437
  %v1541 = vpop.f32.mrf.mxu0
  %v1542 = vadd.f32 0.0, %v1541
  %v1543 = vpop.f32.mrf.mxu0
  %v1544 = vpop.f32.mrf.mxu0
  %v1545 = vadd.f32 0.0, %v1544
  %v1546 = vpop.f32.mrf.mxu0
  %1547 = vmatprep.mubr.bf16.mxu0 0
  %1548 = vmatmul.mubr.bf16.gmra.mxu0 %v1440
  %v1549 = vpop.f32.mrf.mxu0
  %v1550 = vadd.f32 0.0, %v1549
  %v1551 = vpop.f32.mrf.mxu0
  %v1552 = vpop.f32.mrf.mxu0
  %v1553 = vadd.f32 0.0, %v1552
  %v1554 = vpop.f32.mrf.mxu0
  %1555 = vmatprep.mubr.bf16.mxu0 0
  %1556 = vmatmul.mubr.bf16.gmra.mxu0 %v1443
  %v1557 = vpop.f32.mrf.mxu0
  %v1558 = vadd.f32 0.0, %v1557
  %v1559 = vpop.f32.mrf.mxu0
  %v1560 = vpop.f32.mrf.mxu0
  %v1561 = vadd.f32 0.0, %v1560
  %v1562 = vpop.f32.mrf.mxu0
  %1563 = vmatprep.mubr.bf16.mxu0 0
  %1564 = vmatmul.mubr.bf16.gmra.mxu0 %v1446
  %v1565 = vpop.f32.mrf.mxu0
  %v1566 = vadd.f32 0.0, %v1565
  %v1567 = vpop.f32.mrf.mxu0
  %v1568 = vpop.f32.mrf.mxu0
  %v1569 = vadd.f32 0.0, %v1568
  %v1570 = vpop.f32.mrf.mxu0
  %1571 = vmatprep.mubr.bf16.mxu0 0
  %1572 = vmatmul.mubr.bf16.gmra.mxu0 %v1449
  %v1573 = vpop.f32.mrf.mxu0
  %v1574 = vadd.f32 0.0, %v1573
  %v1575 = vpop.f32.mrf.mxu0
  %v1576 = vpop.f32.mrf.mxu0
  %v1577 = vadd.f32 0.0, %v1576
  %v1578 = vpop.f32.mrf.mxu0
  %1579 = vmatprep.mubr.bf16.mxu0 0
  %1580 = vmatmul.mubr.bf16.gmra.mxu0 %v1452
  %v1581 = vpop.f32.mrf.mxu0
  %v1582 = vadd.f32 0.0, %v1581
  %v1583 = vpop.f32.mrf.mxu0
  %v1584 = vpop.f32.mrf.mxu0
  %v1585 = vadd.f32 0.0, %v1584
  %v1586 = vpop.f32.mrf.mxu0
  %1587 = vmatprep.mubr.bf16.mxu0 0
  %1588 = vmatmul.mubr.bf16.gmra.mxu0 %v1455
  %v1589 = vpop.f32.mrf.mxu0
  %v1590 = vadd.f32 0.0, %v1589
  %v1591 = vpop.f32.mrf.mxu0
  %v1592 = vpop.f32.mrf.mxu0
  %v1593 = vadd.f32 0.0, %v1592
  %v1594 = vpop.f32.mrf.mxu0
  %1595 = vmatprep.mubr.bf16.mxu0 0
  %1596 = vmatmul.mubr.bf16.gmra.mxu0 %v1458
  %v1597 = vpop.f32.mrf.mxu0
  %v1598 = vadd.f32 0.0, %v1597
  %v1599 = vpop.f32.mrf.mxu0
  %v1600 = vpop.f32.mrf.mxu0
  %v1601 = vadd.f32 0.0, %v1600
  %v1602 = vpop.f32.mrf.mxu0
  %1603 = vmatprep.mubr.bf16.mxu0 0
  %1604 = vmatmul.mubr.bf16.gmra.mxu0 %v1461
  %v1605 = vpop.f32.mrf.mxu0
  %v1606 = vadd.f32 0.0, %v1605
  %v1607 = vpop.f32.mrf.mxu0
  %v1608 = vpop.f32.mrf.mxu0
  %v1609 = vadd.f32 0.0, %v1608
  %v1610 = vpop.f32.mrf.mxu0
  %1611 = vmatprep.mubr.bf16.mxu0 0
  %1612 = vmatmul.mubr.bf16.gmra.mxu0 %v1464
  %v1613 = vpop.f32.mrf.mxu0
  %v1614 = vadd.f32 0.0, %v1613
  %v1615 = vpop.f32.mrf.mxu0
  %v1616 = vpop.f32.mrf.mxu0
  %v1617 = vadd.f32 0.0, %v1616
  %v1618 = vpop.f32.mrf.mxu0
  %1619 = vmatprep.mubr.bf16.mxu0 0
  %1620 = vmatmul.mubr.bf16.gmra.mxu0 %v1467
  %v1621 = vpop.f32.mrf.mxu0
  %v1622 = vadd.f32 0.0, %v1621
  %v1623 = vpop.f32.mrf.mxu0
  %v1624 = vpop.f32.mrf.mxu0
  %v1625 = vadd.f32 0.0, %v1624
  %v1626 = vpop.f32.mrf.mxu0
  %1627 = vmatprep.mubr.bf16.mxu0 0
  %1628 = vmatmul.mubr.bf16.gmra.mxu0 %v1470
  %v1629 = vpop.f32.mrf.mxu0
  %v1630 = vadd.f32 0.0, %v1629
  %v1631 = vpop.f32.mrf.mxu0
  %v1632 = vpop.f32.mrf.mxu0
  %v1633 = vadd.f32 0.0, %v1632
  %v1634 = vpop.f32.mrf.mxu0
  %1635 = vmatprep.mubr.bf16.mxu0 0
  %1636 = vmatmul.mubr.bf16.gmra.mxu0 %v1473
  %v1637 = vpop.f32.mrf.mxu0
  %v1638 = vadd.f32 0.0, %v1637
  %v1639 = vpop.f32.mrf.mxu0
  %v1640 = vpop.f32.mrf.mxu0
  %v1641 = vadd.f32 0.0, %v1640
  %v1642 = vpop.f32.mrf.mxu0
  %1643 = vmatprep.mubr.bf16.mxu0 0
  %1644 = vmatmul.mubr.bf16.gmra.mxu0 %v1476
  %v1645 = vpop.f32.mrf.mxu0
  %v1646 = vadd.f32 0.0, %v1645
  %v1647 = vpop.f32.mrf.mxu0
  %v1648 = vpop.f32.mrf.mxu0
  %v1649 = vadd.f32 0.0, %v1648
  %v1650 = vpop.f32.mrf.mxu0
  %1651 = vmatprep.mubr.bf16.mxu0 0
  %1652 = vmatmul.mubr.bf16.gmra.mxu0 %v1479
  %v1653 = vpop.f32.mrf.mxu0
  %v1654 = vadd.f32 0.0, %v1653
  %v1655 = vpop.f32.mrf.mxu0
  %v1656 = vpop.f32.mrf.mxu0
  %v1657 = vadd.f32 0.0, %v1656
  %v1658 = vpop.f32.mrf.mxu0
  %1659 = vmatprep.mubr.bf16.mxu0 0
  %1660 = vmatmul.mubr.bf16.gmra.mxu0 %v1482
  %v1661 = vpop.f32.mrf.mxu0
  %v1662 = vadd.f32 0.0, %v1661
  %v1663 = vpop.f32.mrf.mxu0
  %v1664 = vpop.f32.mrf.mxu0
  %v1665 = vadd.f32 0.0, %v1664
  %v1666 = vpop.f32.mrf.mxu0
  %1667 = vmatprep.mubr.bf16.mxu0 0
  %1668 = vmatmul.mubr.bf16.gmra.mxu0 %v1485
  %v1669 = vpop.f32.mrf.mxu0
  %v1670 = vadd.f32 0.0, %v1669
  %v1671 = vpop.f32.mrf.mxu0
  %v1672 = vpop.f32.mrf.mxu0
  %v1673 = vadd.f32 0.0, %v1672
  %v1674 = vpop.f32.mrf.mxu0
  %1675 = vmatprep.mubr.bf16.mxu0 0
  %1676 = vmatmul.mubr.bf16.gmra.mxu0 %v1488
  %v1677 = vpop.f32.mrf.mxu0
  %v1678 = vadd.f32 0.0, %v1677
  %v1679 = vpop.f32.mrf.mxu0
  %v1680 = vpop.f32.mrf.mxu0
  %v1681 = vadd.f32 0.0, %v1680
  %v1682 = vpop.f32.mrf.mxu0
  %1683 = vmatprep.mubr.bf16.mxu0 0
  %1684 = vmatmul.mubr.bf16.gmra.mxu0 %v1491
  %v1685 = vpop.f32.mrf.mxu0
  %v1686 = vadd.f32 0.0, %v1685
  %v1687 = vpop.f32.mrf.mxu0
  %v1688 = vpop.f32.mrf.mxu0
  %v1689 = vadd.f32 0.0, %v1688
  %v1690 = vpop.f32.mrf.mxu0
  %1691 = vmatprep.mubr.bf16.mxu0 0
  %1692 = vmatmul.mubr.bf16.gmra.mxu0 %v1494
  %v1693 = vpop.f32.mrf.mxu0
  %v1694 = vadd.f32 0.0, %v1693
  %v1695 = vpop.f32.mrf.mxu0
  %v1696 = vpop.f32.mrf.mxu0
  %v1697 = vadd.f32 0.0, %v1696
  %v1698 = vpop.f32.mrf.mxu0
  %1699 = vdwg.mxu0
  %v1700 = vadd.f32 %v1199, %v1534
  %v1701 = vadd.f32 %v1200, %v1537
  %v1702 = vadd.f32 %v1201, %v1542
  %v1703 = vadd.f32 %v1202, %v1545
  %v1704 = vadd.f32 %v1203, %v1550
  %v1705 = vadd.f32 %v1204, %v1553
  %v1706 = vadd.f32 %v1205, %v1558
  %v1707 = vadd.f32 %v1206, %v1561
  %v1708 = vadd.f32 %v1207, %v1566
  %v1709 = vadd.f32 %v1208, %v1569
  %v1710 = vadd.f32 %v1209, %v1574
  %v1711 = vadd.f32 %v1210, %v1577
  %v1712 = vadd.f32 %v1211, %v1582
  %v1713 = vadd.f32 %v1212, %v1585
  %v1714 = vadd.f32 %v1213, %v1590
  %v1715 = vadd.f32 %v1214, %v1593
  %v1716 = vadd.f32 %v1215, %v1598
  %v1717 = vadd.f32 %v1216, %v1601
  %v1718 = vadd.f32 %v1217, %v1606
  %v1719 = vadd.f32 %v1218, %v1609
  %v1720 = vadd.f32 %v1219, %v1614
  %v1721 = vadd.f32 %v1220, %v1617
  %v1722 = vadd.f32 %v1221, %v1622
  %v1723 = vadd.f32 %v1222, %v1625
  %v1724 = vadd.f32 %v1223, %v1630
  %v1725 = vadd.f32 %v1224, %v1633
  %v1726 = vadd.f32 %v1225, %v1638
  %v1727 = vadd.f32 %v1226, %v1641
  %v1728 = vadd.f32 %v1227, %v1646
  %v1729 = vadd.f32 %v1228, %v1649
  %v1730 = vadd.f32 %v1229, %v1654
  %v1731 = vadd.f32 %v1230, %v1657
  %v1732 = vadd.f32 %v1231, %v1662
  %v1733 = vadd.f32 %v1232, %v1665
  %v1734 = vadd.f32 %v1233, %v1670
  %v1735 = vadd.f32 %v1234, %v1673
  %v1736 = vadd.f32 %v1235, %v1678
  %v1737 = vadd.f32 %v1236, %v1681
  %v1738 = vadd.f32 %v1237, %v1686
  %v1739 = vadd.f32 %v1238, %v1689
  %v1740 = vadd.f32 %v1239, %v1694
  %v1741 = vadd.f32 %v1240, %v1697
  %v1742 = vld [vmem:[%s0 + $0x20] sm:$0xf]
  %v1743 = vld [vmem:[%s0 + $0x24] sm:$0xf]
  %v1744 = vld [vmem:[%s0 + $0x28] sm:$0xf]
  %v1745 = vld [vmem:[%s0 + $0x2c] sm:$0xf]
  %v1746 = vld [vmem:[%s0 + $0x30] sm:$0xf]
  %v1747 = vld [vmem:[%s0 + $0x34] sm:$0xf]
  %v1748 = vld [vmem:[%s0 + $0x38] sm:$0xf]
  %v1749 = vld [vmem:[%s0 + $0x3c] sm:$0xf]
  %v1750 = vld [vmem:[%s0 + $0x40] sm:$0xf]
  %v1751 = vld [vmem:[%s0 + $0x44] sm:$0xf]
  %v1752 = vld [vmem:[%s0 + $0x48] sm:$0xf]
  %v1753 = vld [vmem:[%s0 + $0x4c] sm:$0xf]
  %v1754 = vld [vmem:[%s0 + $0x50] sm:$0xf]
  %v1755 = vld [vmem:[%s0 + $0x54] sm:$0xf]
  %v1756 = vld [vmem:[%s0 + $0x58] sm:$0xf]
  %v1757 = vld [vmem:[%s0 + $0x5c] sm:$0xf]
  %v1758 = vld [vmem:[%s0 + $0x60] sm:$0xf]
  %v1759 = vld [vmem:[%s0 + $0x64] sm:$0xf]
  %v1760 = vld [vmem:[%s0 + $0x68] sm:$0xf]
  %v1761 = vld [vmem:[%s0 + $0x6c] sm:$0xf]
  %v1762 = vld [vmem:[%s0 + $0x70] sm:$0xf]
  %v1763 = vld [vmem:[%s0 + $0x74] sm:$0xf]
  %v1764 = vld [vmem:[%s0 + $0x78] sm:$0xf]
  %v1765 = vld [vmem:[%s0 + $0x7c] sm:$0xf]
  %v1766 = vld [vmem:[%s0 + $0x80] sm:$0xf]
  %v1767 = vld [vmem:[%s0 + $0x84] sm:$0xf]
  %v1768 = vld [vmem:[%s0 + $0x88] sm:$0xf]
  %v1769 = vld [vmem:[%s0 + $0x8c] sm:$0xf]
  %v1770 = vld [vmem:[%s0 + $0x90] sm:$0xf]
  %v1771 = vld [vmem:[%s0 + $0x94] sm:$0xf]
  %v1772 = vld [vmem:[%s0 + $0x98] sm:$0xf]
  %v1773 = vld [vmem:[%s0 + $0x9c] sm:$0xf]
  %v1774 = vld [vmem:[%s0 + $0xa0] sm:$0xf]
  %v1775 = vld [vmem:[%s0 + $0xa4] sm:$0xf]
  %v1776 = vld [vmem:[%s0 + $0xa8] sm:$0xf]
  %v1777 = vld [vmem:[%s0 + $0xac] sm:$0xf]
  %v1778 = vld [vmem:[%s0 + $0xb0] sm:$0xf]
  %v1779 = vld [vmem:[%s0 + $0xb4] sm:$0xf]
  %v1780 = vld [vmem:[%s0 + $0xb8] sm:$0xf]
  %v1781 = vld [vmem:[%s0 + $0xbc] sm:$0xf]
  %v1782 = vld [vmem:[%s0 + $0xc0] sm:$0xf]
  %v1783 = vld [vmem:[%s0 + $0xc4] sm:$0xf]
  %s1784 = scalar_lea.vmem %s1, 176
  %v1785 = vld [vmem:[%s1784] sm:$0xf]
  %v1786 = vld [vmem:[%s1784 + $0x4] sm:$0xf]
  %v1787 = vld [vmem:[%s1784 + $0x8] sm:$0xf]
  %v1788 = vld [vmem:[%s1784 + $0xc] sm:$0xf]
  %v1789 = vld [vmem:[%s1784 + $0x10] sm:$0xf]
  %v1790 = vld [vmem:[%s1784 + $0x14] sm:$0xf]
  %v1791 = vld [vmem:[%s1784 + $0x18] sm:$0xf]
  %v1792 = vld [vmem:[%s1784 + $0x1c] sm:$0xf]
  %v1793 = vld [vmem:[%s1784 + $0x20] sm:$0xf]
  %v1794 = vld [vmem:[%s1784 + $0x24] sm:$0xf]
  %v1795 = vld [vmem:[%s1784 + $0x28] sm:$0x3]
  %v1838 = vunpack.c.l.b16 %v1742
  %v1839 = vunpack.c.l.b16 %v1743
  %v1840 = vunpack.c.l.b16 %v1744
  %v1841 = vunpack.c.l.b16 %v1745
  %v1842 = vunpack.c.l.b16 %v1746
  %v1843 = vunpack.c.l.b16 %v1747
  %v1844 = vunpack.c.l.b16 %v1748
  %v1845 = vunpack.c.l.b16 %v1749
  %v1846 = vunpack.c.l.b16 %v1750
  %v1847 = vunpack.c.l.b16 %v1751
  %v1848 = vunpack.c.l.b16 %v1752
  %v1849 = vunpack.c.l.b16 %v1753
  %v1850 = vunpack.c.l.b16 %v1754
  %v1851 = vunpack.c.l.b16 %v1755
  %v1852 = vunpack.c.l.b16 %v1756
  %v1853 = vunpack.c.l.b16 %v1757
  %v1854 = vunpack.c.l.b16 %v1758
  %v1855 = vunpack.c.l.b16 %v1759
  %v1856 = vunpack.c.l.b16 %v1760
  %v1857 = vunpack.c.l.b16 %v1761
  %v1858 = vunpack.c.l.b16 %v1762
  %v1859 = vunpack.c.l.b16 %v1763
  %v1860 = vunpack.c.l.b16 %v1764
  %v1861 = vunpack.c.l.b16 %v1765
  %v1862 = vunpack.c.l.b16 %v1766
  %v1863 = vunpack.c.l.b16 %v1767
  %v1864 = vunpack.c.l.b16 %v1768
  %v1865 = vunpack.c.l.b16 %v1769
  %v1866 = vunpack.c.l.b16 %v1770
  %v1867 = vunpack.c.l.b16 %v1771
  %v1868 = vunpack.c.l.b16 %v1772
  %v1869 = vunpack.c.l.b16 %v1773
  %v1870 = vunpack.c.l.b16 %v1774
  %v1871 = vunpack.c.l.b16 %v1775
  %v1872 = vunpack.c.l.b16 %v1776
  %v1873 = vunpack.c.l.b16 %v1777
  %v1874 = vunpack.c.l.b16 %v1778
  %v1875 = vunpack.c.l.b16 %v1779
  %v1876 = vunpack.c.l.b16 %v1780
  %v1877 = vunpack.c.l.b16 %v1781
  %v1878 = vunpack.c.l.b16 %v1782
  %v1879 = vunpack.c.l.b16 %v1783
  %v1880 = vpack.c.b16 %v1839, %v1838
  %v1881 = vpack.c.b16 %v1841, %v1840
  %v1882 = vpack.c.b16 %v1843, %v1842
  %v1883 = vpack.c.b16 %v1845, %v1844
  %v1884 = vpack.c.b16 %v1847, %v1846
  %v1885 = vpack.c.b16 %v1849, %v1848
  %v1886 = vpack.c.b16 %v1851, %v1850
  %v1887 = vpack.c.b16 %v1853, %v1852
  %v1888 = vpack.c.b16 %v1855, %v1854
  %v1889 = vpack.c.b16 %v1857, %v1856
  %v1890 = vpack.c.b16 %v1859, %v1858
  %v1891 = vpack.c.b16 %v1861, %v1860
  %v1892 = vpack.c.b16 %v1863, %v1862
  %v1893 = vpack.c.b16 %v1865, %v1864
  %v1894 = vpack.c.b16 %v1867, %v1866
  %v1895 = vpack.c.b16 %v1869, %v1868
  %v1896 = vpack.c.b16 %v1871, %v1870
  %v1897 = vpack.c.b16 %v1873, %v1872
  %v1898 = vpack.c.b16 %v1875, %v1874
  %v1899 = vpack.c.b16 %v1877, %v1876
  %v1900 = vpack.c.b16 %v1879, %v1878
  %v1912 = vunpack.c.l.b16 %v1785
  %v1913 = vunpack.c.l.b16 %v1786
  %v1914 = vunpack.c.l.b16 %v1787
  %v1915 = vunpack.c.l.b16 %v1788
  %v1916 = vunpack.c.l.b16 %v1789
  %v1917 = vunpack.c.l.b16 %v1790
  %v1918 = vunpack.c.l.b16 %v1791
  %v1919 = vunpack.c.l.b16 %v1792
  %v1920 = vunpack.c.l.b16 %v1793
  %v1921 = vunpack.c.l.b16 %v1794
  %v1922 = vunpack.c.l.b16 %v1795
  %v1923 = vpack.c.b16 %v1913, %v1912
  %v1924 = vpack.c.b16 %v1915, %v1914
  %v1925 = vpack.c.b16 %v1917, %v1916
  %v1926 = vpack.c.b16 %v1919, %v1918
  %v1927 = vpack.c.b16 %v1921, %v1920
  %v1928 = vpack.c.b16 %v1922, %v1922
  %v1935 = vsel %vm226, %v1880, 0
  %v1938 = vsel %vm226, %v1881, 0
  %v1941 = vsel %vm226, %v1882, 0
  %v1944 = vsel %vm226, %v1883, 0
  %v1947 = vsel %vm226, %v1884, 0
  %v1950 = vsel %vm226, %v1885, 0
  %v1953 = vsel %vm226, %v1886, 0
  %v1956 = vsel %vm226, %v1887, 0
  %v1959 = vsel %vm226, %v1888, 0
  %v1962 = vsel %vm226, %v1889, 0
  %v1965 = vsel %vm226, %v1890, 0
  %v1968 = vsel %vm226, %v1891, 0
  %v1971 = vsel %vm226, %v1892, 0
  %v1974 = vsel %vm226, %v1893, 0
  %v1977 = vsel %vm226, %v1894, 0
  %v1980 = vsel %vm226, %v1895, 0
  %v1983 = vsel %vm226, %v1896, 0
  %v1986 = vsel %vm226, %v1897, 0
  %v1989 = vsel %vm226, %v1898, 0
  %v1992 = vsel %vm226, %v1899, 0
  %v1995 = vsel %vm226, %v1900, 0
  %v1998 = vsel %vm290, %v1928, 0
  %2000 = vmatprep.subr.bf16.mxu0 0
  %2001 = vmatpush1.bf16.msra.mxu0 0
  %2002 = vmatprep.subr.bf16.mxu0 0
  %2003 = vmatpush1.bf16.msra.mxu0 0
  %2004 = vmatprep.subr.bf16.mxu0 0
  %2005 = vmatpush1.bf16.msra.mxu0 %v1998
  %2006 = vmatprep.subr.bf16.mxu0 0
  %2007 = vmatpush1.bf16.msra.mxu0 %v1927
  %2008 = vmatprep.subr.bf16.mxu0 0
  %2009 = vmatpush1.bf16.msra.mxu0 %v1926
  %2010 = vmatprep.subr.bf16.mxu0 0
  %2011 = vmatpush1.bf16.msra.mxu0 %v1925
  %2012 = vmatprep.subr.bf16.mxu0 0
  %2013 = vmatpush1.bf16.msra.mxu0 %v1924
  %2014 = vmatprep.subr.bf16.mxu0 0
  %2015 = vmatpush1.bf16.msra.mxu0 %v1923
  %2016 = vmatprep.subr.bf16.mxu0 0
  %2017 = vmatpush2.bf16.msra.mxu0 0
  %2018 = vmatprep.subr.bf16.mxu0 0
  %2019 = vmatpush2.bf16.msra.mxu0 0
  %2020 = vmatprep.subr.bf16.mxu0 0
  %2021 = vmatpush2.bf16.msra.mxu0 0
  %2022 = vmatprep.subr.bf16.mxu0 0
  %2023 = vmatpush2.bf16.msra.mxu0 0
  %2024 = vmatprep.subr.bf16.mxu0 0
  %2025 = vmatpush2.bf16.msra.mxu0 0
  %2026 = vmatprep.subr.bf16.mxu0 0
  %2027 = vmatpush2.bf16.msra.mxu0 0
  %2028 = vmatprep.subr.bf16.mxu0 0
  %2029 = vmatpush2.bf16.msra.mxu0 0
  %2030 = vmatprep.subr.bf16.mxu0 0
  %2031 = vmatpush2.bf16.msra.mxu0 0
  %2032 = vmatprep.mubr.bf16.mxu0 0
  %2033 = vmatmul.mubr.bf16.gmra.mxu0 %v1935
  %v2034 = vpop.f32.mrf.mxu0
  %v2035 = vadd.f32 0.0, %v2034
  %v2036 = vpop.f32.mrf.mxu0
  %v2037 = vpop.f32.mrf.mxu0
  %v2038 = vadd.f32 0.0, %v2037
  %v2039 = vpop.f32.mrf.mxu0
  %2040 = vmatprep.mubr.bf16.mxu0 0
  %2041 = vmatmul.mubr.bf16.gmra.mxu0 %v1938
  %v2042 = vpop.f32.mrf.mxu0
  %v2043 = vadd.f32 0.0, %v2042
  %v2044 = vpop.f32.mrf.mxu0
  %v2045 = vpop.f32.mrf.mxu0
  %v2046 = vadd.f32 0.0, %v2045
  %v2047 = vpop.f32.mrf.mxu0
  %2048 = vmatprep.mubr.bf16.mxu0 0
  %2049 = vmatmul.mubr.bf16.gmra.mxu0 %v1941
  %v2050 = vpop.f32.mrf.mxu0
  %v2051 = vadd.f32 0.0, %v2050
  %v2052 = vpop.f32.mrf.mxu0
  %v2053 = vpop.f32.mrf.mxu0
  %v2054 = vadd.f32 0.0, %v2053
  %v2055 = vpop.f32.mrf.mxu0
  %2056 = vmatprep.mubr.bf16.mxu0 0
  %2057 = vmatmul.mubr.bf16.gmra.mxu0 %v1944
  %v2058 = vpop.f32.mrf.mxu0
  %v2059 = vadd.f32 0.0, %v2058
  %v2060 = vpop.f32.mrf.mxu0
  %v2061 = vpop.f32.mrf.mxu0
  %v2062 = vadd.f32 0.0, %v2061
  %v2063 = vpop.f32.mrf.mxu0
  %2064 = vmatprep.mubr.bf16.mxu0 0
  %2065 = vmatmul.mubr.bf16.gmra.mxu0 %v1947
  %v2066 = vpop.f32.mrf.mxu0
  %v2067 = vadd.f32 0.0, %v2066
  %v2068 = vpop.f32.mrf.mxu0
  %v2069 = vpop.f32.mrf.mxu0
  %v2070 = vadd.f32 0.0, %v2069
  %v2071 = vpop.f32.mrf.mxu0
  %2072 = vmatprep.mubr.bf16.mxu0 0
  %2073 = vmatmul.mubr.bf16.gmra.mxu0 %v1950
  %v2074 = vpop.f32.mrf.mxu0
  %v2075 = vadd.f32 0.0, %v2074
  %v2076 = vpop.f32.mrf.mxu0
  %v2077 = vpop.f32.mrf.mxu0
  %v2078 = vadd.f32 0.0, %v2077
  %v2079 = vpop.f32.mrf.mxu0
  %2080 = vmatprep.mubr.bf16.mxu0 0
  %2081 = vmatmul.mubr.bf16.gmra.mxu0 %v1953
  %v2082 = vpop.f32.mrf.mxu0
  %v2083 = vadd.f32 0.0, %v2082
  %v2084 = vpop.f32.mrf.mxu0
  %v2085 = vpop.f32.mrf.mxu0
  %v2086 = vadd.f32 0.0, %v2085
  %v2087 = vpop.f32.mrf.mxu0
  %2088 = vmatprep.mubr.bf16.mxu0 0
  %2089 = vmatmul.mubr.bf16.gmra.mxu0 %v1956
  %v2090 = vpop.f32.mrf.mxu0
  %v2091 = vadd.f32 0.0, %v2090
  %v2092 = vpop.f32.mrf.mxu0
  %v2093 = vpop.f32.mrf.mxu0
  %v2094 = vadd.f32 0.0, %v2093
  %v2095 = vpop.f32.mrf.mxu0
  %2096 = vmatprep.mubr.bf16.mxu0 0
  %2097 = vmatmul.mubr.bf16.gmra.mxu0 %v1959
  %v2098 = vpop.f32.mrf.mxu0
  %v2099 = vadd.f32 0.0, %v2098
  %v2100 = vpop.f32.mrf.mxu0
  %v2101 = vpop.f32.mrf.mxu0
  %v2102 = vadd.f32 0.0, %v2101
  %v2103 = vpop.f32.mrf.mxu0
  %2104 = vmatprep.mubr.bf16.mxu0 0
  %2105 = vmatmul.mubr.bf16.gmra.mxu0 %v1962
  %v2106 = vpop.f32.mrf.mxu0
  %v2107 = vadd.f32 0.0, %v2106
  %v2108 = vpop.f32.mrf.mxu0
  %v2109 = vpop.f32.mrf.mxu0
  %v2110 = vadd.f32 0.0, %v2109
  %v2111 = vpop.f32.mrf.mxu0
  %2112 = vmatprep.mubr.bf16.mxu0 0
  %2113 = vmatmul.mubr.bf16.gmra.mxu0 %v1965
  %v2114 = vpop.f32.mrf.mxu0
  %v2115 = vadd.f32 0.0, %v2114
  %v2116 = vpop.f32.mrf.mxu0
  %v2117 = vpop.f32.mrf.mxu0
  %v2118 = vadd.f32 0.0, %v2117
  %v2119 = vpop.f32.mrf.mxu0
  %2120 = vmatprep.mubr.bf16.mxu0 0
  %2121 = vmatmul.mubr.bf16.gmra.mxu0 %v1968
  %v2122 = vpop.f32.mrf.mxu0
  %v2123 = vadd.f32 0.0, %v2122
  %v2124 = vpop.f32.mrf.mxu0
  %v2125 = vpop.f32.mrf.mxu0
  %v2126 = vadd.f32 0.0, %v2125
  %v2127 = vpop.f32.mrf.mxu0
  %2128 = vmatprep.mubr.bf16.mxu0 0
  %2129 = vmatmul.mubr.bf16.gmra.mxu0 %v1971
  %v2130 = vpop.f32.mrf.mxu0
  %v2131 = vadd.f32 0.0, %v2130
  %v2132 = vpop.f32.mrf.mxu0
  %v2133 = vpop.f32.mrf.mxu0
  %v2134 = vadd.f32 0.0, %v2133
  %v2135 = vpop.f32.mrf.mxu0
  %2136 = vmatprep.mubr.bf16.mxu0 0
  %2137 = vmatmul.mubr.bf16.gmra.mxu0 %v1974
  %v2138 = vpop.f32.mrf.mxu0
  %v2139 = vadd.f32 0.0, %v2138
  %v2140 = vpop.f32.mrf.mxu0
  %v2141 = vpop.f32.mrf.mxu0
  %v2142 = vadd.f32 0.0, %v2141
  %v2143 = vpop.f32.mrf.mxu0
  %2144 = vmatprep.mubr.bf16.mxu0 0
  %2145 = vmatmul.mubr.bf16.gmra.mxu0 %v1977
  %v2146 = vpop.f32.mrf.mxu0
  %v2147 = vadd.f32 0.0, %v2146
  %v2148 = vpop.f32.mrf.mxu0
  %v2149 = vpop.f32.mrf.mxu0
  %v2150 = vadd.f32 0.0, %v2149
  %v2151 = vpop.f32.mrf.mxu0
  %2152 = vmatprep.mubr.bf16.mxu0 0
  %2153 = vmatmul.mubr.bf16.gmra.mxu0 %v1980
  %v2154 = vpop.f32.mrf.mxu0
  %v2155 = vadd.f32 0.0, %v2154
  %v2156 = vpop.f32.mrf.mxu0
  %v2157 = vpop.f32.mrf.mxu0
  %v2158 = vadd.f32 0.0, %v2157
  %v2159 = vpop.f32.mrf.mxu0
  %2160 = vmatprep.mubr.bf16.mxu0 0
  %2161 = vmatmul.mubr.bf16.gmra.mxu0 %v1983
  %v2162 = vpop.f32.mrf.mxu0
  %v2163 = vadd.f32 0.0, %v2162
  %v2164 = vpop.f32.mrf.mxu0
  %v2165 = vpop.f32.mrf.mxu0
  %v2166 = vadd.f32 0.0, %v2165
  %v2167 = vpop.f32.mrf.mxu0
  %2168 = vmatprep.mubr.bf16.mxu0 0
  %2169 = vmatmul.mubr.bf16.gmra.mxu0 %v1986
  %v2170 = vpop.f32.mrf.mxu0
  %v2171 = vadd.f32 0.0, %v2170
  %v2172 = vpop.f32.mrf.mxu0
  %v2173 = vpop.f32.mrf.mxu0
  %v2174 = vadd.f32 0.0, %v2173
  %v2175 = vpop.f32.mrf.mxu0
  %2176 = vmatprep.mubr.bf16.mxu0 0
  %2177 = vmatmul.mubr.bf16.gmra.mxu0 %v1989
  %v2178 = vpop.f32.mrf.mxu0
  %v2179 = vadd.f32 0.0, %v2178
  %v2180 = vpop.f32.mrf.mxu0
  %v2181 = vpop.f32.mrf.mxu0
  %v2182 = vadd.f32 0.0, %v2181
  %v2183 = vpop.f32.mrf.mxu0
  %2184 = vmatprep.mubr.bf16.mxu0 0
  %2185 = vmatmul.mubr.bf16.gmra.mxu0 %v1992
  %v2186 = vpop.f32.mrf.mxu0
  %v2187 = vadd.f32 0.0, %v2186
  %v2188 = vpop.f32.mrf.mxu0
  %v2189 = vpop.f32.mrf.mxu0
  %v2190 = vadd.f32 0.0, %v2189
  %v2191 = vpop.f32.mrf.mxu0
  %2192 = vmatprep.mubr.bf16.mxu0 0
  %2193 = vmatmul.mubr.bf16.gmra.mxu0 %v1995
  %v2194 = vpop.f32.mrf.mxu0
  %v2195 = vadd.f32 0.0, %v2194
  %v2196 = vpop.f32.mrf.mxu0
  %v2197 = vpop.f32.mrf.mxu0
  %v2198 = vadd.f32 0.0, %v2197
  %v2199 = vpop.f32.mrf.mxu0
  %2200 = vdwg.mxu0
  %v2201 = vadd.f32 %v1700, %v2035
  %v2202 = vadd.f32 %v1701, %v2038
  %v2203 = vadd.f32 %v1702, %v2043
  %v2204 = vadd.f32 %v1703, %v2046
  %v2205 = vadd.f32 %v1704, %v2051
  %v2206 = vadd.f32 %v1705, %v2054
  %v2207 = vadd.f32 %v1706, %v2059
  %v2208 = vadd.f32 %v1707, %v2062
  %v2209 = vadd.f32 %v1708, %v2067
  %v2210 = vadd.f32 %v1709, %v2070
  %v2211 = vadd.f32 %v1710, %v2075
  %v2212 = vadd.f32 %v1711, %v2078
  %v2213 = vadd.f32 %v1712, %v2083
  %v2214 = vadd.f32 %v1713, %v2086
  %v2215 = vadd.f32 %v1714, %v2091
  %v2216 = vadd.f32 %v1715, %v2094
  %v2217 = vadd.f32 %v1716, %v2099
  %v2218 = vadd.f32 %v1717, %v2102
  %v2219 = vadd.f32 %v1718, %v2107
  %v2220 = vadd.f32 %v1719, %v2110
  %v2221 = vadd.f32 %v1720, %v2115
  %v2222 = vadd.f32 %v1721, %v2118
  %v2223 = vadd.f32 %v1722, %v2123
  %v2224 = vadd.f32 %v1723, %v2126
  %v2225 = vadd.f32 %v1724, %v2131
  %v2226 = vadd.f32 %v1725, %v2134
  %v2227 = vadd.f32 %v1726, %v2139
  %v2228 = vadd.f32 %v1727, %v2142
  %v2229 = vadd.f32 %v1728, %v2147
  %v2230 = vadd.f32 %v1729, %v2150
  %v2231 = vadd.f32 %v1730, %v2155
  %v2232 = vadd.f32 %v1731, %v2158
  %v2233 = vadd.f32 %v1732, %v2163
  %v2234 = vadd.f32 %v1733, %v2166
  %v2235 = vadd.f32 %v1734, %v2171
  %v2236 = vadd.f32 %v1735, %v2174
  %v2237 = vadd.f32 %v1736, %v2179
  %v2238 = vadd.f32 %v1737, %v2182
  %v2239 = vadd.f32 %v1738, %v2187
  %v2240 = vadd.f32 %v1739, %v2190
  %v2241 = vadd.f32 %v1740, %v2195
  %v2242 = vadd.f32 %v1741, %v2198
  %v2243 = vld [vmem:[%s0 + $0x28] sm:$0xf]
  %v2244 = vld [vmem:[%s0 + $0x2c] sm:$0xf]
  %v2245 = vld [vmem:[%s0 + $0x30] sm:$0xf]
  %v2246 = vld [vmem:[%s0 + $0x34] sm:$0xf]
  %v2247 = vld [vmem:[%s0 + $0x38] sm:$0xf]
  %v2248 = vld [vmem:[%s0 + $0x3c] sm:$0xf]
  %v2249 = vld [vmem:[%s0 + $0x40] sm:$0xf]
  %v2250 = vld [vmem:[%s0 + $0x44] sm:$0xf]
  %v2251 = vld [vmem:[%s0 + $0x48] sm:$0xf]
  %v2252 = vld [vmem:[%s0 + $0x4c] sm:$0xf]
  %v2253 = vld [vmem:[%s0 + $0x50] sm:$0xf]
  %v2254 = vld [vmem:[%s0 + $0x54] sm:$0xf]
  %v2255 = vld [vmem:[%s0 + $0x58] sm:$0xf]
  %v2256 = vld [vmem:[%s0 + $0x5c] sm:$0xf]
  %v2257 = vld [vmem:[%s0 + $0x60] sm:$0xf]
  %v2258 = vld [vmem:[%s0 + $0x64] sm:$0xf]
  %v2259 = vld [vmem:[%s0 + $0x68] sm:$0xf]
  %v2260 = vld [vmem:[%s0 + $0x6c] sm:$0xf]
  %v2261 = vld [vmem:[%s0 + $0x70] sm:$0xf]
  %v2262 = vld [vmem:[%s0 + $0x74] sm:$0xf]
  %v2263 = vld [vmem:[%s0 + $0x78] sm:$0xf]
  %v2264 = vld [vmem:[%s0 + $0x7c] sm:$0xf]
  %v2265 = vld [vmem:[%s0 + $0x80] sm:$0xf]
  %v2266 = vld [vmem:[%s0 + $0x84] sm:$0xf]
  %v2267 = vld [vmem:[%s0 + $0x88] sm:$0xf]
  %v2268 = vld [vmem:[%s0 + $0x8c] sm:$0xf]
  %v2269 = vld [vmem:[%s0 + $0x90] sm:$0xf]
  %v2270 = vld [vmem:[%s0 + $0x94] sm:$0xf]
  %v2271 = vld [vmem:[%s0 + $0x98] sm:$0xf]
  %v2272 = vld [vmem:[%s0 + $0x9c] sm:$0xf]
  %v2273 = vld [vmem:[%s0 + $0xa0] sm:$0xf]
  %v2274 = vld [vmem:[%s0 + $0xa4] sm:$0xf]
  %v2275 = vld [vmem:[%s0 + $0xa8] sm:$0xf]
  %v2276 = vld [vmem:[%s0 + $0xac] sm:$0xf]
  %v2277 = vld [vmem:[%s0 + $0xb0] sm:$0xf]
  %v2278 = vld [vmem:[%s0 + $0xb4] sm:$0xf]
  %v2279 = vld [vmem:[%s0 + $0xb8] sm:$0xf]
  %v2280 = vld [vmem:[%s0 + $0xbc] sm:$0xf]
  %v2281 = vld [vmem:[%s0 + $0xc0] sm:$0xf]
  %v2282 = vld [vmem:[%s0 + $0xc4] sm:$0xf]
  %v2283 = vld [vmem:[%s0 + $0xc8] sm:$0xf]
  %v2284 = vld [vmem:[%s0 + $0xcc] sm:$0xf]
  %s2285 = scalar_lea.vmem %s1, 220
  %v2286 = vld [vmem:[%s2285] sm:$0xf]
  %v2287 = vld [vmem:[%s2285 + $0x4] sm:$0xf]
  %v2288 = vld [vmem:[%s2285 + $0x8] sm:$0xf]
  %v2289 = vld [vmem:[%s2285 + $0xc] sm:$0xf]
  %v2290 = vld [vmem:[%s2285 + $0x10] sm:$0xf]
  %v2291 = vld [vmem:[%s2285 + $0x14] sm:$0xf]
  %v2292 = vld [vmem:[%s2285 + $0x18] sm:$0xf]
  %v2293 = vld [vmem:[%s2285 + $0x1c] sm:$0xf]
  %v2294 = vld [vmem:[%s2285 + $0x20] sm:$0xf]
  %v2295 = vld [vmem:[%s2285 + $0x24] sm:$0xf]
  %v2296 = vld [vmem:[%s2285 + $0x28] sm:$0x3]
  %v2339 = vunpack.c.l.b16 %v2243
  %v2340 = vunpack.c.l.b16 %v2244
  %v2341 = vunpack.c.l.b16 %v2245
  %v2342 = vunpack.c.l.b16 %v2246
  %v2343 = vunpack.c.l.b16 %v2247
  %v2344 = vunpack.c.l.b16 %v2248
  %v2345 = vunpack.c.l.b16 %v2249
  %v2346 = vunpack.c.l.b16 %v2250
  %v2347 = vunpack.c.l.b16 %v2251
  %v2348 = vunpack.c.l.b16 %v2252
  %v2349 = vunpack.c.l.b16 %v2253
  %v2350 = vunpack.c.l.b16 %v2254
  %v2351 = vunpack.c.l.b16 %v2255
  %v2352 = vunpack.c.l.b16 %v2256
  %v2353 = vunpack.c.l.b16 %v2257
  %v2354 = vunpack.c.l.b16 %v2258
  %v2355 = vunpack.c.l.b16 %v2259
  %v2356 = vunpack.c.l.b16 %v2260
  %v2357 = vunpack.c.l.b16 %v2261
  %v2358 = vunpack.c.l.b16 %v2262
  %v2359 = vunpack.c.l.b16 %v2263
  %v2360 = vunpack.c.l.b16 %v2264
  %v2361 = vunpack.c.l.b16 %v2265
  %v2362 = vunpack.c.l.b16 %v2266
  %v2363 = vunpack.c.l.b16 %v2267
  %v2364 = vunpack.c.l.b16 %v2268
  %v2365 = vunpack.c.l.b16 %v2269
  %v2366 = vunpack.c.l.b16 %v2270
  %v2367 = vunpack.c.l.b16 %v2271
  %v2368 = vunpack.c.l.b16 %v2272
  %v2369 = vunpack.c.l.b16 %v2273
  %v2370 = vunpack.c.l.b16 %v2274
  %v2371 = vunpack.c.l.b16 %v2275
  %v2372 = vunpack.c.l.b16 %v2276
  %v2373 = vunpack.c.l.b16 %v2277
  %v2374 = vunpack.c.l.b16 %v2278
  %v2375 = vunpack.c.l.b16 %v2279
  %v2376 = vunpack.c.l.b16 %v2280
  %v2377 = vunpack.c.l.b16 %v2281
  %v2378 = vunpack.c.l.b16 %v2282
  %v2379 = vunpack.c.l.b16 %v2283
  %v2380 = vunpack.c.l.b16 %v2284
  %v2381 = vpack.c.b16 %v2340, %v2339
  %v2382 = vpack.c.b16 %v2342, %v2341
  %v2383 = vpack.c.b16 %v2344, %v2343
  %v2384 = vpack.c.b16 %v2346, %v2345
  %v2385 = vpack.c.b16 %v2348, %v2347
  %v2386 = vpack.c.b16 %v2350, %v2349
  %v2387 = vpack.c.b16 %v2352, %v2351
  %v2388 = vpack.c.b16 %v2354, %v2353
  %v2389 = vpack.c.b16 %v2356, %v2355
  %v2390 = vpack.c.b16 %v2358, %v2357
  %v2391 = vpack.c.b16 %v2360, %v2359
  %v2392 = vpack.c.b16 %v2362, %v2361
  %v2393 = vpack.c.b16 %v2364, %v2363
  %v2394 = vpack.c.b16 %v2366, %v2365
  %v2395 = vpack.c.b16 %v2368, %v2367
  %v2396 = vpack.c.b16 %v2370, %v2369
  %v2397 = vpack.c.b16 %v2372, %v2371
  %v2398 = vpack.c.b16 %v2374, %v2373
  %v2399 = vpack.c.b16 %v2376, %v2375
  %v2400 = vpack.c.b16 %v2378, %v2377
  %v2401 = vpack.c.b16 %v2380, %v2379
  %v2413 = vunpack.c.l.b16 %v2286
  %v2414 = vunpack.c.l.b16 %v2287
  %v2415 = vunpack.c.l.b16 %v2288
  %v2416 = vunpack.c.l.b16 %v2289
  %v2417 = vunpack.c.l.b16 %v2290
  %v2418 = vunpack.c.l.b16 %v2291
  %v2419 = vunpack.c.l.b16 %v2292
  %v2420 = vunpack.c.l.b16 %v2293
  %v2421 = vunpack.c.l.b16 %v2294
  %v2422 = vunpack.c.l.b16 %v2295
  %v2423 = vunpack.c.l.b16 %v2296
  %v2424 = vpack.c.b16 %v2414, %v2413
  %v2425 = vpack.c.b16 %v2416, %v2415
  %v2426 = vpack.c.b16 %v2418, %v2417
  %v2427 = vpack.c.b16 %v2420, %v2419
  %v2428 = vpack.c.b16 %v2422, %v2421
  %v2429 = vpack.c.b16 %v2423, %v2423
  %v2436 = vsel %vm226, %v2381, 0
  %v2439 = vsel %vm226, %v2382, 0
  %v2442 = vsel %vm226, %v2383, 0
  %v2445 = vsel %vm226, %v2384, 0
  %v2448 = vsel %vm226, %v2385, 0
  %v2451 = vsel %vm226, %v2386, 0
  %v2454 = vsel %vm226, %v2387, 0
  %v2457 = vsel %vm226, %v2388, 0
  %v2460 = vsel %vm226, %v2389, 0
  %v2463 = vsel %vm226, %v2390, 0
  %v2466 = vsel %vm226, %v2391, 0
  %v2469 = vsel %vm226, %v2392, 0
  %v2472 = vsel %vm226, %v2393, 0
  %v2475 = vsel %vm226, %v2394, 0
  %v2478 = vsel %vm226, %v2395, 0
  %v2481 = vsel %vm226, %v2396, 0
  %v2484 = vsel %vm226, %v2397, 0
  %v2487 = vsel %vm226, %v2398, 0
  %v2490 = vsel %vm226, %v2399, 0
  %v2493 = vsel %vm226, %v2400, 0
  %v2496 = vsel %vm226, %v2401, 0
  %v2499 = vsel %vm290, %v2429, 0
  %2501 = vmatprep.subr.bf16.mxu0 0
  %2502 = vmatpush1.bf16.msra.mxu0 0
  %2503 = vmatprep.subr.bf16.mxu0 0
  %2504 = vmatpush1.bf16.msra.mxu0 0
  %2505 = vmatprep.subr.bf16.mxu0 0
  %2506 = vmatpush1.bf16.msra.mxu0 %v2499
  %2507 = vmatprep.subr.bf16.mxu0 0
  %2508 = vmatpush1.bf16.msra.mxu0 %v2428
  %2509 = vmatprep.subr.bf16.mxu0 0
  %2510 = vmatpush1.bf16.msra.mxu0 %v2427
  %2511 = vmatprep.subr.bf16.mxu0 0
  %2512 = vmatpush1.bf16.msra.mxu0 %v2426
  %2513 = vmatprep.subr.bf16.mxu0 0
  %2514 = vmatpush1.bf16.msra.mxu0 %v2425
  %2515 = vmatprep.subr.bf16.mxu0 0
  %2516 = vmatpush1.bf16.msra.mxu0 %v2424
  %2517 = vmatprep.subr.bf16.mxu0 0
  %2518 = vmatpush2.bf16.msra.mxu0 0
  %2519 = vmatprep.subr.bf16.mxu0 0
  %2520 = vmatpush2.bf16.msra.mxu0 0
  %2521 = vmatprep.subr.bf16.mxu0 0
  %2522 = vmatpush2.bf16.msra.mxu0 0
  %2523 = vmatprep.subr.bf16.mxu0 0
  %2524 = vmatpush2.bf16.msra.mxu0 0
  %2525 = vmatprep.subr.bf16.mxu0 0
  %2526 = vmatpush2.bf16.msra.mxu0 0
  %2527 = vmatprep.subr.bf16.mxu0 0
  %2528 = vmatpush2.bf16.msra.mxu0 0
  %2529 = vmatprep.subr.bf16.mxu0 0
  %2530 = vmatpush2.bf16.msra.mxu0 0
  %2531 = vmatprep.subr.bf16.mxu0 0
  %2532 = vmatpush2.bf16.msra.mxu0 0
  %2533 = vmatprep.mubr.bf16.mxu0 0
  %2534 = vmatmul.mubr.bf16.gmra.mxu0 %v2436
  %v2535 = vpop.f32.mrf.mxu0
  %v2536 = vadd.f32 0.0, %v2535
  %v2537 = vpop.f32.mrf.mxu0
  %v2538 = vpop.f32.mrf.mxu0
  %v2539 = vadd.f32 0.0, %v2538
  %v2540 = vpop.f32.mrf.mxu0
  %2541 = vmatprep.mubr.bf16.mxu0 0
  %2542 = vmatmul.mubr.bf16.gmra.mxu0 %v2439
  %v2543 = vpop.f32.mrf.mxu0
  %v2544 = vadd.f32 0.0, %v2543
  %v2545 = vpop.f32.mrf.mxu0
  %v2546 = vpop.f32.mrf.mxu0
  %v2547 = vadd.f32 0.0, %v2546
  %v2548 = vpop.f32.mrf.mxu0
  %2549 = vmatprep.mubr.bf16.mxu0 0
  %2550 = vmatmul.mubr.bf16.gmra.mxu0 %v2442
  %v2551 = vpop.f32.mrf.mxu0
  %v2552 = vadd.f32 0.0, %v2551
  %v2553 = vpop.f32.mrf.mxu0
  %v2554 = vpop.f32.mrf.mxu0
  %v2555 = vadd.f32 0.0, %v2554
  %v2556 = vpop.f32.mrf.mxu0
  %2557 = vmatprep.mubr.bf16.mxu0 0
  %2558 = vmatmul.mubr.bf16.gmra.mxu0 %v2445
  %v2559 = vpop.f32.mrf.mxu0
  %v2560 = vadd.f32 0.0, %v2559
  %v2561 = vpop.f32.mrf.mxu0
  %v2562 = vpop.f32.mrf.mxu0
  %v2563 = vadd.f32 0.0, %v2562
  %v2564 = vpop.f32.mrf.mxu0
  %2565 = vmatprep.mubr.bf16.mxu0 0
  %2566 = vmatmul.mubr.bf16.gmra.mxu0 %v2448
  %v2567 = vpop.f32.mrf.mxu0
  %v2568 = vadd.f32 0.0, %v2567
  %v2569 = vpop.f32.mrf.mxu0
  %v2570 = vpop.f32.mrf.mxu0
  %v2571 = vadd.f32 0.0, %v2570
  %v2572 = vpop.f32.mrf.mxu0
  %2573 = vmatprep.mubr.bf16.mxu0 0
  %2574 = vmatmul.mubr.bf16.gmra.mxu0 %v2451
  %v2575 = vpop.f32.mrf.mxu0
  %v2576 = vadd.f32 0.0, %v2575
  %v2577 = vpop.f32.mrf.mxu0
  %v2578 = vpop.f32.mrf.mxu0
  %v2579 = vadd.f32 0.0, %v2578
  %v2580 = vpop.f32.mrf.mxu0
  %2581 = vmatprep.mubr.bf16.mxu0 0
  %2582 = vmatmul.mubr.bf16.gmra.mxu0 %v2454
  %v2583 = vpop.f32.mrf.mxu0
  %v2584 = vadd.f32 0.0, %v2583
  %v2585 = vpop.f32.mrf.mxu0
  %v2586 = vpop.f32.mrf.mxu0
  %v2587 = vadd.f32 0.0, %v2586
  %v2588 = vpop.f32.mrf.mxu0
  %2589 = vmatprep.mubr.bf16.mxu0 0
  %2590 = vmatmul.mubr.bf16.gmra.mxu0 %v2457
  %v2591 = vpop.f32.mrf.mxu0
  %v2592 = vadd.f32 0.0, %v2591
  %v2593 = vpop.f32.mrf.mxu0
  %v2594 = vpop.f32.mrf.mxu0
  %v2595 = vadd.f32 0.0, %v2594
  %v2596 = vpop.f32.mrf.mxu0
  %2597 = vmatprep.mubr.bf16.mxu0 0
  %2598 = vmatmul.mubr.bf16.gmra.mxu0 %v2460
  %v2599 = vpop.f32.mrf.mxu0
  %v2600 = vadd.f32 0.0, %v2599
  %v2601 = vpop.f32.mrf.mxu0
  %v2602 = vpop.f32.mrf.mxu0
  %v2603 = vadd.f32 0.0, %v2602
  %v2604 = vpop.f32.mrf.mxu0
  %2605 = vmatprep.mubr.bf16.mxu0 0
  %2606 = vmatmul.mubr.bf16.gmra.mxu0 %v2463
  %v2607 = vpop.f32.mrf.mxu0
  %v2608 = vadd.f32 0.0, %v2607
  %v2609 = vpop.f32.mrf.mxu0
  %v2610 = vpop.f32.mrf.mxu0
  %v2611 = vadd.f32 0.0, %v2610
  %v2612 = vpop.f32.mrf.mxu0
  %2613 = vmatprep.mubr.bf16.mxu0 0
  %2614 = vmatmul.mubr.bf16.gmra.mxu0 %v2466
  %v2615 = vpop.f32.mrf.mxu0
  %v2616 = vadd.f32 0.0, %v2615
  %v2617 = vpop.f32.mrf.mxu0
  %v2618 = vpop.f32.mrf.mxu0
  %v2619 = vadd.f32 0.0, %v2618
  %v2620 = vpop.f32.mrf.mxu0
  %2621 = vmatprep.mubr.bf16.mxu0 0
  %2622 = vmatmul.mubr.bf16.gmra.mxu0 %v2469
  %v2623 = vpop.f32.mrf.mxu0
  %v2624 = vadd.f32 0.0, %v2623
  %v2625 = vpop.f32.mrf.mxu0
  %v2626 = vpop.f32.mrf.mxu0
  %v2627 = vadd.f32 0.0, %v2626
  %v2628 = vpop.f32.mrf.mxu0
  %2629 = vmatprep.mubr.bf16.mxu0 0
  %2630 = vmatmul.mubr.bf16.gmra.mxu0 %v2472
  %v2631 = vpop.f32.mrf.mxu0
  %v2632 = vadd.f32 0.0, %v2631
  %v2633 = vpop.f32.mrf.mxu0
  %v2634 = vpop.f32.mrf.mxu0
  %v2635 = vadd.f32 0.0, %v2634
  %v2636 = vpop.f32.mrf.mxu0
  %2637 = vmatprep.mubr.bf16.mxu0 0
  %2638 = vmatmul.mubr.bf16.gmra.mxu0 %v2475
  %v2639 = vpop.f32.mrf.mxu0
  %v2640 = vadd.f32 0.0, %v2639
  %v2641 = vpop.f32.mrf.mxu0
  %v2642 = vpop.f32.mrf.mxu0
  %v2643 = vadd.f32 0.0, %v2642
  %v2644 = vpop.f32.mrf.mxu0
  %2645 = vmatprep.mubr.bf16.mxu0 0
  %2646 = vmatmul.mubr.bf16.gmra.mxu0 %v2478
  %v2647 = vpop.f32.mrf.mxu0
  %v2648 = vadd.f32 0.0, %v2647
  %v2649 = vpop.f32.mrf.mxu0
  %v2650 = vpop.f32.mrf.mxu0
  %v2651 = vadd.f32 0.0, %v2650
  %v2652 = vpop.f32.mrf.mxu0
  %2653 = vmatprep.mubr.bf16.mxu0 0
  %2654 = vmatmul.mubr.bf16.gmra.mxu0 %v2481
  %v2655 = vpop.f32.mrf.mxu0
  %v2656 = vadd.f32 0.0, %v2655
  %v2657 = vpop.f32.mrf.mxu0
  %v2658 = vpop.f32.mrf.mxu0
  %v2659 = vadd.f32 0.0, %v2658
  %v2660 = vpop.f32.mrf.mxu0
  %2661 = vmatprep.mubr.bf16.mxu0 0
  %2662 = vmatmul.mubr.bf16.gmra.mxu0 %v2484
  %v2663 = vpop.f32.mrf.mxu0
  %v2664 = vadd.f32 0.0, %v2663
  %v2665 = vpop.f32.mrf.mxu0
  %v2666 = vpop.f32.mrf.mxu0
  %v2667 = vadd.f32 0.0, %v2666
  %v2668 = vpop.f32.mrf.mxu0
  %2669 = vmatprep.mubr.bf16.mxu0 0
  %2670 = vmatmul.mubr.bf16.gmra.mxu0 %v2487
  %v2671 = vpop.f32.mrf.mxu0
  %v2672 = vadd.f32 0.0, %v2671
  %v2673 = vpop.f32.mrf.mxu0
  %v2674 = vpop.f32.mrf.mxu0
  %v2675 = vadd.f32 0.0, %v2674
  %v2676 = vpop.f32.mrf.mxu0
  %2677 = vmatprep.mubr.bf16.mxu0 0
  %2678 = vmatmul.mubr.bf16.gmra.mxu0 %v2490
  %v2679 = vpop.f32.mrf.mxu0
  %v2680 = vadd.f32 0.0, %v2679
  %v2681 = vpop.f32.mrf.mxu0
  %v2682 = vpop.f32.mrf.mxu0
  %v2683 = vadd.f32 0.0, %v2682
  %v2684 = vpop.f32.mrf.mxu0
  %2685 = vmatprep.mubr.bf16.mxu0 0
  %2686 = vmatmul.mubr.bf16.gmra.mxu0 %v2493
  %v2687 = vpop.f32.mrf.mxu0
  %v2688 = vadd.f32 0.0, %v2687
  %v2689 = vpop.f32.mrf.mxu0
  %v2690 = vpop.f32.mrf.mxu0
  %v2691 = vadd.f32 0.0, %v2690
  %v2692 = vpop.f32.mrf.mxu0
  %2693 = vmatprep.mubr.bf16.mxu0 0
  %2694 = vmatmul.mubr.bf16.gmra.mxu0 %v2496
  %v2695 = vpop.f32.mrf.mxu0
  %v2696 = vadd.f32 0.0, %v2695
  %v2697 = vpop.f32.mrf.mxu0
  %v2698 = vpop.f32.mrf.mxu0
  %v2699 = vadd.f32 0.0, %v2698
  %v2700 = vpop.f32.mrf.mxu0
  %2701 = vdwg.mxu0
  %v2702 = vadd.f32 %v2201, %v2536
  %v2703 = vadd.f32 %v2202, %v2539
  %v2704 = vadd.f32 %v2203, %v2544
  %v2705 = vadd.f32 %v2204, %v2547
  %v2706 = vadd.f32 %v2205, %v2552
  %v2707 = vadd.f32 %v2206, %v2555
  %v2708 = vadd.f32 %v2207, %v2560
  %v2709 = vadd.f32 %v2208, %v2563
  %v2710 = vadd.f32 %v2209, %v2568
  %v2711 = vadd.f32 %v2210, %v2571
  %v2712 = vadd.f32 %v2211, %v2576
  %v2713 = vadd.f32 %v2212, %v2579
  %v2714 = vadd.f32 %v2213, %v2584
  %v2715 = vadd.f32 %v2214, %v2587
  %v2716 = vadd.f32 %v2215, %v2592
  %v2717 = vadd.f32 %v2216, %v2595
  %v2718 = vadd.f32 %v2217, %v2600
  %v2719 = vadd.f32 %v2218, %v2603
  %v2720 = vadd.f32 %v2219, %v2608
  %v2721 = vadd.f32 %v2220, %v2611
  %v2722 = vadd.f32 %v2221, %v2616
  %v2723 = vadd.f32 %v2222, %v2619
  %v2724 = vadd.f32 %v2223, %v2624
  %v2725 = vadd.f32 %v2224, %v2627
  %v2726 = vadd.f32 %v2225, %v2632
  %v2727 = vadd.f32 %v2226, %v2635
  %v2728 = vadd.f32 %v2227, %v2640
  %v2729 = vadd.f32 %v2228, %v2643
  %v2730 = vadd.f32 %v2229, %v2648
  %v2731 = vadd.f32 %v2230, %v2651
  %v2732 = vadd.f32 %v2231, %v2656
  %v2733 = vadd.f32 %v2232, %v2659
  %v2734 = vadd.f32 %v2233, %v2664
  %v2735 = vadd.f32 %v2234, %v2667
  %v2736 = vadd.f32 %v2235, %v2672
  %v2737 = vadd.f32 %v2236, %v2675
  %v2738 = vadd.f32 %v2237, %v2680
  %v2739 = vadd.f32 %v2238, %v2683
  %v2740 = vadd.f32 %v2239, %v2688
  %v2741 = vadd.f32 %v2240, %v2691
  %v2742 = vadd.f32 %v2241, %v2696
  %v2743 = vadd.f32 %v2242, %v2699
  %v2744 = vld [vmem:[%s0 + $0x30] sm:$0xf]
  %v2745 = vld [vmem:[%s0 + $0x34] sm:$0xf]
  %v2746 = vld [vmem:[%s0 + $0x38] sm:$0xf]
  %v2747 = vld [vmem:[%s0 + $0x3c] sm:$0xf]
  %v2748 = vld [vmem:[%s0 + $0x40] sm:$0xf]
  %v2749 = vld [vmem:[%s0 + $0x44] sm:$0xf]
  %v2750 = vld [vmem:[%s0 + $0x48] sm:$0xf]
  %v2751 = vld [vmem:[%s0 + $0x4c] sm:$0xf]
  %v2752 = vld [vmem:[%s0 + $0x50] sm:$0xf]
  %v2753 = vld [vmem:[%s0 + $0x54] sm:$0xf]
  %v2754 = vld [vmem:[%s0 + $0x58] sm:$0xf]
  %v2755 = vld [vmem:[%s0 + $0x5c] sm:$0xf]
  %v2756 = vld [vmem:[%s0 + $0x60] sm:$0xf]
  %v2757 = vld [vmem:[%s0 + $0x64] sm:$0xf]
  %v2758 = vld [vmem:[%s0 + $0x68] sm:$0xf]
  %v2759 = vld [vmem:[%s0 + $0x6c] sm:$0xf]
  %v2760 = vld [vmem:[%s0 + $0x70] sm:$0xf]
  %v2761 = vld [vmem:[%s0 + $0x74] sm:$0xf]
  %v2762 = vld [vmem:[%s0 + $0x78] sm:$0xf]
  %v2763 = vld [vmem:[%s0 + $0x7c] sm:$0xf]
  %v2764 = vld [vmem:[%s0 + $0x80] sm:$0xf]
  %v2765 = vld [vmem:[%s0 + $0x84] sm:$0xf]
  %v2766 = vld [vmem:[%s0 + $0x88] sm:$0xf]
  %v2767 = vld [vmem:[%s0 + $0x8c] sm:$0xf]
  %v2768 = vld [vmem:[%s0 + $0x90] sm:$0xf]
  %v2769 = vld [vmem:[%s0 + $0x94] sm:$0xf]
  %v2770 = vld [vmem:[%s0 + $0x98] sm:$0xf]
  %v2771 = vld [vmem:[%s0 + $0x9c] sm:$0xf]
  %v2772 = vld [vmem:[%s0 + $0xa0] sm:$0xf]
  %v2773 = vld [vmem:[%s0 + $0xa4] sm:$0xf]
  %v2774 = vld [vmem:[%s0 + $0xa8] sm:$0xf]
  %v2775 = vld [vmem:[%s0 + $0xac] sm:$0xf]
  %v2776 = vld [vmem:[%s0 + $0xb0] sm:$0xf]
  %v2777 = vld [vmem:[%s0 + $0xb4] sm:$0xf]
  %v2778 = vld [vmem:[%s0 + $0xb8] sm:$0xf]
  %v2779 = vld [vmem:[%s0 + $0xbc] sm:$0xf]
  %v2780 = vld [vmem:[%s0 + $0xc0] sm:$0xf]
  %v2781 = vld [vmem:[%s0 + $0xc4] sm:$0xf]
  %v2782 = vld [vmem:[%s0 + $0xc8] sm:$0xf]
  %v2783 = vld [vmem:[%s0 + $0xcc] sm:$0xf]
  %v2784 = vld [vmem:[%s0 + $0xd0] sm:$0xf]
  %v2785 = vld [vmem:[%s0 + $0xd4] sm:$0xf]
  %s2786 = scalar_lea.vmem %s1, 264
  %v2787 = vld [vmem:[%s2786] sm:$0xf]
  %v2788 = vld [vmem:[%s2786 + $0x4] sm:$0xf]
  %v2789 = vld [vmem:[%s2786 + $0x8] sm:$0xf]
  %v2790 = vld [vmem:[%s2786 + $0xc] sm:$0xf]
  %v2791 = vld [vmem:[%s2786 + $0x10] sm:$0xf]
  %v2792 = vld [vmem:[%s2786 + $0x14] sm:$0xf]
  %v2793 = vld [vmem:[%s2786 + $0x18] sm:$0xf]
  %v2794 = vld [vmem:[%s2786 + $0x1c] sm:$0xf]
  %v2795 = vld [vmem:[%s2786 + $0x20] sm:$0xf]
  %v2796 = vld [vmem:[%s2786 + $0x24] sm:$0xf]
  %v2797 = vld [vmem:[%s2786 + $0x28] sm:$0x3]
  %v2840 = vunpack.c.l.b16 %v2744
  %v2841 = vunpack.c.l.b16 %v2745
  %v2842 = vunpack.c.l.b16 %v2746
  %v2843 = vunpack.c.l.b16 %v2747
  %v2844 = vunpack.c.l.b16 %v2748
  %v2845 = vunpack.c.l.b16 %v2749
  %v2846 = vunpack.c.l.b16 %v2750
  %v2847 = vunpack.c.l.b16 %v2751
  %v2848 = vunpack.c.l.b16 %v2752
  %v2849 = vunpack.c.l.b16 %v2753
  %v2850 = vunpack.c.l.b16 %v2754
  %v2851 = vunpack.c.l.b16 %v2755
  %v2852 = vunpack.c.l.b16 %v2756
  %v2853 = vunpack.c.l.b16 %v2757
  %v2854 = vunpack.c.l.b16 %v2758
  %v2855 = vunpack.c.l.b16 %v2759
  %v2856 = vunpack.c.l.b16 %v2760
  %v2857 = vunpack.c.l.b16 %v2761
  %v2858 = vunpack.c.l.b16 %v2762
  %v2859 = vunpack.c.l.b16 %v2763
  %v2860 = vunpack.c.l.b16 %v2764
  %v2861 = vunpack.c.l.b16 %v2765
  %v2862 = vunpack.c.l.b16 %v2766
  %v2863 = vunpack.c.l.b16 %v2767
  %v2864 = vunpack.c.l.b16 %v2768
  %v2865 = vunpack.c.l.b16 %v2769
  %v2866 = vunpack.c.l.b16 %v2770
  %v2867 = vunpack.c.l.b16 %v2771
  %v2868 = vunpack.c.l.b16 %v2772
  %v2869 = vunpack.c.l.b16 %v2773
  %v2870 = vunpack.c.l.b16 %v2774
  %v2871 = vunpack.c.l.b16 %v2775
  %v2872 = vunpack.c.l.b16 %v2776
  %v2873 = vunpack.c.l.b16 %v2777
  %v2874 = vunpack.c.l.b16 %v2778
  %v2875 = vunpack.c.l.b16 %v2779
  %v2876 = vunpack.c.l.b16 %v2780
  %v2877 = vunpack.c.l.b16 %v2781
  %v2878 = vunpack.c.l.b16 %v2782
  %v2879 = vunpack.c.l.b16 %v2783
  %v2880 = vunpack.c.l.b16 %v2784
  %v2881 = vunpack.c.l.b16 %v2785
  %v2882 = vpack.c.b16 %v2841, %v2840
  %v2883 = vpack.c.b16 %v2843, %v2842
  %v2884 = vpack.c.b16 %v2845, %v2844
  %v2885 = vpack.c.b16 %v2847, %v2846
  %v2886 = vpack.c.b16 %v2849, %v2848
  %v2887 = vpack.c.b16 %v2851, %v2850
  %v2888 = vpack.c.b16 %v2853, %v2852
  %v2889 = vpack.c.b16 %v2855, %v2854
  %v2890 = vpack.c.b16 %v2857, %v2856
  %v2891 = vpack.c.b16 %v2859, %v2858
  %v2892 = vpack.c.b16 %v2861, %v2860
  %v2893 = vpack.c.b16 %v2863, %v2862
  %v2894 = vpack.c.b16 %v2865, %v2864
  %v2895 = vpack.c.b16 %v2867, %v2866
  %v2896 = vpack.c.b16 %v2869, %v2868
  %v2897 = vpack.c.b16 %v2871, %v2870
  %v2898 = vpack.c.b16 %v2873, %v2872
  %v2899 = vpack.c.b16 %v2875, %v2874
  %v2900 = vpack.c.b16 %v2877, %v2876
  %v2901 = vpack.c.b16 %v2879, %v2878
  %v2902 = vpack.c.b16 %v2881, %v2880
  %v2914 = vunpack.c.l.b16 %v2787
  %v2915 = vunpack.c.l.b16 %v2788
  %v2916 = vunpack.c.l.b16 %v2789
  %v2917 = vunpack.c.l.b16 %v2790
  %v2918 = vunpack.c.l.b16 %v2791
  %v2919 = vunpack.c.l.b16 %v2792
  %v2920 = vunpack.c.l.b16 %v2793
  %v2921 = vunpack.c.l.b16 %v2794
  %v2922 = vunpack.c.l.b16 %v2795
  %v2923 = vunpack.c.l.b16 %v2796
  %v2924 = vunpack.c.l.b16 %v2797
  %v2925 = vpack.c.b16 %v2915, %v2914
  %v2926 = vpack.c.b16 %v2917, %v2916
  %v2927 = vpack.c.b16 %v2919, %v2918
  %v2928 = vpack.c.b16 %v2921, %v2920
  %v2929 = vpack.c.b16 %v2923, %v2922
  %v2930 = vpack.c.b16 %v2924, %v2924
  %v2937 = vsel %vm226, %v2882, 0
  %v2940 = vsel %vm226, %v2883, 0
  %v2943 = vsel %vm226, %v2884, 0
  %v2946 = vsel %vm226, %v2885, 0
  %v2949 = vsel %vm226, %v2886, 0
  %v2952 = vsel %vm226, %v2887, 0
  %v2955 = vsel %vm226, %v2888, 0
  %v2958 = vsel %vm226, %v2889, 0
  %v2961 = vsel %vm226, %v2890, 0
  %v2964 = vsel %vm226, %v2891, 0
  %v2967 = vsel %vm226, %v2892, 0
  %v2970 = vsel %vm226, %v2893, 0
  %v2973 = vsel %vm226, %v2894, 0
  %v2976 = vsel %vm226, %v2895, 0
  %v2979 = vsel %vm226, %v2896, 0
  %v2982 = vsel %vm226, %v2897, 0
  %v2985 = vsel %vm226, %v2898, 0
  %v2988 = vsel %vm226, %v2899, 0
  %v2991 = vsel %vm226, %v2900, 0
  %v2994 = vsel %vm226, %v2901, 0
  %v2997 = vsel %vm226, %v2902, 0
  %v3000 = vsel %vm290, %v2930, 0
  %3002 = vmatprep.subr.bf16.mxu0 0
  %3003 = vmatpush1.bf16.msra.mxu0 0
  %3004 = vmatprep.subr.bf16.mxu0 0
  %3005 = vmatpush1.bf16.msra.mxu0 0
  %3006 = vmatprep.subr.bf16.mxu0 0
  %3007 = vmatpush1.bf16.msra.mxu0 %v3000
  %3008 = vmatprep.subr.bf16.mxu0 0
  %3009 = vmatpush1.bf16.msra.mxu0 %v2929
  %3010 = vmatprep.subr.bf16.mxu0 0
  %3011 = vmatpush1.bf16.msra.mxu0 %v2928
  %3012 = vmatprep.subr.bf16.mxu0 0
  %3013 = vmatpush1.bf16.msra.mxu0 %v2927
  %3014 = vmatprep.subr.bf16.mxu0 0
  %3015 = vmatpush1.bf16.msra.mxu0 %v2926
  %3016 = vmatprep.subr.bf16.mxu0 0
  %3017 = vmatpush1.bf16.msra.mxu0 %v2925
  %3018 = vmatprep.subr.bf16.mxu0 0
  %3019 = vmatpush2.bf16.msra.mxu0 0
  %3020 = vmatprep.subr.bf16.mxu0 0
  %3021 = vmatpush2.bf16.msra.mxu0 0
  %3022 = vmatprep.subr.bf16.mxu0 0
  %3023 = vmatpush2.bf16.msra.mxu0 0
  %3024 = vmatprep.subr.bf16.mxu0 0
  %3025 = vmatpush2.bf16.msra.mxu0 0
  %3026 = vmatprep.subr.bf16.mxu0 0
  %3027 = vmatpush2.bf16.msra.mxu0 0
  %3028 = vmatprep.subr.bf16.mxu0 0
  %3029 = vmatpush2.bf16.msra.mxu0 0
  %3030 = vmatprep.subr.bf16.mxu0 0
  %3031 = vmatpush2.bf16.msra.mxu0 0
  %3032 = vmatprep.subr.bf16.mxu0 0
  %3033 = vmatpush2.bf16.msra.mxu0 0
  %3034 = vmatprep.mubr.bf16.mxu0 0
  %3035 = vmatmul.mubr.bf16.gmra.mxu0 %v2937
  %v3036 = vpop.f32.mrf.mxu0
  %v3037 = vadd.f32 0.0, %v3036
  %v3038 = vpop.f32.mrf.mxu0
  %v3039 = vpop.f32.mrf.mxu0
  %v3040 = vadd.f32 0.0, %v3039
  %v3041 = vpop.f32.mrf.mxu0
  %3042 = vmatprep.mubr.bf16.mxu0 0
  %3043 = vmatmul.mubr.bf16.gmra.mxu0 %v2940
  %v3044 = vpop.f32.mrf.mxu0
  %v3045 = vadd.f32 0.0, %v3044
  %v3046 = vpop.f32.mrf.mxu0
  %v3047 = vpop.f32.mrf.mxu0
  %v3048 = vadd.f32 0.0, %v3047
  %v3049 = vpop.f32.mrf.mxu0
  %3050 = vmatprep.mubr.bf16.mxu0 0
  %3051 = vmatmul.mubr.bf16.gmra.mxu0 %v2943
  %v3052 = vpop.f32.mrf.mxu0
  %v3053 = vadd.f32 0.0, %v3052
  %v3054 = vpop.f32.mrf.mxu0
  %v3055 = vpop.f32.mrf.mxu0
  %v3056 = vadd.f32 0.0, %v3055
  %v3057 = vpop.f32.mrf.mxu0
  %3058 = vmatprep.mubr.bf16.mxu0 0
  %3059 = vmatmul.mubr.bf16.gmra.mxu0 %v2946
  %v3060 = vpop.f32.mrf.mxu0
  %v3061 = vadd.f32 0.0, %v3060
  %v3062 = vpop.f32.mrf.mxu0
  %v3063 = vpop.f32.mrf.mxu0
  %v3064 = vadd.f32 0.0, %v3063
  %v3065 = vpop.f32.mrf.mxu0
  %3066 = vmatprep.mubr.bf16.mxu0 0
  %3067 = vmatmul.mubr.bf16.gmra.mxu0 %v2949
  %v3068 = vpop.f32.mrf.mxu0
  %v3069 = vadd.f32 0.0, %v3068
  %v3070 = vpop.f32.mrf.mxu0
  %v3071 = vpop.f32.mrf.mxu0
  %v3072 = vadd.f32 0.0, %v3071
  %v3073 = vpop.f32.mrf.mxu0
  %3074 = vmatprep.mubr.bf16.mxu0 0
  %3075 = vmatmul.mubr.bf16.gmra.mxu0 %v2952
  %v3076 = vpop.f32.mrf.mxu0
  %v3077 = vadd.f32 0.0, %v3076
  %v3078 = vpop.f32.mrf.mxu0
  %v3079 = vpop.f32.mrf.mxu0
  %v3080 = vadd.f32 0.0, %v3079
  %v3081 = vpop.f32.mrf.mxu0
  %3082 = vmatprep.mubr.bf16.mxu0 0
  %3083 = vmatmul.mubr.bf16.gmra.mxu0 %v2955
  %v3084 = vpop.f32.mrf.mxu0
  %v3085 = vadd.f32 0.0, %v3084
  %v3086 = vpop.f32.mrf.mxu0
  %v3087 = vpop.f32.mrf.mxu0
  %v3088 = vadd.f32 0.0, %v3087
  %v3089 = vpop.f32.mrf.mxu0
  %3090 = vmatprep.mubr.bf16.mxu0 0
  %3091 = vmatmul.mubr.bf16.gmra.mxu0 %v2958
  %v3092 = vpop.f32.mrf.mxu0
  %v3093 = vadd.f32 0.0, %v3092
  %v3094 = vpop.f32.mrf.mxu0
  %v3095 = vpop.f32.mrf.mxu0
  %v3096 = vadd.f32 0.0, %v3095
  %v3097 = vpop.f32.mrf.mxu0
  %3098 = vmatprep.mubr.bf16.mxu0 0
  %3099 = vmatmul.mubr.bf16.gmra.mxu0 %v2961
  %v3100 = vpop.f32.mrf.mxu0
  %v3101 = vadd.f32 0.0, %v3100
  %v3102 = vpop.f32.mrf.mxu0
  %v3103 = vpop.f32.mrf.mxu0
  %v3104 = vadd.f32 0.0, %v3103
  %v3105 = vpop.f32.mrf.mxu0
  %3106 = vmatprep.mubr.bf16.mxu0 0
  %3107 = vmatmul.mubr.bf16.gmra.mxu0 %v2964
  %v3108 = vpop.f32.mrf.mxu0
  %v3109 = vadd.f32 0.0, %v3108
  %v3110 = vpop.f32.mrf.mxu0
  %v3111 = vpop.f32.mrf.mxu0
  %v3112 = vadd.f32 0.0, %v3111
  %v3113 = vpop.f32.mrf.mxu0
  %3114 = vmatprep.mubr.bf16.mxu0 0
  %3115 = vmatmul.mubr.bf16.gmra.mxu0 %v2967
  %v3116 = vpop.f32.mrf.mxu0
  %v3117 = vadd.f32 0.0, %v3116
  %v3118 = vpop.f32.mrf.mxu0
  %v3119 = vpop.f32.mrf.mxu0
  %v3120 = vadd.f32 0.0, %v3119
  %v3121 = vpop.f32.mrf.mxu0
  %3122 = vmatprep.mubr.bf16.mxu0 0
  %3123 = vmatmul.mubr.bf16.gmra.mxu0 %v2970
  %v3124 = vpop.f32.mrf.mxu0
  %v3125 = vadd.f32 0.0, %v3124
  %v3126 = vpop.f32.mrf.mxu0
  %v3127 = vpop.f32.mrf.mxu0
  %v3128 = vadd.f32 0.0, %v3127
  %v3129 = vpop.f32.mrf.mxu0
  %3130 = vmatprep.mubr.bf16.mxu0 0
  %3131 = vmatmul.mubr.bf16.gmra.mxu0 %v2973
  %v3132 = vpop.f32.mrf.mxu0
  %v3133 = vadd.f32 0.0, %v3132
  %v3134 = vpop.f32.mrf.mxu0
  %v3135 = vpop.f32.mrf.mxu0
  %v3136 = vadd.f32 0.0, %v3135
  %v3137 = vpop.f32.mrf.mxu0
  %3138 = vmatprep.mubr.bf16.mxu0 0
  %3139 = vmatmul.mubr.bf16.gmra.mxu0 %v2976
  %v3140 = vpop.f32.mrf.mxu0
  %v3141 = vadd.f32 0.0, %v3140
  %v3142 = vpop.f32.mrf.mxu0
  %v3143 = vpop.f32.mrf.mxu0
  %v3144 = vadd.f32 0.0, %v3143
  %v3145 = vpop.f32.mrf.mxu0
  %3146 = vmatprep.mubr.bf16.mxu0 0
  %3147 = vmatmul.mubr.bf16.gmra.mxu0 %v2979
  %v3148 = vpop.f32.mrf.mxu0
  %v3149 = vadd.f32 0.0, %v3148
  %v3150 = vpop.f32.mrf.mxu0
  %v3151 = vpop.f32.mrf.mxu0
  %v3152 = vadd.f32 0.0, %v3151
  %v3153 = vpop.f32.mrf.mxu0
  %3154 = vmatprep.mubr.bf16.mxu0 0
  %3155 = vmatmul.mubr.bf16.gmra.mxu0 %v2982
  %v3156 = vpop.f32.mrf.mxu0
  %v3157 = vadd.f32 0.0, %v3156
  %v3158 = vpop.f32.mrf.mxu0
  %v3159 = vpop.f32.mrf.mxu0
  %v3160 = vadd.f32 0.0, %v3159
  %v3161 = vpop.f32.mrf.mxu0
  %3162 = vmatprep.mubr.bf16.mxu0 0
  %3163 = vmatmul.mubr.bf16.gmra.mxu0 %v2985
  %v3164 = vpop.f32.mrf.mxu0
  %v3165 = vadd.f32 0.0, %v3164
  %v3166 = vpop.f32.mrf.mxu0
  %v3167 = vpop.f32.mrf.mxu0
  %v3168 = vadd.f32 0.0, %v3167
  %v3169 = vpop.f32.mrf.mxu0
  %3170 = vmatprep.mubr.bf16.mxu0 0
  %3171 = vmatmul.mubr.bf16.gmra.mxu0 %v2988
  %v3172 = vpop.f32.mrf.mxu0
  %v3173 = vadd.f32 0.0, %v3172
  %v3174 = vpop.f32.mrf.mxu0
  %v3175 = vpop.f32.mrf.mxu0
  %v3176 = vadd.f32 0.0, %v3175
  %v3177 = vpop.f32.mrf.mxu0
  %3178 = vmatprep.mubr.bf16.mxu0 0
  %3179 = vmatmul.mubr.bf16.gmra.mxu0 %v2991
  %v3180 = vpop.f32.mrf.mxu0
  %v3181 = vadd.f32 0.0, %v3180
  %v3182 = vpop.f32.mrf.mxu0
  %v3183 = vpop.f32.mrf.mxu0
  %v3184 = vadd.f32 0.0, %v3183
  %v3185 = vpop.f32.mrf.mxu0
  %3186 = vmatprep.mubr.bf16.mxu0 0
  %3187 = vmatmul.mubr.bf16.gmra.mxu0 %v2994
  %v3188 = vpop.f32.mrf.mxu0
  %v3189 = vadd.f32 0.0, %v3188
  %v3190 = vpop.f32.mrf.mxu0
  %v3191 = vpop.f32.mrf.mxu0
  %v3192 = vadd.f32 0.0, %v3191
  %v3193 = vpop.f32.mrf.mxu0
  %3194 = vmatprep.mubr.bf16.mxu0 0
  %3195 = vmatmul.mubr.bf16.gmra.mxu0 %v2997
  %v3196 = vpop.f32.mrf.mxu0
  %v3197 = vadd.f32 0.0, %v3196
  %v3198 = vpop.f32.mrf.mxu0
  %v3199 = vpop.f32.mrf.mxu0
  %v3200 = vadd.f32 0.0, %v3199
  %v3201 = vpop.f32.mrf.mxu0
  %3202 = vdwg.mxu0
  %v3203 = vadd.f32 %v2702, %v3037
  %v3204 = vadd.f32 %v2703, %v3040
  %v3205 = vadd.f32 %v2704, %v3045
  %v3206 = vadd.f32 %v2705, %v3048
  %v3207 = vadd.f32 %v2706, %v3053
  %v3208 = vadd.f32 %v2707, %v3056
  %v3209 = vadd.f32 %v2708, %v3061
  %v3210 = vadd.f32 %v2709, %v3064
  %v3211 = vadd.f32 %v2710, %v3069
  %v3212 = vadd.f32 %v2711, %v3072
  %v3213 = vadd.f32 %v2712, %v3077
  %v3214 = vadd.f32 %v2713, %v3080
  %v3215 = vadd.f32 %v2714, %v3085
  %v3216 = vadd.f32 %v2715, %v3088
  %v3217 = vadd.f32 %v2716, %v3093
  %v3218 = vadd.f32 %v2717, %v3096
  %v3219 = vadd.f32 %v2718, %v3101
  %v3220 = vadd.f32 %v2719, %v3104
  %v3221 = vadd.f32 %v2720, %v3109
  %v3222 = vadd.f32 %v2721, %v3112
  %v3223 = vadd.f32 %v2722, %v3117
  %v3224 = vadd.f32 %v2723, %v3120
  %v3225 = vadd.f32 %v2724, %v3125
  %v3226 = vadd.f32 %v2725, %v3128
  %v3227 = vadd.f32 %v2726, %v3133
  %v3228 = vadd.f32 %v2727, %v3136
  %v3229 = vadd.f32 %v2728, %v3141
  %v3230 = vadd.f32 %v2729, %v3144
  %v3231 = vadd.f32 %v2730, %v3149
  %v3232 = vadd.f32 %v2731, %v3152
  %v3233 = vadd.f32 %v2732, %v3157
  %v3234 = vadd.f32 %v2733, %v3160
  %v3235 = vadd.f32 %v2734, %v3165
  %v3236 = vadd.f32 %v2735, %v3168
  %v3237 = vadd.f32 %v2736, %v3173
  %v3238 = vadd.f32 %v2737, %v3176
  %v3239 = vadd.f32 %v2738, %v3181
  %v3240 = vadd.f32 %v2739, %v3184
  %v3241 = vadd.f32 %v2740, %v3189
  %v3242 = vadd.f32 %v2741, %v3192
  %v3243 = vadd.f32 %v2742, %v3197
  %v3244 = vadd.f32 %v2743, %v3200
  %3287 = vrot.lane.b32.xlu0 %v3203, 86
  %v3288 = vpop.permute.xlu0 %3287
  %3289 = vrot.lane.b32.xlu0 %v3204, 86
  %v3290 = vpop.permute.xlu0 %3289
  %3291 = vrot.lane.b32.xlu0 %v3205, 86
  %v3292 = vpop.permute.xlu0 %3291
  %3293 = vrot.lane.b32.xlu0 %v3206, 86
  %v3294 = vpop.permute.xlu0 %3293
  %3295 = vrot.lane.b32.xlu0 %v3207, 86
  %v3296 = vpop.permute.xlu0 %3295
  %3297 = vrot.lane.b32.xlu0 %v3208, 86
  %v3298 = vpop.permute.xlu0 %3297
  %3299 = vrot.lane.b32.xlu0 %v3209, 86
  %v3300 = vpop.permute.xlu0 %3299
  %3301 = vrot.lane.b32.xlu0 %v3210, 86
  %v3302 = vpop.permute.xlu0 %3301
  %3303 = vrot.lane.b32.xlu0 %v3211, 86
  %v3304 = vpop.permute.xlu0 %3303
  %3305 = vrot.lane.b32.xlu0 %v3212, 86
  %v3306 = vpop.permute.xlu0 %3305
  %3307 = vrot.lane.b32.xlu0 %v3213, 86
  %v3308 = vpop.permute.xlu0 %3307
  %3309 = vrot.lane.b32.xlu0 %v3214, 86
  %v3310 = vpop.permute.xlu0 %3309
  %3311 = vrot.lane.b32.xlu0 %v3215, 86
  %v3312 = vpop.permute.xlu0 %3311
  %3313 = vrot.lane.b32.xlu0 %v3216, 86
  %v3314 = vpop.permute.xlu0 %3313
  %3315 = vrot.lane.b32.xlu0 %v3217, 86
  %v3316 = vpop.permute.xlu0 %3315
  %3317 = vrot.lane.b32.xlu0 %v3218, 86
  %v3318 = vpop.permute.xlu0 %3317
  %3319 = vrot.lane.b32.xlu0 %v3219, 86
  %v3320 = vpop.permute.xlu0 %3319
  %3321 = vrot.lane.b32.xlu0 %v3220, 86
  %v3322 = vpop.permute.xlu0 %3321
  %3323 = vrot.lane.b32.xlu0 %v3221, 86
  %v3324 = vpop.permute.xlu0 %3323
  %3325 = vrot.lane.b32.xlu0 %v3222, 86
  %v3326 = vpop.permute.xlu0 %3325
  %3327 = vrot.lane.b32.xlu0 %v3223, 86
  %v3328 = vpop.permute.xlu0 %3327
  %3329 = vrot.lane.b32.xlu0 %v3224, 86
  %v3330 = vpop.permute.xlu0 %3329
  %3331 = vrot.lane.b32.xlu0 %v3225, 86
  %v3332 = vpop.permute.xlu0 %3331
  %3333 = vrot.lane.b32.xlu0 %v3226, 86
  %v3334 = vpop.permute.xlu0 %3333
  %3335 = vrot.lane.b32.xlu0 %v3227, 86
  %v3336 = vpop.permute.xlu0 %3335
  %3337 = vrot.lane.b32.xlu0 %v3228, 86
  %v3338 = vpop.permute.xlu0 %3337
  %3339 = vrot.lane.b32.xlu0 %v3229, 86
  %v3340 = vpop.permute.xlu0 %3339
  %3341 = vrot.lane.b32.xlu0 %v3230, 86
  %v3342 = vpop.permute.xlu0 %3341
  %3343 = vrot.lane.b32.xlu0 %v3231, 86
  %v3344 = vpop.permute.xlu0 %3343
  %3345 = vrot.lane.b32.xlu0 %v3232, 86
  %v3346 = vpop.permute.xlu0 %3345
  %3347 = vrot.lane.b32.xlu0 %v3233, 86
  %v3348 = vpop.permute.xlu0 %3347
  %3349 = vrot.lane.b32.xlu0 %v3234, 86
  %v3350 = vpop.permute.xlu0 %3349
  %3351 = vrot.lane.b32.xlu0 %v3235, 86
  %v3352 = vpop.permute.xlu0 %3351
  %3353 = vrot.lane.b32.xlu0 %v3236, 86
  %v3354 = vpop.permute.xlu0 %3353
  %3355 = vrot.lane.b32.xlu0 %v3237, 86
  %v3356 = vpop.permute.xlu0 %3355
  %3357 = vrot.lane.b32.xlu0 %v3238, 86
  %v3358 = vpop.permute.xlu0 %3357
  %3359 = vrot.lane.b32.xlu0 %v3239, 86
  %v3360 = vpop.permute.xlu0 %3359
  %3361 = vrot.lane.b32.xlu0 %v3240, 86
  %v3362 = vpop.permute.xlu0 %3361
  %3363 = vrot.lane.b32.xlu0 %v3241, 86
  %v3364 = vpop.permute.xlu0 %3363
  %3365 = vrot.lane.b32.xlu0 %v3242, 86
  %v3366 = vpop.permute.xlu0 %3365
  %3367 = vrot.lane.b32.xlu0 %v3243, 86
  %v3368 = vpop.permute.xlu0 %3367
  %3369 = vrot.lane.b32.xlu0 %v3244, 86
  %v3370 = vpop.permute.xlu0 %3369
  %v3413 = vmax.f32 %v3203, %v3288
  %v3414 = vmax.f32 %v3204, %v3290
  %v3415 = vmax.f32 %v3205, %v3292
  %v3416 = vmax.f32 %v3206, %v3294
  %v3417 = vmax.f32 %v3207, %v3296
  %v3418 = vmax.f32 %v3208, %v3298
  %v3419 = vmax.f32 %v3209, %v3300
  %v3420 = vmax.f32 %v3210, %v3302
  %v3421 = vmax.f32 %v3211, %v3304
  %v3422 = vmax.f32 %v3212, %v3306
  %v3423 = vmax.f32 %v3213, %v3308
  %v3424 = vmax.f32 %v3214, %v3310
  %v3425 = vmax.f32 %v3215, %v3312
  %v3426 = vmax.f32 %v3216, %v3314
  %v3427 = vmax.f32 %v3217, %v3316
  %v3428 = vmax.f32 %v3218, %v3318
  %v3429 = vmax.f32 %v3219, %v3320
  %v3430 = vmax.f32 %v3220, %v3322
  %v3431 = vmax.f32 %v3221, %v3324
  %v3432 = vmax.f32 %v3222, %v3326
  %v3433 = vmax.f32 %v3223, %v3328
  %v3434 = vmax.f32 %v3224, %v3330
  %v3435 = vmax.f32 %v3225, %v3332
  %v3436 = vmax.f32 %v3226, %v3334
  %v3437 = vmax.f32 %v3227, %v3336
  %v3438 = vmax.f32 %v3228, %v3338
  %v3439 = vmax.f32 %v3229, %v3340
  %v3440 = vmax.f32 %v3230, %v3342
  %v3441 = vmax.f32 %v3231, %v3344
  %v3442 = vmax.f32 %v3232, %v3346
  %v3443 = vmax.f32 %v3233, %v3348
  %v3444 = vmax.f32 %v3234, %v3350
  %v3445 = vmax.f32 %v3235, %v3352
  %v3446 = vmax.f32 %v3236, %v3354
  %v3447 = vmax.f32 %v3237, %v3356
  %v3448 = vmax.f32 %v3238, %v3358
  %v3449 = vmax.f32 %v3239, %v3360
  %v3450 = vmax.f32 %v3240, %v3362
  %v3451 = vmax.f32 %v3241, %v3364
  %v3452 = vmax.f32 %v3242, %v3366
  %v3453 = vmax.f32 %v3243, %v3368
  %v3454 = vmax.f32 %v3244, %v3370
  %3455 = vrot.lane.b32.xlu0 %v3203, 44
  %v3456 = vpop.permute.xlu0 %3455
  %3457 = vrot.lane.b32.xlu0 %v3204, 44
  %v3458 = vpop.permute.xlu0 %3457
  %3459 = vrot.lane.b32.xlu0 %v3205, 44
  %v3460 = vpop.permute.xlu0 %3459
  %3461 = vrot.lane.b32.xlu0 %v3206, 44
  %v3462 = vpop.permute.xlu0 %3461
  %3463 = vrot.lane.b32.xlu0 %v3207, 44
  %v3464 = vpop.permute.xlu0 %3463
  %3465 = vrot.lane.b32.xlu0 %v3208, 44
  %v3466 = vpop.permute.xlu0 %3465
  %3467 = vrot.lane.b32.xlu0 %v3209, 44
  %v3468 = vpop.permute.xlu0 %3467
  %3469 = vrot.lane.b32.xlu0 %v3210, 44
  %v3470 = vpop.permute.xlu0 %3469
  %3471 = vrot.lane.b32.xlu0 %v3211, 44
  %v3472 = vpop.permute.xlu0 %3471
  %3473 = vrot.lane.b32.xlu0 %v3212, 44
  %v3474 = vpop.permute.xlu0 %3473
  %3475 = vrot.lane.b32.xlu0 %v3213, 44
  %v3476 = vpop.permute.xlu0 %3475
  %3477 = vrot.lane.b32.xlu0 %v3214, 44
  %v3478 = vpop.permute.xlu0 %3477
  %3479 = vrot.lane.b32.xlu0 %v3215, 44
  %v3480 = vpop.permute.xlu0 %3479
  %3481 = vrot.lane.b32.xlu0 %v3216, 44
  %v3482 = vpop.permute.xlu0 %3481
  %3483 = vrot.lane.b32.xlu0 %v3217, 44
  %v3484 = vpop.permute.xlu0 %3483
  %3485 = vrot.lane.b32.xlu0 %v3218, 44
  %v3486 = vpop.permute.xlu0 %3485
  %3487 = vrot.lane.b32.xlu0 %v3219, 44
  %v3488 = vpop.permute.xlu0 %3487
  %3489 = vrot.lane.b32.xlu0 %v3220, 44
  %v3490 = vpop.permute.xlu0 %3489
  %3491 = vrot.lane.b32.xlu0 %v3221, 44
  %v3492 = vpop.permute.xlu0 %3491
  %3493 = vrot.lane.b32.xlu0 %v3222, 44
  %v3494 = vpop.permute.xlu0 %3493
  %3495 = vrot.lane.b32.xlu0 %v3223, 44
  %v3496 = vpop.permute.xlu0 %3495
  %3497 = vrot.lane.b32.xlu0 %v3224, 44
  %v3498 = vpop.permute.xlu0 %3497
  %3499 = vrot.lane.b32.xlu0 %v3225, 44
  %v3500 = vpop.permute.xlu0 %3499
  %3501 = vrot.lane.b32.xlu0 %v3226, 44
  %v3502 = vpop.permute.xlu0 %3501
  %3503 = vrot.lane.b32.xlu0 %v3227, 44
  %v3504 = vpop.permute.xlu0 %3503
  %3505 = vrot.lane.b32.xlu0 %v3228, 44
  %v3506 = vpop.permute.xlu0 %3505
  %3507 = vrot.lane.b32.xlu0 %v3229, 44
  %v3508 = vpop.permute.xlu0 %3507
  %3509 = vrot.lane.b32.xlu0 %v3230, 44
  %v3510 = vpop.permute.xlu0 %3509
  %3511 = vrot.lane.b32.xlu0 %v3231, 44
  %v3512 = vpop.permute.xlu0 %3511
  %3513 = vrot.lane.b32.xlu0 %v3232, 44
  %v3514 = vpop.permute.xlu0 %3513
  %3515 = vrot.lane.b32.xlu0 %v3233, 44
  %v3516 = vpop.permute.xlu0 %3515
  %3517 = vrot.lane.b32.xlu0 %v3234, 44
  %v3518 = vpop.permute.xlu0 %3517
  %3519 = vrot.lane.b32.xlu0 %v3235, 44
  %v3520 = vpop.permute.xlu0 %3519
  %3521 = vrot.lane.b32.xlu0 %v3236, 44
  %v3522 = vpop.permute.xlu0 %3521
  %3523 = vrot.lane.b32.xlu0 %v3237, 44
  %v3524 = vpop.permute.xlu0 %3523
  %3525 = vrot.lane.b32.xlu0 %v3238, 44
  %v3526 = vpop.permute.xlu0 %3525
  %3527 = vrot.lane.b32.xlu0 %v3239, 44
  %v3528 = vpop.permute.xlu0 %3527
  %3529 = vrot.lane.b32.xlu0 %v3240, 44
  %v3530 = vpop.permute.xlu0 %3529
  %3531 = vrot.lane.b32.xlu0 %v3241, 44
  %v3532 = vpop.permute.xlu0 %3531
  %3533 = vrot.lane.b32.xlu0 %v3242, 44
  %v3534 = vpop.permute.xlu0 %3533
  %3535 = vrot.lane.b32.xlu0 %v3243, 44
  %v3536 = vpop.permute.xlu0 %3535
  %3537 = vrot.lane.b32.xlu0 %v3244, 44
  %v3538 = vpop.permute.xlu0 %3537
  %v3581 = vmax.f32 %v3413, %v3456
  %v3582 = vmax.f32 %v3414, %v3458
  %v3583 = vmax.f32 %v3415, %v3460
  %v3584 = vmax.f32 %v3416, %v3462
  %v3585 = vmax.f32 %v3417, %v3464
  %v3586 = vmax.f32 %v3418, %v3466
  %v3587 = vmax.f32 %v3419, %v3468
  %v3588 = vmax.f32 %v3420, %v3470
  %v3589 = vmax.f32 %v3421, %v3472
  %v3590 = vmax.f32 %v3422, %v3474
  %v3591 = vmax.f32 %v3423, %v3476
  %v3592 = vmax.f32 %v3424, %v3478
  %v3593 = vmax.f32 %v3425, %v3480
  %v3594 = vmax.f32 %v3426, %v3482
  %v3595 = vmax.f32 %v3427, %v3484
  %v3596 = vmax.f32 %v3428, %v3486
  %v3597 = vmax.f32 %v3429, %v3488
  %v3598 = vmax.f32 %v3430, %v3490
  %v3599 = vmax.f32 %v3431, %v3492
  %v3600 = vmax.f32 %v3432, %v3494
  %v3601 = vmax.f32 %v3433, %v3496
  %v3602 = vmax.f32 %v3434, %v3498
  %v3603 = vmax.f32 %v3435, %v3500
  %v3604 = vmax.f32 %v3436, %v3502
  %v3605 = vmax.f32 %v3437, %v3504
  %v3606 = vmax.f32 %v3438, %v3506
  %v3607 = vmax.f32 %v3439, %v3508
  %v3608 = vmax.f32 %v3440, %v3510
  %v3609 = vmax.f32 %v3441, %v3512
  %v3610 = vmax.f32 %v3442, %v3514
  %v3611 = vmax.f32 %v3443, %v3516
  %v3612 = vmax.f32 %v3444, %v3518
  %v3613 = vmax.f32 %v3445, %v3520
  %v3614 = vmax.f32 %v3446, %v3522
  %v3615 = vmax.f32 %v3447, %v3524
  %v3616 = vmax.f32 %v3448, %v3526
  %v3617 = vmax.f32 %v3449, %v3528
  %v3618 = vmax.f32 %v3450, %v3530
  %v3619 = vmax.f32 %v3451, %v3532
  %v3620 = vmax.f32 %v3452, %v3534
  %v3621 = vmax.f32 %v3453, %v3536
  %v3622 = vmax.f32 %v3454, %v3538
  %v3623 = vmax.f32 %v3581, %v3583
  %v3624 = vmax.f32 %v3582, %v3584
  %v3625 = vmax.f32 %v3623, %v3585
  %v3626 = vmax.f32 %v3624, %v3586
  %v3627 = vld [vmem:[%s2] sm:$0x1]
  %v3629 = vlaneseq
  %v3630 = vshrl.u32 %v3629, 7
  %v3631 = vsub.s32 0, %v3630
  %v3632 = vrot.slane %v3627, %v3631
  %v3634 = vadd.f32 %v3625, %v3632
  %v3635 = vadd.f32 %v3626, %v3632
  %v3636 = vmax.f32 %v3634, 0.0
  %v3637 = vmax.f32 %v3635, 0.0
  %v3638 = vpack.c.bf16 %v3637, %v3636
  %v3639 = vld [vmem:[%s3] sm:$0xf]
  %v3640 = vld [vmem:[%s3 + $0x4] sm:$0xf]
  %v3641 = vld [vmem:[%s3 + $0x8] sm:$0xf]
  %v3642 = vld [vmem:[%s3 + $0xc] sm:$0xf]
  %v3643 = vld [vmem:[%s3 + $0x10] sm:$0xf]
  %v3644 = vld [vmem:[%s3 + $0x14] sm:$0x1]
  %v3645 = vmax.f32 %v3587, %v3589
  %v3646 = vmax.f32 %v3588, %v3590
  %v3647 = vmax.f32 %v3645, %v3591
  %v3648 = vmax.f32 %v3646, %v3592
  %v3649 = vadd.f32 %v3647, %v3632
  %v3650 = vadd.f32 %v3648, %v3632
  %v3651 = vmax.f32 %v3649, 0.0
  %v3652 = vmax.f32 %v3650, 0.0
  %v3653 = vpack.c.bf16 %v3652, %v3651
  %s3654 = scalar_lea.vmem %s3, 24
  %v3655 = vld [vmem:[%s3654] sm:$0xf]
  %v3656 = vld [vmem:[%s3654 + $0x4] sm:$0xf]
  %v3657 = vld [vmem:[%s3654 + $0x8] sm:$0xf]
  %v3658 = vld [vmem:[%s3654 + $0xc] sm:$0xf]
  %v3659 = vld [vmem:[%s3654 + $0x10] sm:$0xf]
  %v3660 = vld [vmem:[%s3654 + $0x14] sm:$0x1]
  %v3667 = vunpack.c.l.b16 %v3655
  %v3668 = vunpack.c.l.b16 %v3656
  %v3669 = vunpack.c.l.b16 %v3657
  %v3670 = vunpack.c.l.b16 %v3658
  %v3671 = vunpack.c.l.b16 %v3659
  %v3672 = vunpack.c.l.b16 %v3660
  %v3673 = vpack.c.b16 %v3668, %v3667
  %v3674 = vpack.c.b16 %v3670, %v3669
  %v3675 = vpack.c.b16 %v3672, %v3671
  %vm3678 = vcmask 343040
  %v3680 = vsel %vm3678, %v3653, 0
  %vm3682 = vcmask 1044480
  %v3684 = vsel %vm3682, %v3675, 0
  %3686 = vmatprep.subr.bf16.mxu0 0
  %3687 = vmatpush1.bf16.msra.mxu0 0
  %3688 = vmatprep.subr.bf16.mxu0 0
  %3689 = vmatpush1.bf16.msra.mxu0 0
  %3690 = vmatprep.subr.bf16.mxu0 0
  %3691 = vmatpush1.bf16.msra.mxu0 0
  %3692 = vmatprep.subr.bf16.mxu0 0
  %3693 = vmatpush1.bf16.msra.mxu0 0
  %3694 = vmatprep.subr.bf16.mxu0 0
  %3695 = vmatpush1.bf16.msra.mxu0 0
  %3696 = vmatprep.subr.bf16.mxu0 0
  %3697 = vmatpush1.bf16.msra.mxu0 %v3684
  %3698 = vmatprep.subr.bf16.mxu0 0
  %3699 = vmatpush1.bf16.msra.mxu0 %v3674
  %3700 = vmatprep.subr.bf16.mxu0 0
  %3701 = vmatpush1.bf16.msra.mxu0 %v3673
  %3702 = vmatprep.subr.bf16.mxu0 0
  %3703 = vmatpush2.bf16.msra.mxu0 0
  %3704 = vmatprep.subr.bf16.mxu0 0
  %3705 = vmatpush2.bf16.msra.mxu0 0
  %3706 = vmatprep.subr.bf16.mxu0 0
  %3707 = vmatpush2.bf16.msra.mxu0 0
  %3708 = vmatprep.subr.bf16.mxu0 0
  %3709 = vmatpush2.bf16.msra.mxu0 0
  %3710 = vmatprep.subr.bf16.mxu0 0
  %3711 = vmatpush2.bf16.msra.mxu0 0
  %3712 = vmatprep.subr.bf16.mxu0 0
  %3713 = vmatpush2.bf16.msra.mxu0 0
  %3714 = vmatprep.subr.bf16.mxu0 0
  %3715 = vmatpush2.bf16.msra.mxu0 0
  %3716 = vmatprep.subr.bf16.mxu0 0
  %3717 = vmatpush2.bf16.msra.mxu0 0
  %3718 = vmatprep.mubr.bf16.mxu0 0
  %3719 = vmatmul.mubr.bf16.gmra.mxu0 %v3680
  %v3720 = vpop.f32.mrf.mxu0
  %v3721 = vadd.f32 0.0, %v3720
  %v3722 = vpop.f32.mrf.mxu0
  %v3723 = vpop.f32.mrf.mxu0
  %v3724 = vadd.f32 0.0, %v3723
  %v3725 = vpop.f32.mrf.mxu0
  %3726 = vdwg.mxu0
  %v3733 = vunpack.c.l.b16 %v3639
  %v3734 = vunpack.c.l.b16 %v3640
  %v3735 = vunpack.c.l.b16 %v3641
  %v3736 = vunpack.c.l.b16 %v3642
  %v3737 = vunpack.c.l.b16 %v3643
  %v3738 = vunpack.c.l.b16 %v3644
  %v3739 = vpack.c.b16 %v3734, %v3733
  %v3740 = vpack.c.b16 %v3736, %v3735
  %v3741 = vpack.c.b16 %v3738, %v3737
  %v3745 = vsel %vm3678, %v3638, 0
  %v3748 = vsel %vm3682, %v3741, 0
  %3750 = vmatprep.subr.bf16.mxu0 0
  %3751 = vmatpush1.bf16.msra.mxu0 0
  %3752 = vmatprep.subr.bf16.mxu0 0
  %3753 = vmatpush1.bf16.msra.mxu0 0
  %3754 = vmatprep.subr.bf16.mxu0 0
  %3755 = vmatpush1.bf16.msra.mxu0 0
  %3756 = vmatprep.subr.bf16.mxu0 0
  %3757 = vmatpush1.bf16.msra.mxu0 0
  %3758 = vmatprep.subr.bf16.mxu0 0
  %3759 = vmatpush1.bf16.msra.mxu0 0
  %3760 = vmatprep.subr.bf16.mxu0 0
  %3761 = vmatpush1.bf16.msra.mxu0 %v3748
  %3762 = vmatprep.subr.bf16.mxu0 0
  %3763 = vmatpush1.bf16.msra.mxu0 %v3740
  %3764 = vmatprep.subr.bf16.mxu0 0
  %3765 = vmatpush1.bf16.msra.mxu0 %v3739
  %3766 = vmatprep.subr.bf16.mxu0 0
  %3767 = vmatpush2.bf16.msra.mxu0 0
  %3768 = vmatprep.subr.bf16.mxu0 0
  %3769 = vmatpush2.bf16.msra.mxu0 0
  %3770 = vmatprep.subr.bf16.mxu0 0
  %3771 = vmatpush2.bf16.msra.mxu0 0
  %3772 = vmatprep.subr.bf16.mxu0 0
  %3773 = vmatpush2.bf16.msra.mxu0 0
  %3774 = vmatprep.subr.bf16.mxu0 0
  %3775 = vmatpush2.bf16.msra.mxu0 0
  %3776 = vmatprep.subr.bf16.mxu0 0
  %3777 = vmatpush2.bf16.msra.mxu0 0
  %3778 = vmatprep.subr.bf16.mxu0 0
  %3779 = vmatpush2.bf16.msra.mxu0 0
  %3780 = vmatprep.subr.bf16.mxu0 0
  %3781 = vmatpush2.bf16.msra.mxu0 0
  %3782 = vmatprep.mubr.bf16.mxu0 0
  %3783 = vmatmul.mubr.bf16.gmra.mxu0 %v3745
  %v3784 = vpop.f32.mrf.mxu0
  %v3785 = vadd.f32 %v3721, %v3784
  %v3786 = vpop.f32.mrf.mxu0
  %v3787 = vpop.f32.mrf.mxu0
  %v3788 = vadd.f32 %v3724, %v3787
  %v3789 = vpop.f32.mrf.mxu0
  %3790 = vdwg.mxu0
  %v3791 = vmax.f32 %v3593, %v3595
  %v3792 = vmax.f32 %v3594, %v3596
  %v3793 = vmax.f32 %v3791, %v3597
  %v3794 = vmax.f32 %v3792, %v3598
  %v3795 = vadd.f32 %v3793, %v3632
  %v3796 = vadd.f32 %v3794, %v3632
  %v3797 = vmax.f32 %v3795, 0.0
  %v3798 = vmax.f32 %v3796, 0.0
  %v3799 = vpack.c.bf16 %v3798, %v3797
  %s3800 = scalar_lea.vmem %s3, 48
  %v3801 = vld [vmem:[%s3800] sm:$0xf]
  %v3802 = vld [vmem:[%s3800 + $0x4] sm:$0xf]
  %v3803 = vld [vmem:[%s3800 + $0x8] sm:$0xf]
  %v3804 = vld [vmem:[%s3800 + $0xc] sm:$0xf]
  %v3805 = vld [vmem:[%s3800 + $0x10] sm:$0xf]
  %v3806 = vld [vmem:[%s3800 + $0x14] sm:$0x1]
  %v3813 = vunpack.c.l.b16 %v3801
  %v3814 = vunpack.c.l.b16 %v3802
  %v3815 = vunpack.c.l.b16 %v3803
  %v3816 = vunpack.c.l.b16 %v3804
  %v3817 = vunpack.c.l.b16 %v3805
  %v3818 = vunpack.c.l.b16 %v3806
  %v3819 = vpack.c.b16 %v3814, %v3813
  %v3820 = vpack.c.b16 %v3816, %v3815
  %v3821 = vpack.c.b16 %v3818, %v3817
  %v3825 = vsel %vm3678, %v3799, 0
  %v3828 = vsel %vm3682, %v3821, 0
  %3830 = vmatprep.subr.bf16.mxu0 0
  %3831 = vmatpush1.bf16.msra.mxu0 0
  %3832 = vmatprep.subr.bf16.mxu0 0
  %3833 = vmatpush1.bf16.msra.mxu0 0
  %3834 = vmatprep.subr.bf16.mxu0 0
  %3835 = vmatpush1.bf16.msra.mxu0 0
  %3836 = vmatprep.subr.bf16.mxu0 0
  %3837 = vmatpush1.bf16.msra.mxu0 0
  %3838 = vmatprep.subr.bf16.mxu0 0
  %3839 = vmatpush1.bf16.msra.mxu0 0
  %3840 = vmatprep.subr.bf16.mxu0 0
  %3841 = vmatpush1.bf16.msra.mxu0 %v3828
  %3842 = vmatprep.subr.bf16.mxu0 0
  %3843 = vmatpush1.bf16.msra.mxu0 %v3820
  %3844 = vmatprep.subr.bf16.mxu0 0
  %3845 = vmatpush1.bf16.msra.mxu0 %v3819
  %3846 = vmatprep.subr.bf16.mxu0 0
  %3847 = vmatpush2.bf16.msra.mxu0 0
  %3848 = vmatprep.subr.bf16.mxu0 0
  %3849 = vmatpush2.bf16.msra.mxu0 0
  %3850 = vmatprep.subr.bf16.mxu0 0
  %3851 = vmatpush2.bf16.msra.mxu0 0
  %3852 = vmatprep.subr.bf16.mxu0 0
  %3853 = vmatpush2.bf16.msra.mxu0 0
  %3854 = vmatprep.subr.bf16.mxu0 0
  %3855 = vmatpush2.bf16.msra.mxu0 0
  %3856 = vmatprep.subr.bf16.mxu0 0
  %3857 = vmatpush2.bf16.msra.mxu0 0
  %3858 = vmatprep.subr.bf16.mxu0 0
  %3859 = vmatpush2.bf16.msra.mxu0 0
  %3860 = vmatprep.subr.bf16.mxu0 0
  %3861 = vmatpush2.bf16.msra.mxu0 0
  %3862 = vmatprep.mubr.bf16.mxu0 0
  %3863 = vmatmul.mubr.bf16.gmra.mxu0 %v3825
  %v3864 = vpop.f32.mrf.mxu0
  %v3865 = vadd.f32 0.0, %v3864
  %v3866 = vpop.f32.mrf.mxu0
  %v3867 = vpop.f32.mrf.mxu0
  %v3868 = vadd.f32 0.0, %v3867
  %v3869 = vpop.f32.mrf.mxu0
  %3870 = vdwg.mxu0
  %v3871 = vadd.f32 %v3785, %v3865
  %v3872 = vadd.f32 %v3788, %v3868
  %v3873 = vmax.f32 %v3599, %v3601
  %v3874 = vmax.f32 %v3600, %v3602
  %v3875 = vmax.f32 %v3873, %v3603
  %v3876 = vmax.f32 %v3874, %v3604
  %v3877 = vadd.f32 %v3875, %v3632
  %v3878 = vadd.f32 %v3876, %v3632
  %v3879 = vmax.f32 %v3877, 0.0
  %v3880 = vmax.f32 %v3878, 0.0
  %v3881 = vpack.c.bf16 %v3880, %v3879
  %s3882 = scalar_lea.vmem %s3, 72
  %v3883 = vld [vmem:[%s3882] sm:$0xf]
  %v3884 = vld [vmem:[%s3882 + $0x4] sm:$0xf]
  %v3885 = vld [vmem:[%s3882 + $0x8] sm:$0xf]
  %v3886 = vld [vmem:[%s3882 + $0xc] sm:$0xf]
  %v3887 = vld [vmem:[%s3882 + $0x10] sm:$0xf]
  %v3888 = vld [vmem:[%s3882 + $0x14] sm:$0x1]
  %v3895 = vunpack.c.l.b16 %v3883
  %v3896 = vunpack.c.l.b16 %v3884
  %v3897 = vunpack.c.l.b16 %v3885
  %v3898 = vunpack.c.l.b16 %v3886
  %v3899 = vunpack.c.l.b16 %v3887
  %v3900 = vunpack.c.l.b16 %v3888
  %v3901 = vpack.c.b16 %v3896, %v3895
  %v3902 = vpack.c.b16 %v3898, %v3897
  %v3903 = vpack.c.b16 %v3900, %v3899
  %v3907 = vsel %vm3678, %v3881, 0
  %v3910 = vsel %vm3682, %v3903, 0
  %3912 = vmatprep.subr.bf16.mxu0 0
  %3913 = vmatpush1.bf16.msra.mxu0 0
  %3914 = vmatprep.subr.bf16.mxu0 0
  %3915 = vmatpush1.bf16.msra.mxu0 0
  %3916 = vmatprep.subr.bf16.mxu0 0
  %3917 = vmatpush1.bf16.msra.mxu0 0
  %3918 = vmatprep.subr.bf16.mxu0 0
  %3919 = vmatpush1.bf16.msra.mxu0 0
  %3920 = vmatprep.subr.bf16.mxu0 0
  %3921 = vmatpush1.bf16.msra.mxu0 0
  %3922 = vmatprep.subr.bf16.mxu0 0
  %3923 = vmatpush1.bf16.msra.mxu0 %v3910
  %3924 = vmatprep.subr.bf16.mxu0 0
  %3925 = vmatpush1.bf16.msra.mxu0 %v3902
  %3926 = vmatprep.subr.bf16.mxu0 0
  %3927 = vmatpush1.bf16.msra.mxu0 %v3901
  %3928 = vmatprep.subr.bf16.mxu0 0
  %3929 = vmatpush2.bf16.msra.mxu0 0
  %3930 = vmatprep.subr.bf16.mxu0 0
  %3931 = vmatpush2.bf16.msra.mxu0 0
  %3932 = vmatprep.subr.bf16.mxu0 0
  %3933 = vmatpush2.bf16.msra.mxu0 0
  %3934 = vmatprep.subr.bf16.mxu0 0
  %3935 = vmatpush2.bf16.msra.mxu0 0
  %3936 = vmatprep.subr.bf16.mxu0 0
  %3937 = vmatpush2.bf16.msra.mxu0 0
  %3938 = vmatprep.subr.bf16.mxu0 0
  %3939 = vmatpush2.bf16.msra.mxu0 0
  %3940 = vmatprep.subr.bf16.mxu0 0
  %3941 = vmatpush2.bf16.msra.mxu0 0
  %3942 = vmatprep.subr.bf16.mxu0 0
  %3943 = vmatpush2.bf16.msra.mxu0 0
  %3944 = vmatprep.mubr.bf16.mxu0 0
  %3945 = vmatmul.mubr.bf16.gmra.mxu0 %v3907
  %v3946 = vpop.f32.mrf.mxu0
  %v3947 = vadd.f32 0.0, %v3946
  %v3948 = vpop.f32.mrf.mxu0
  %v3949 = vpop.f32.mrf.mxu0
  %v3950 = vadd.f32 0.0, %v3949
  %v3951 = vpop.f32.mrf.mxu0
  %3952 = vdwg.mxu0
  %v3953 = vadd.f32 %v3871, %v3947
  %v3954 = vadd.f32 %v3872, %v3950
  %v3955 = vmax.f32 %v3605, %v3607
  %v3956 = vmax.f32 %v3606, %v3608
  %v3957 = vmax.f32 %v3955, %v3609
  %v3958 = vmax.f32 %v3956, %v3610
  %v3959 = vadd.f32 %v3957, %v3632
  %v3960 = vadd.f32 %v3958, %v3632
  %v3961 = vmax.f32 %v3959, 0.0
  %v3962 = vmax.f32 %v3960, 0.0
  %v3963 = vpack.c.bf16 %v3962, %v3961
  %s3964 = scalar_lea.vmem %s3, 96
  %v3965 = vld [vmem:[%s3964] sm:$0xf]
  %v3966 = vld [vmem:[%s3964 + $0x4] sm:$0xf]
  %v3967 = vld [vmem:[%s3964 + $0x8] sm:$0xf]
  %v3968 = vld [vmem:[%s3964 + $0xc] sm:$0xf]
  %v3969 = vld [vmem:[%s3964 + $0x10] sm:$0xf]
  %v3970 = vld [vmem:[%s3964 + $0x14] sm:$0x1]
  %v3977 = vunpack.c.l.b16 %v3965
  %v3978 = vunpack.c.l.b16 %v3966
  %v3979 = vunpack.c.l.b16 %v3967
  %v3980 = vunpack.c.l.b16 %v3968
  %v3981 = vunpack.c.l.b16 %v3969
  %v3982 = vunpack.c.l.b16 %v3970
  %v3983 = vpack.c.b16 %v3978, %v3977
  %v3984 = vpack.c.b16 %v3980, %v3979
  %v3985 = vpack.c.b16 %v3982, %v3981
  %v3989 = vsel %vm3678, %v3963, 0
  %v3992 = vsel %vm3682, %v3985, 0
  %3994 = vmatprep.subr.bf16.mxu0 0
  %3995 = vmatpush1.bf16.msra.mxu0 0
  %3996 = vmatprep.subr.bf16.mxu0 0
  %3997 = vmatpush1.bf16.msra.mxu0 0
  %3998 = vmatprep.subr.bf16.mxu0 0
  %3999 = vmatpush1.bf16.msra.mxu0 0
  %4000 = vmatprep.subr.bf16.mxu0 0
  %4001 = vmatpush1.bf16.msra.mxu0 0
  %4002 = vmatprep.subr.bf16.mxu0 0
  %4003 = vmatpush1.bf16.msra.mxu0 0
  %4004 = vmatprep.subr.bf16.mxu0 0
  %4005 = vmatpush1.bf16.msra.mxu0 %v3992
  %4006 = vmatprep.subr.bf16.mxu0 0
  %4007 = vmatpush1.bf16.msra.mxu0 %v3984
  %4008 = vmatprep.subr.bf16.mxu0 0
  %4009 = vmatpush1.bf16.msra.mxu0 %v3983
  %4010 = vmatprep.subr.bf16.mxu0 0
  %4011 = vmatpush2.bf16.msra.mxu0 0
  %4012 = vmatprep.subr.bf16.mxu0 0
  %4013 = vmatpush2.bf16.msra.mxu0 0
  %4014 = vmatprep.subr.bf16.mxu0 0
  %4015 = vmatpush2.bf16.msra.mxu0 0
  %4016 = vmatprep.subr.bf16.mxu0 0
  %4017 = vmatpush2.bf16.msra.mxu0 0
  %4018 = vmatprep.subr.bf16.mxu0 0
  %4019 = vmatpush2.bf16.msra.mxu0 0
  %4020 = vmatprep.subr.bf16.mxu0 0
  %4021 = vmatpush2.bf16.msra.mxu0 0
  %4022 = vmatprep.subr.bf16.mxu0 0
  %4023 = vmatpush2.bf16.msra.mxu0 0
  %4024 = vmatprep.subr.bf16.mxu0 0
  %4025 = vmatpush2.bf16.msra.mxu0 0
  %4026 = vmatprep.mubr.bf16.mxu0 0
  %4027 = vmatmul.mubr.bf16.gmra.mxu0 %v3989
  %v4028 = vpop.f32.mrf.mxu0
  %v4029 = vadd.f32 0.0, %v4028
  %v4030 = vpop.f32.mrf.mxu0
  %v4031 = vpop.f32.mrf.mxu0
  %v4032 = vadd.f32 0.0, %v4031
  %v4033 = vpop.f32.mrf.mxu0
  %4034 = vdwg.mxu0
  %v4035 = vadd.f32 %v3953, %v4029
  %v4036 = vadd.f32 %v3954, %v4032
  %v4037 = vmax.f32 %v3611, %v3613
  %v4038 = vmax.f32 %v3612, %v3614
  %v4039 = vmax.f32 %v4037, %v3615
  %v4040 = vmax.f32 %v4038, %v3616
  %v4041 = vadd.f32 %v4039, %v3632
  %v4042 = vadd.f32 %v4040, %v3632
  %v4043 = vmax.f32 %v4041, 0.0
  %v4044 = vmax.f32 %v4042, 0.0
  %v4045 = vpack.c.bf16 %v4044, %v4043
  %s4046 = scalar_lea.vmem %s3, 120
  %v4047 = vld [vmem:[%s4046] sm:$0xf]
  %v4048 = vld [vmem:[%s4046 + $0x4] sm:$0xf]
  %v4049 = vld [vmem:[%s4046 + $0x8] sm:$0xf]
  %v4050 = vld [vmem:[%s4046 + $0xc] sm:$0xf]
  %v4051 = vld [vmem:[%s4046 + $0x10] sm:$0xf]
  %v4052 = vld [vmem:[%s4046 + $0x14] sm:$0x1]
  %v4059 = vunpack.c.l.b16 %v4047
  %v4060 = vunpack.c.l.b16 %v4048
  %v4061 = vunpack.c.l.b16 %v4049
  %v4062 = vunpack.c.l.b16 %v4050
  %v4063 = vunpack.c.l.b16 %v4051
  %v4064 = vunpack.c.l.b16 %v4052
  %v4065 = vpack.c.b16 %v4060, %v4059
  %v4066 = vpack.c.b16 %v4062, %v4061
  %v4067 = vpack.c.b16 %v4064, %v4063
  %v4071 = vsel %vm3678, %v4045, 0
  %v4074 = vsel %vm3682, %v4067, 0
  %4076 = vmatprep.subr.bf16.mxu0 0
  %4077 = vmatpush1.bf16.msra.mxu0 0
  %4078 = vmatprep.subr.bf16.mxu0 0
  %4079 = vmatpush1.bf16.msra.mxu0 0
  %4080 = vmatprep.subr.bf16.mxu0 0
  %4081 = vmatpush1.bf16.msra.mxu0 0
  %4082 = vmatprep.subr.bf16.mxu0 0
  %4083 = vmatpush1.bf16.msra.mxu0 0
  %4084 = vmatprep.subr.bf16.mxu0 0
  %4085 = vmatpush1.bf16.msra.mxu0 0
  %4086 = vmatprep.subr.bf16.mxu0 0
  %4087 = vmatpush1.bf16.msra.mxu0 %v4074
  %4088 = vmatprep.subr.bf16.mxu0 0
  %4089 = vmatpush1.bf16.msra.mxu0 %v4066
  %4090 = vmatprep.subr.bf16.mxu0 0
  %4091 = vmatpush1.bf16.msra.mxu0 %v4065
  %4092 = vmatprep.subr.bf16.mxu0 0
  %4093 = vmatpush2.bf16.msra.mxu0 0
  %4094 = vmatprep.subr.bf16.mxu0 0
  %4095 = vmatpush2.bf16.msra.mxu0 0
  %4096 = vmatprep.subr.bf16.mxu0 0
  %4097 = vmatpush2.bf16.msra.mxu0 0
  %4098 = vmatprep.subr.bf16.mxu0 0
  %4099 = vmatpush2.bf16.msra.mxu0 0
  %4100 = vmatprep.subr.bf16.mxu0 0
  %4101 = vmatpush2.bf16.msra.mxu0 0
  %4102 = vmatprep.subr.bf16.mxu0 0
  %4103 = vmatpush2.bf16.msra.mxu0 0
  %4104 = vmatprep.subr.bf16.mxu0 0
  %4105 = vmatpush2.bf16.msra.mxu0 0
  %4106 = vmatprep.subr.bf16.mxu0 0
  %4107 = vmatpush2.bf16.msra.mxu0 0
  %4108 = vmatprep.mubr.bf16.mxu0 0
  %4109 = vmatmul.mubr.bf16.gmra.mxu0 %v4071
  %v4110 = vpop.f32.mrf.mxu0
  %v4111 = vadd.f32 0.0, %v4110
  %v4112 = vpop.f32.mrf.mxu0
  %v4113 = vpop.f32.mrf.mxu0
  %v4114 = vadd.f32 0.0, %v4113
  %v4115 = vpop.f32.mrf.mxu0
  %4116 = vdwg.mxu0
  %v4117 = vadd.f32 %v4035, %v4111
  %v4118 = vadd.f32 %v4036, %v4114
  %v4119 = vmax.f32 %v3617, %v3619
  %v4120 = vmax.f32 %v3618, %v3620
  %v4121 = vmax.f32 %v4119, %v3621
  %v4122 = vmax.f32 %v4120, %v3622
  %v4123 = vadd.f32 %v4121, %v3632
  %v4124 = vadd.f32 %v4122, %v3632
  %v4125 = vmax.f32 %v4123, 0.0
  %v4126 = vmax.f32 %v4124, 0.0
  %v4127 = vpack.c.bf16 %v4126, %v4125
  %s4128 = scalar_lea.vmem %s3, 144
  %v4129 = vld [vmem:[%s4128] sm:$0xf]
  %v4130 = vld [vmem:[%s4128 + $0x4] sm:$0xf]
  %v4131 = vld [vmem:[%s4128 + $0x8] sm:$0xf]
  %v4132 = vld [vmem:[%s4128 + $0xc] sm:$0xf]
  %v4133 = vld [vmem:[%s4128 + $0x10] sm:$0xf]
  %v4134 = vld [vmem:[%s4128 + $0x14] sm:$0x1]
  %v4141 = vunpack.c.l.b16 %v4129
  %v4142 = vunpack.c.l.b16 %v4130
  %v4143 = vunpack.c.l.b16 %v4131
  %v4144 = vunpack.c.l.b16 %v4132
  %v4145 = vunpack.c.l.b16 %v4133
  %v4146 = vunpack.c.l.b16 %v4134
  %v4147 = vpack.c.b16 %v4142, %v4141
  %v4148 = vpack.c.b16 %v4144, %v4143
  %v4149 = vpack.c.b16 %v4146, %v4145
  %v4153 = vsel %vm3678, %v4127, 0
  %v4156 = vsel %vm3682, %v4149, 0
  %4158 = vmatprep.subr.bf16.mxu0 0
  %4159 = vmatpush1.bf16.msra.mxu0 0
  %4160 = vmatprep.subr.bf16.mxu0 0
  %4161 = vmatpush1.bf16.msra.mxu0 0
  %4162 = vmatprep.subr.bf16.mxu0 0
  %4163 = vmatpush1.bf16.msra.mxu0 0
  %4164 = vmatprep.subr.bf16.mxu0 0
  %4165 = vmatpush1.bf16.msra.mxu0 0
  %4166 = vmatprep.subr.bf16.mxu0 0
  %4167 = vmatpush1.bf16.msra.mxu0 0
  %4168 = vmatprep.subr.bf16.mxu0 0
  %4169 = vmatpush1.bf16.msra.mxu0 %v4156
  %4170 = vmatprep.subr.bf16.mxu0 0
  %4171 = vmatpush1.bf16.msra.mxu0 %v4148
  %4172 = vmatprep.subr.bf16.mxu0 0
  %4173 = vmatpush1.bf16.msra.mxu0 %v4147
  %4174 = vmatprep.subr.bf16.mxu0 0
  %4175 = vmatpush2.bf16.msra.mxu0 0
  %4176 = vmatprep.subr.bf16.mxu0 0
  %4177 = vmatpush2.bf16.msra.mxu0 0
  %4178 = vmatprep.subr.bf16.mxu0 0
  %4179 = vmatpush2.bf16.msra.mxu0 0
  %4180 = vmatprep.subr.bf16.mxu0 0
  %4181 = vmatpush2.bf16.msra.mxu0 0
  %4182 = vmatprep.subr.bf16.mxu0 0
  %4183 = vmatpush2.bf16.msra.mxu0 0
  %4184 = vmatprep.subr.bf16.mxu0 0
  %4185 = vmatpush2.bf16.msra.mxu0 0
  %4186 = vmatprep.subr.bf16.mxu0 0
  %4187 = vmatpush2.bf16.msra.mxu0 0
  %4188 = vmatprep.subr.bf16.mxu0 0
  %4189 = vmatpush2.bf16.msra.mxu0 0
  %4190 = vmatprep.mubr.bf16.mxu0 0
  %4191 = vmatmul.mubr.bf16.gmra.mxu0 %v4153
  %v4192 = vpop.f32.mrf.mxu0
  %v4193 = vadd.f32 0.0, %v4192
  %v4194 = vpop.f32.mrf.mxu0
  %v4195 = vpop.f32.mrf.mxu0
  %v4196 = vadd.f32 0.0, %v4195
  %v4197 = vpop.f32.mrf.mxu0
  %4198 = vdwg.mxu0
  %v4199 = vadd.f32 %v4117, %v4193
  %v4200 = vadd.f32 %v4118, %v4196
  %v4201 = vld [vmem:[%s4] sm:$0x1]
  %v4203 = vlaneseq
  %v4204 = vshrl.u32 %v4203, 7
  %v4205 = vsub.s32 0, %v4204
  %v4206 = vrot.slane %v4201, %v4205
  %v4208 = vadd.f32 %v4199, %v4206
  %v4209 = vadd.f32 %v4200, %v4206
  %vm4210 = vcmask 80896
  %4211 = vst.msk [vmem:[%s5] sm:$0xff] %vm4210, %v4208
  %4212 = vst.msk [vmem:[%s5 + $0x8] sm:$0xff] %vm4210, %v4209
  // Predicated region
  $region22: #{mnist_forward.1} parent=0 // pred_check
    _
  $region23: #{mnist_forward.1} parent=0 // pred_check_branch
    %4214 = sbr.rel (0) target = $region25
  $region24: #{mnist_forward.1} parent=0 // pred_region
    _
  $region25: #{mnist_forward.1} parent=0 // pred_fallthru
    _
  // Predicated region
  $region26: #{mnist_forward.1} parent=0 // pred_check
    _
  $region27: #{mnist_forward.1} parent=0 // pred_check_branch
    %4216 = sbr.rel (0) target = $region29
  $region28: #{mnist_forward.1} parent=0 // pred_region
    _
  $region29: #{mnist_forward.1} parent=0 // pred_fallthru
    _

</llo_original>
